<compile_context>
chip_gen: v5e
topology: v5e:2x2
jax: 0.10.0
libtpu: 0.0.40
codegen_flags: <defaults>
</compile_context>

<pallas_src>
import jax
import jax.numpy as jnp
from jax.experimental import pallas as pl
from jax.experimental.pallas import tpu as pltpu

EPS = 1e-5
_OFF = 8                               # 8-aligned column offset of data in the scratch
_HIGH = jax.lax.Precision.HIGHEST      # only used by the pure-JAX reference


def _gelu_exact(x):
    return 0.5 * x * (1.0 + jax.lax.erf(x * 0.7071067811865476))


# ----------------------------------------------------------------------------
# Kernel 1: per-(image, row-tile) MixFFN body + one-pass BatchNorm partials.
# Layout: NHWC, channels (padded to Cp) on lanes.
# ----------------------------------------------------------------------------
def mixffn_pre_kernel(x_ref, halo_ref, w1_ref, b1_ref, wd_ref, bd_ref,
                      w2_ref, b2_ref, y_ref, stats_ref, h1pad_ref):
    _, TH, W, Cp = x_ref.shape
    E = wd_ref.shape[0]
    M = TH * W

    x2d = x_ref[0].reshape(M, Cp)                        # f32, reused as residual

    # --- 1x1 conv #1 on the MXU: bf16 operands, f32 accumulate ---------------
    h1 = jnp.dot(x2d.astype(jnp.bfloat16), w1_ref[...],
                 preferred_element_type=jnp.float32) + b1_ref[...]
    halo2d = halo_ref[0].reshape(2 * W, Cp)
    h1_halo = (jnp.dot(halo2d.astype(jnp.bfloat16), w1_ref[...],
                       preferred_element_type=jnp.float32)
               + b1_ref[...]).reshape(2, W, Cp)

    # The grouped conv zero-pads its INPUT h1 at the image boundary, so the
    # boundary halo rows must be zero (not conv1x1(x)=b1): mask by tile index.
    r = pl.program_id(1)
    top = h1_halo[0:1] * jnp.where(r == 0, 0.0, 1.0)
    bot = h1_halo[1:2] * jnp.where(r == pl.num_programs(1) - 1, 0.0, 1.0)

    # --- stage h1 (+1-pixel halo) once into the VMEM scratch ------------------
    # Data lives in rows [1, TH+1) and columns [_OFF, _OFF+W); only the single
    # zero column on each side of the data is written (no full-buffer zeroing).
    h1pad_ref[:, _OFF - 1:_OFF, :] = jnp.zeros((TH + 2, 1, Cp), jnp.float32)
    h1pad_ref[:, _OFF + W:_OFF + W + 1, :] = jnp.zeros((TH + 2, 1, Cp), jnp.float32)
    h1pad_ref[0:1, _OFF:_OFF + W, :] = top
    h1pad_ref[TH + 1:TH + 2, _OFF:_OFF + W, :] = bot
    h1pad_ref[1:TH + 1, _OFF:_OFF + W, :] = h1.reshape(TH, W, Cp)

    # --- residual + conv #2 bias as the output accumulator --------------------
    y = x2d + b2_ref[...]                                # (M, Cp) f32

    # --- grouped 3x3 conv + GELU + 1x1 conv #2, chunked over expansion e ------
    for e in range(E):
        wd_e = wd_ref[e]                                 # (9, Cp) f32
        bd_e = bd_ref[e].reshape(1, 1, Cp)               # (1, 1, Cp) f32
        # bias + center tap first, then the other 8 taps as shifted-window
        # reads of the scratch (vld + VPU multiply-add only, no slab copies).
        acc = (h1pad_ref[1:TH + 1, _OFF:_OFF + W, :]
               * wd_e[4:5].reshape(1, 1, Cp) + bd_e)
        for t in range(9):
            if t == 4:
                continue
            kh, kw = t // 3, t % 3
            acc = acc + (h1pad_ref[kh:kh + TH,
                                   _OFF - 1 + kw:_OFF - 1 + kw + W, :]
                         * wd_e[t:t + 1].reshape(1, 1, Cp))
        g = _gelu_exact(acc).reshape(M, Cp).astype(jnp.bfloat16)
        y = y + jnp.dot(g, w2_ref[e], preferred_element_type=jnp.float32)

    y_ref[...] = y.reshape(1, TH, W, Cp).astype(y_ref.dtype)

    # --- one-pass BatchNorm partial stats (f32, before the bf16 store) --------
    s = jnp.sum(y, axis=0, keepdims=True)                # (1, Cp)
    sq = jnp.sum(y * y, axis=0, keepdims=True)           # (1, Cp)
    stats_ref[...] = jnp.concatenate([s, sq], axis=0).reshape(1, 2, Cp)


# ----------------------------------------------------------------------------
# Kernel 2: apply BatchNorm as a pure per-channel FMA (scale/shift precomputed).
# ----------------------------------------------------------------------------
def bn_apply_kernel(scale_ref, shift_ref, y_ref, o_ref):
    o_ref[...] = (y_ref[...].astype(jnp.float32) * scale_ref[...]
                  + shift_ref[...]).astype(o_ref.dtype)


def _pick_row_tile(H, W, Cp, budget_bytes=4 << 20):
    bytes_per_row = W * Cp * 4
    cap = max(8, budget_bytes // max(bytes_per_row, 1))
    for cand in range(min(H, cap), 0, -1):
        if H % cand == 0:
            return cand
    return H


def mixffn_forward(x_nhwc, p, row_tile=None):
    N, H, W, C = x_nhwc.shape
    Cp, E = p["Cp"], p["E"]
    TH = row_tile if row_tile is not None else _pick_row_tile(H, W, Cp)
    assert H % TH == 0, (H, TH)
    nt = H // TH

    # Lane-dense channel padding (padded lanes stay exactly zero end-to-end).
    x_p = x_nhwc if Cp == C else jnp.pad(
        x_nhwc, ((0, 0), (0, 0), (0, 0), (0, Cp - C)))

    # Gather the 2 halo rows per row tile (pure data movement; boundary rows
    # are dummies that the kernel masks to zero).
    rr = jnp.arange(nt)
    idx_top = jnp.maximum(rr * TH - 1, 0)
    idx_bot = jnp.minimum(rr * TH + TH, H - 1)
    halo = jnp.stack([x_p[:, idx_top], x_p[:, idx_bot]], axis=2)
    halo = halo.reshape(N * nt, 2, W, Cp)

    img = lambda n, r: (n, r, 0, 0)
    flat4 = lambda n, r: (n * nt + r, 0, 0, 0)
    cst2 = lambda n, r: (0, 0)
    cst3 = lambda n, r: (0, 0, 0)

    y, stats = pl.pallas_call(
        mixffn_pre_kernel,
        grid=(N, nt),
        in_specs=[
            pl.BlockSpec((1, TH, W, Cp), img),       # x row tile (f32)
            pl.BlockSpec((1, 2, W, Cp), flat4),      # halo rows (f32)
            pl.BlockSpec((Cp, Cp), cst2),            # w1 (bf16), DMA'd once
            pl.BlockSpec((1, Cp), cst2),             # b1 (f32)
            pl.BlockSpec((E, 9, Cp), cst3),          # depthwise taps per chunk
            pl.BlockSpec((E, 1, Cp), cst3),          # depthwise bias per chunk
            pl.BlockSpec((E, Cp, Cp), cst3),         # w2 (bf16) per chunk
            pl.BlockSpec((1, Cp), cst2),             # b2 (f32)
        ],
        out_specs=(
            pl.BlockSpec((1, TH, W, Cp), img),                          # pre-norm y
            pl.BlockSpec((1, 2, Cp), lambda n, r: (n * nt + r, 0, 0)),  # BN partials
        ),
        out_shape=(
            jax.ShapeDtypeStruct((N, H, W, Cp), jnp.bfloat16),
            jax.ShapeDtypeStruct((N * nt, 2, Cp), jnp.float32),
        ),
        scratch_shapes=[pltpu.VMEM((TH + 2, W + 2 * _OFF, Cp), jnp.float32)],
        compiler_params=pltpu.CompilerParams(
            dimension_semantics=("parallel", "parallel"),
            vmem_limit_bytes=48 * 1024 * 1024),
    )(x_p, halo, p["w1"], p["b1"], p["wd"], p["bd"], p["w2"], p["b2"])

    # BatchNorm2d finalize (training-mode batch stats, biased variance) hoisted
    # out of the grid: tiny O(C) reduction -> per-channel scale/shift.
    tot = jnp.sum(stats, axis=0)                         # (2, Cp)
    m_total = float(N * H * W)
    mean = tot[0] / m_total
    var = jnp.maximum(tot[1] / m_total - mean * mean, 0.0)
    rstd = jax.lax.rsqrt(var + EPS)
    scale = (p["gamma"][0] * rstd).reshape(1, Cp)
    shift = (p["beta"][0] - mean * p["gamma"][0] * rstd).reshape(1, Cp)

    # TODO(synk): input_output_aliases on y skipped — the BN-applied output is
    # f32 while the pre-norm y buffer is intentionally bf16 (dtype mismatch).
    out = pl.pallas_call(
        bn_apply_kernel,
        grid=(N, nt),
        in_specs=[
            pl.BlockSpec((1, Cp), cst2),             # scale
            pl.BlockSpec((1, Cp), cst2),             # shift
            pl.BlockSpec((1, TH, W, Cp), img),       # y row tile (bf16)
        ],
        out_specs=pl.BlockSpec((1, TH, W, Cp), img),
        out_shape=jax.ShapeDtypeStruct((N, H, W, Cp), jnp.float32),
        compiler_params=pltpu.CompilerParams(
            dimension_semantics=("parallel", "parallel")),
    )(scale, shift, y)

    return out if Cp == C else out[..., :C]


# ----------------------------------------------------------------------------
# Deterministic parameter init (PyTorch layouts) + kernel-layout versions.
# ----------------------------------------------------------------------------
def _pad_axis(a, axis, size):
    if a.shape[axis] == size:
        return a
    pad = [(0, 0)] * a.ndim
    pad[axis] = (0, size - a.shape[axis])
    return jnp.pad(a, pad)


def init_params(key, C, E):
    CE = C * E
    Cp = ((C + 127) // 128) * 128          # lane-dense channel width in-kernel
    ks = jax.random.split(key, 6)
    # torch layouts: conv1 (C,C,1,1); grouped conv (CE,1,3,3) with groups=C
    # (output o reads input o//E); conv2 (C,CE,1,1).
    w1_t = jax.random.normal(ks[0], (C, C), jnp.float32) * 0.2       # [out, in]
    b1 = jax.random.normal(ks[1], (C,), jnp.float32) * 0.1
    wd_t = jax.random.normal(ks[2], (CE, 3, 3), jnp.float32) * 0.2   # [out, kh, kw]
    bd = jax.random.normal(ks[3], (CE,), jnp.float32) * 0.1
    w2_t = jax.random.normal(ks[4], (C, CE), jnp.float32) * 0.2      # [out, in]
    b2 = jax.random.normal(ks[5], (C,), jnp.float32) * 0.1
    gamma = jnp.ones((C,), jnp.float32)        # BatchNorm2d default affine
    beta = jnp.zeros((C,), jnp.float32)

    # Kernel layouts, per expansion chunk e: lane c of chunk e carries the torch
    # grouped-conv output channel o = c*E + e (which reads input channel c).
    # Channel axes zero-padded to Cp; gamma padded with 0 so padded lanes -> 0.
    c_idx = jnp.arange(C)
    wd_ch, bd_ch, w2_ch = [], [], []
    for e in range(E):
        o = c_idx * E + e
        wd_ch.append(_pad_axis(wd_t[o].reshape(C, 9).T, 1, Cp))          # (9, Cp)
        bd_ch.append(_pad_axis(bd[o].reshape(1, C), 1, Cp))              # (1, Cp)
        w2_ch.append(_pad_axis(_pad_axis(w2_t[:, o].T, 0, Cp), 1, Cp))   # (Cp, Cp)

    kernel_params = dict(
        C=C, E=E, Cp=Cp,
        w1=_pad_axis(_pad_axis(w1_t.T, 0, Cp), 1, Cp).astype(jnp.bfloat16),
        b1=_pad_axis(b1.reshape(1, C), 1, Cp),
        wd=jnp.stack(wd_ch),                          # (E, 9, Cp) f32
        bd=jnp.stack(bd_ch),                          # (E, 1, Cp) f32
        w2=jnp.stack(w2_ch).astype(jnp.bfloat16),     # (E, Cp, Cp) bf16
        b2=_pad_axis(b2.reshape(1, C), 1, Cp),
        gamma=_pad_axis(gamma.reshape(1, C), 1, Cp),
        beta=_pad_axis(beta.reshape(1, C), 1, Cp),
    )
    raw = dict(w1=w1_t, b1=b1, wd=wd_t, bd=bd, w2=w2_t, b2=b2, E=E)
    return kernel_params, raw


# ----------------------------------------------------------------------------
# Pure-JAX NCHW reference mirroring the PyTorch module (for verification).
# ----------------------------------------------------------------------------
def ref_forward(x_nchw, raw):
    N, C, H, W = x_nchw.shape
    E = raw["E"]
    CE = C * E
    h = jnp.einsum('nchw,oc->nohw', x_nchw, raw["w1"], precision=_HIGH)
    h = h + raw["b1"][None, :, None, None]
    hp = jnp.pad(h, ((0, 0), (0, 0), (1, 1), (1, 1)))
    acc = jnp.broadcast_to(raw["bd"][None, :, None, None], (N, CE, H, W))
    for kh in range(3):
        for kw in range(3):
            window = hp[:, :, kh:kh + H, kw:kw + W]          # (N, C, H, W)
            window = jnp.repeat(window, E, axis=1)           # out o <- in o//E
            acc = acc + window * raw["wd"][:, kh, kw][None, :, None, None]
    g = _gelu_exact(acc)
    y = jnp.einsum('nchw,oc->nohw', g, raw["w2"], precision=_HIGH)
    y = y + raw["b2"][None, :, None, None] + x_nchw
    mean = jnp.mean(y, axis=(0, 2, 3), keepdims=True)
    var = jnp.mean((y - mean) ** 2, axis=(0, 2, 3), keepdims=True)
    return (y - mean) * jax.lax.rsqrt(var + EPS)             # gamma=1, beta=0


if __name__ == "__main__":
    N, C, H, W, E = 2, 4, 16, 16, 4
    key = jax.random.PRNGKey(0)
    kx, kp = jax.random.split(key)

    x_nchw = jax.random.normal(kx, (N, C, H, W), jnp.float32)   # PyTorch layout
    params, raw = init_params(kp, C, E)

    x_nhwc = jnp.transpose(x_nchw, (0, 2, 3, 1))
    # row_tile=8 -> 2 row tiles per image: exercises the halo-exchange path.
    out_nhwc = mixffn_forward(x_nhwc, params, row_tile=8)
    out_nchw = jnp.transpose(out_nhwc, (0, 3, 1, 2))
    jax.block_until_ready(out_nchw)

    expected = jax.block_until_ready(ref_forward(x_nchw, raw))
    assert out_nchw.shape == (N, C, H, W)
    # Kernel matmuls feed the MXU in bf16 and the pre-norm y is stored in bf16,
    # so compare with a correspondingly loosened tolerance; semantic errors
    # (wrong tap shift / halo row / channel permutation / BN stats) would be
    # orders of magnitude larger.
    err = float(jnp.max(jnp.abs(out_nchw - expected)))
    assert jnp.allclose(out_nchw, expected, atol=2e-2, rtol=2e-2), err

    print("KERNEL_OK")
</pallas_src>

<mosaic_0001>
module attributes {stable_mosaic.version = 11 : i64} {
  func.func @mixffn_pre_kernel(%arg0: i32, %arg1: i32, %arg2: memref<1x8x16x128xf32, #tpu.memory_space<vmem>>, %arg3: memref<1x2x16x128xf32, #tpu.memory_space<vmem>>, %arg4: memref<128x128xbf16, #tpu.memory_space<vmem>>, %arg5: memref<1x128xf32, #tpu.memory_space<vmem>>, %arg6: memref<4x9x128xf32, #tpu.memory_space<vmem>>, %arg7: memref<4x1x128xf32, #tpu.memory_space<vmem>>, %arg8: memref<4x128x128xbf16, #tpu.memory_space<vmem>>, %arg9: memref<1x128xf32, #tpu.memory_space<vmem>>, %arg10: memref<1x8x16x128xbf16, #tpu.memory_space<vmem>>, %arg11: memref<1x2x128xf32, #tpu.memory_space<vmem>>, %arg12: memref<10x32x128xf32, #tpu.memory_space<vmem>>) attributes {dimension_semantics = [#tpu.dimension_semantics<parallel>, #tpu.dimension_semantics<parallel>], iteration_bounds = array<i64: 2, 2>, scalar_prefetch = 0 : i64, scratch_operands = 1 : i64, tpu.core_type = #tpu.core_type<tc>, window_params = [{transform_indices = @transform_0, window_bounds = array<i64: 1, 8, 16, 128>}, {transform_indices = @transform_1, window_bounds = array<i64: 1, 2, 16, 128>}, {pipeline_mode = #tpu.pipeline_mode<synchronous>, transform_indices = @transform_2, window_bounds = array<i64: 128, 128>}, {pipeline_mode = #tpu.pipeline_mode<synchronous>, transform_indices = @transform_3, window_bounds = array<i64: 1, 128>}, {pipeline_mode = #tpu.pipeline_mode<synchronous>, transform_indices = @transform_4, window_bounds = array<i64: 4, 9, 128>}, {pipeline_mode = #tpu.pipeline_mode<synchronous>, transform_indices = @transform_5, window_bounds = array<i64: 4, 1, 128>}, {pipeline_mode = #tpu.pipeline_mode<synchronous>, transform_indices = @transform_6, window_bounds = array<i64: 4, 128, 128>}, {pipeline_mode = #tpu.pipeline_mode<synchronous>, transform_indices = @transform_7, window_bounds = array<i64: 1, 128>}, {transform_indices = @transform_8, window_bounds = array<i64: 1, 8, 16, 128>}, {transform_indices = @transform_9, window_bounds = array<i64: 1, 2, 128>}]} {
    %c0 = arith.constant 0 : index
    %c0_0 = arith.constant 0 : index
    %c0_1 = arith.constant 0 : index
    %c0_2 = arith.constant 0 : index
    %0 = vector.load %arg2[%c0, %c0_0, %c0_1, %c0_2] : memref<1x8x16x128xf32, #tpu.memory_space<vmem>>, vector<1x8x16x128xf32>
    %1 = vector.shape_cast %0 : vector<1x8x16x128xf32> to vector<8x16x128xf32>
    %2 = vector.shape_cast %1 : vector<8x16x128xf32> to vector<128x128xf32>
    %3 = arith.truncf %2 : vector<128x128xf32> to vector<128x128xbf16>
    %c0_3 = arith.constant 0 : index
    %c0_4 = arith.constant 0 : index
    %4 = vector.load %arg4[%c0_3, %c0_4] : memref<128x128xbf16, #tpu.memory_space<vmem>>, vector<128x128xbf16>
    %cst = arith.constant dense<0.000000e+00> : vector<128x128xf32>
    %5 = tpu.matmul %3, %4, %cst {dimension_numbers = #tpu.dot_dimension_numbers<[1], [0], [0], [1], [0, 0, 1, 1], [], []>} : vector<128x128xbf16>, vector<128x128xbf16>, vector<128x128xf32> -> vector<128x128xf32>
    %c0_5 = arith.constant 0 : index
    %c0_6 = arith.constant 0 : index
    %6 = vector.load %arg5[%c0_5, %c0_6] : memref<1x128xf32, #tpu.memory_space<vmem>>, vector<1x128xf32>
    %7 = vector.broadcast %6 : vector<1x128xf32> to vector<128x128xf32>
    %8 = arith.addf %5, %7 : vector<128x128xf32>
    %c0_7 = arith.constant 0 : index
    %c0_8 = arith.constant 0 : index
    %c0_9 = arith.constant 0 : index
    %c0_10 = arith.constant 0 : index
    %9 = vector.load %arg3[%c0_7, %c0_8, %c0_9, %c0_10] : memref<1x2x16x128xf32, #tpu.memory_space<vmem>>, vector<1x2x16x128xf32>
    %10 = vector.shape_cast %9 : vector<1x2x16x128xf32> to vector<2x16x128xf32>
    %11 = vector.shape_cast %10 : vector<2x16x128xf32> to vector<32x128xf32>
    %12 = arith.truncf %11 : vector<32x128xf32> to vector<32x128xbf16>
    %c0_11 = arith.constant 0 : index
    %c0_12 = arith.constant 0 : index
    %13 = vector.load %arg4[%c0_11, %c0_12] : memref<128x128xbf16, #tpu.memory_space<vmem>>, vector<128x128xbf16>
    %cst_13 = arith.constant dense<0.000000e+00> : vector<32x128xf32>
    %14 = tpu.matmul %12, %13, %cst_13 {dimension_numbers = #tpu.dot_dimension_numbers<[1], [0], [0], [1], [0, 0, 1, 1], [], []>} : vector<32x128xbf16>, vector<128x128xbf16>, vector<32x128xf32> -> vector<32x128xf32>
    %c0_14 = arith.constant 0 : index
    %c0_15 = arith.constant 0 : index
    %15 = vector.load %arg5[%c0_14, %c0_15] : memref<1x128xf32, #tpu.memory_space<vmem>>, vector<1x128xf32>
    %16 = vector.broadcast %15 : vector<1x128xf32> to vector<32x128xf32>
    %17 = arith.addf %14, %16 : vector<32x128xf32>
    %18 = vector.shape_cast %17 : vector<32x128xf32> to vector<2x16x128xf32>
    %19 = vector.extract_strided_slice %18 {offsets = [0, 0, 0], sizes = [1, 16, 128], strides = [1, 1, 1]} : vector<2x16x128xf32> to vector<1x16x128xf32>
    %c0_i32 = arith.constant 0 : i32
    %20 = arith.cmpi eq, %arg1, %c0_i32 : i32
    %cst_16 = arith.constant 0.000000e+00 : f32
    %cst_17 = arith.constant 1.000000e+00 : f32
    %21 = arith.select %20, %cst_16, %cst_17 : f32
    %22 = vector.broadcast %21 : f32 to vector<1x16x128xf32>
    %23 = arith.mulf %19, %22 : vector<1x16x128xf32>
    %24 = vector.extract_strided_slice %18 {offsets = [1, 0, 0], sizes = [1, 16, 128], strides = [1, 1, 1]} : vector<2x16x128xf32> to vector<1x16x128xf32>
    %c1_i32 = arith.constant 1 : i32
    %25 = arith.cmpi eq, %arg1, %c1_i32 : i32
    %cst_18 = arith.constant 0.000000e+00 : f32
    %cst_19 = arith.constant 1.000000e+00 : f32
    %26 = arith.select %25, %cst_18, %cst_19 : f32
    %27 = vector.broadcast %26 : f32 to vector<1x16x128xf32>
    %28 = arith.mulf %24, %27 : vector<1x16x128xf32>
    %cst_20 = arith.constant 0.000000e+00 : f32
    %29 = vector.broadcast %cst_20 : f32 to vector<10x1x128xf32>
    %c0_21 = arith.constant 0 : index
    %c7 = arith.constant 7 : index
    %c0_22 = arith.constant 0 : index
    %30 = vector.load %arg12[%c0_21, %c7, %c0_22] : memref<10x32x128xf32, #tpu.memory_space<vmem>>, vector<10x1x128xf32>
    tpu.vector_store %arg12[%c0_21, %c7, %c0_22], %29 {strides = array<i32>} : memref<10x32x128xf32, #tpu.memory_space<vmem>>, vector<10x1x128xf32>,
    %cst_23 = arith.constant 0.000000e+00 : f32
    %31 = vector.broadcast %cst_23 : f32 to vector<10x1x128xf32>
    %c0_24 = arith.constant 0 : index
    %c24 = arith.constant 24 : index
    %c0_25 = arith.constant 0 : index
    %32 = vector.load %arg12[%c0_24, %c24, %c0_25] : memref<10x32x128xf32, #tpu.memory_space<vmem>>, vector<10x1x128xf32>
    tpu.vector_store %arg12[%c0_24, %c24, %c0_25], %31 {strides = array<i32>} : memref<10x32x128xf32, #tpu.memory_space<vmem>>, vector<10x1x128xf32>,
    %c0_26 = arith.constant 0 : index
    %c8 = arith.constant 8 : index
    %c0_27 = arith.constant 0 : index
    %33 = vector.load %arg12[%c0_26, %c8, %c0_27] : memref<10x32x128xf32, #tpu.memory_space<vmem>>, vector<1x16x128xf32>
    tpu.vector_store %arg12[%c0_26, %c8, %c0_27], %23 {strides = array<i32>} : memref<10x32x128xf32, #tpu.memory_space<vmem>>, vector<1x16x128xf32>,
    %c9 = arith.constant 9 : index
    %c8_28 = arith.constant 8 : index
    %c0_29 = arith.constant 0 : index
    %34 = vector.load %arg12[%c9, %c8_28, %c0_29] : memref<10x32x128xf32, #tpu.memory_space<vmem>>, vector<1x16x128xf32>
    tpu.vector_store %arg12[%c9, %c8_28, %c0_29], %28 {strides = array<i32>} : memref<10x32x128xf32, #tpu.memory_space<vmem>>, vector<1x16x128xf32>,
    %35 = vector.shape_cast %8 : vector<128x128xf32> to vector<8x16x128xf32>
    %c1 = arith.constant 1 : index
    %c8_30 = arith.constant 8 : index
    %c0_31 = arith.constant 0 : index
    %36 = vector.load %arg12[%c1, %c8_30, %c0_31] : memref<10x32x128xf32, #tpu.memory_space<vmem>>, vector<8x16x128xf32>
    tpu.vector_store %arg12[%c1, %c8_30, %c0_31], %35 {strides = array<i32>} : memref<10x32x128xf32, #tpu.memory_space<vmem>>, vector<8x16x128xf32>,
    %c0_32 = arith.constant 0 : index
    %c0_33 = arith.constant 0 : index
    %37 = vector.load %arg9[%c0_32, %c0_33] : memref<1x128xf32, #tpu.memory_space<vmem>>, vector<1x128xf32>
    %38 = vector.broadcast %37 : vector<1x128xf32> to vector<128x128xf32>
    %39 = arith.addf %2, %38 : vector<128x128xf32>
    %c0_34 = arith.constant 0 : index
    %c0_35 = arith.constant 0 : index
    %c0_36 = arith.constant 0 : index
    %40 = vector.load %arg6[%c0_34, %c0_35, %c0_36] : memref<4x9x128xf32, #tpu.memory_space<vmem>>, vector<1x9x128xf32>
    %41 = vector.shape_cast %40 : vector<1x9x128xf32> to vector<9x128xf32>
    %c0_37 = arith.constant 0 : index
    %c0_38 = arith.constant 0 : index
    %c0_39 = arith.constant 0 : index
    %42 = vector.load %arg7[%c0_37, %c0_38, %c0_39] : memref<4x1x128xf32, #tpu.memory_space<vmem>>, vector<1x1x128xf32>
    %43 = vector.shape_cast %42 : vector<1x1x128xf32> to vector<1x128xf32>
    %44 = vector.shape_cast %43 : vector<1x128xf32> to vector<1x1x128xf32>
    %c1_40 = arith.constant 1 : index
    %c8_41 = arith.constant 8 : index
    %c0_42 = arith.constant 0 : index
    %45 = vector.load %arg12[%c1_40, %c8_41, %c0_42] : memref<10x32x128xf32, #tpu.memory_space<vmem>>, vector<8x16x128xf32>
    %46 = vector.extract_strided_slice %41 {offsets = [4, 0], sizes = [1, 128], strides = [1, 1]} : vector<9x128xf32> to vector<1x128xf32>
    %47 = vector.shape_cast %46 : vector<1x128xf32> to vector<1x1x128xf32>
    %48 = vector.broadcast %47 : vector<1x1x128xf32> to vector<8x16x128xf32>
    %49 = arith.mulf %45, %48 : vector<8x16x128xf32>
    %50 = vector.broadcast %44 : vector<1x1x128xf32> to vector<8x16x128xf32>
    %51 = arith.addf %49, %50 : vector<8x16x128xf32>
    %c0_43 = arith.constant 0 : index
    %c7_44 = arith.constant 7 : index
    %c0_45 = arith.constant 0 : index
    %52 = vector.load %arg12[%c0_43, %c7_44, %c0_45] : memref<10x32x128xf32, #tpu.memory_space<vmem>>, vector<8x16x128xf32>
    %53 = vector.extract_strided_slice %41 {offsets = [0, 0], sizes = [1, 128], strides = [1, 1]} : vector<9x128xf32> to vector<1x128xf32>
    %54 = vector.shape_cast %53 : vector<1x128xf32> to vector<1x1x128xf32>
    %55 = vector.broadcast %54 : vector<1x1x128xf32> to vector<8x16x128xf32>
    %56 = arith.mulf %52, %55 : vector<8x16x128xf32>
    %57 = arith.addf %51, %56 : vector<8x16x128xf32>
    %c0_46 = arith.constant 0 : index
    %c8_47 = arith.constant 8 : index
    %c0_48 = arith.constant 0 : index
    %58 = vector.load %arg12[%c0_46, %c8_47, %c0_48] : memref<10x32x128xf32, #tpu.memory_space<vmem>>, vector<8x16x128xf32>
    %59 = vector.extract_strided_slice %41 {offsets = [1, 0], sizes = [1, 128], strides = [1, 1]} : vector<9x128xf32> to vector<1x128xf32>
    %60 = vector.shape_cast %59 : vector<1x128xf32> to vector<1x1x128xf32>
    %61 = vector.broadcast %60 : vector<1x1x128xf32> to vector<8x16x128xf32>
    %62 = arith.mulf %58, %61 : vector<8x16x128xf32>
    %63 = arith.addf %57, %62 : vector<8x16x128xf32>
    %c0_49 = arith.constant 0 : index
    %c9_50 = arith.constant 9 : index
    %c0_51 = arith.constant 0 : index
    %64 = vector.load %arg12[%c0_49, %c9_50, %c0_51] : memref<10x32x128xf32, #tpu.memory_space<vmem>>, vector<8x16x128xf32>
    %65 = vector.extract_strided_slice %41 {offsets = [2, 0], sizes = [1, 128], strides = [1, 1]} : vector<9x128xf32> to vector<1x128xf32>
    %66 = vector.shape_cast %65 : vector<1x128xf32> to vector<1x1x128xf32>
    %67 = vector.broadcast %66 : vector<1x1x128xf32> to vector<8x16x128xf32>
    %68 = arith.mulf %64, %67 : vector<8x16x128xf32>
    %69 = arith.addf %63, %68 : vector<8x16x128xf32>
    %c1_52 = arith.constant 1 : index
    %c7_53 = arith.constant 7 : index
    %c0_54 = arith.constant 0 : index
    %70 = vector.load %arg12[%c1_52, %c7_53, %c0_54] : memref<10x32x128xf32, #tpu.memory_space<vmem>>, vector<8x16x128xf32>
    %71 = vector.extract_strided_slice %41 {offsets = [3, 0], sizes = [1, 128], strides = [1, 1]} : vector<9x128xf32> to vector<1x128xf32>
    %72 = vector.shape_cast %71 : vector<1x128xf32> to vector<1x1x128xf32>
    %73 = vector.broadcast %72 : vector<1x1x128xf32> to vector<8x16x128xf32>
    %74 = arith.mulf %70, %73 : vector<8x16x128xf32>
    %75 = arith.addf %69, %74 : vector<8x16x128xf32>
    %c1_55 = arith.constant 1 : index
    %c9_56 = arith.constant 9 : index
    %c0_57 = arith.constant 0 : index
    %76 = vector.load %arg12[%c1_55, %c9_56, %c0_57] : memref<10x32x128xf32, #tpu.memory_space<vmem>>, vector<8x16x128xf32>
    %77 = vector.extract_strided_slice %41 {offsets = [5, 0], sizes = [1, 128], strides = [1, 1]} : vector<9x128xf32> to vector<1x128xf32>
    %78 = vector.shape_cast %77 : vector<1x128xf32> to vector<1x1x128xf32>
    %79 = vector.broadcast %78 : vector<1x1x128xf32> to vector<8x16x128xf32>
    %80 = arith.mulf %76, %79 : vector<8x16x128xf32>
    %81 = arith.addf %75, %80 : vector<8x16x128xf32>
    %c2 = arith.constant 2 : index
    %c7_58 = arith.constant 7 : index
    %c0_59 = arith.constant 0 : index
    %82 = vector.load %arg12[%c2, %c7_58, %c0_59] : memref<10x32x128xf32, #tpu.memory_space<vmem>>, vector<8x16x128xf32>
    %83 = vector.extract_strided_slice %41 {offsets = [6, 0], sizes = [1, 128], strides = [1, 1]} : vector<9x128xf32> to vector<1x128xf32>
    %84 = vector.shape_cast %83 : vector<1x128xf32> to vector<1x1x128xf32>
    %85 = vector.broadcast %84 : vector<1x1x128xf32> to vector<8x16x128xf32>
    %86 = arith.mulf %82, %85 : vector<8x16x128xf32>
    %87 = arith.addf %81, %86 : vector<8x16x128xf32>
    %c2_60 = arith.constant 2 : index
    %c8_61 = arith.constant 8 : index
    %c0_62 = arith.constant 0 : index
    %88 = vector.load %arg12[%c2_60, %c8_61, %c0_62] : memref<10x32x128xf32, #tpu.memory_space<vmem>>, vector<8x16x128xf32>
    %89 = vector.extract_strided_slice %41 {offsets = [7, 0], sizes = [1, 128], strides = [1, 1]} : vector<9x128xf32> to vector<1x128xf32>
    %90 = vector.shape_cast %89 : vector<1x128xf32> to vector<1x1x128xf32>
    %91 = vector.broadcast %90 : vector<1x1x128xf32> to vector<8x16x128xf32>
    %92 = arith.mulf %88, %91 : vector<8x16x128xf32>
    %93 = arith.addf %87, %92 : vector<8x16x128xf32>
    %c2_63 = arith.constant 2 : index
    %c9_64 = arith.constant 9 : index
    %c0_65 = arith.constant 0 : index
    %94 = vector.load %arg12[%c2_63, %c9_64, %c0_65] : memref<10x32x128xf32, #tpu.memory_space<vmem>>, vector<8x16x128xf32>
    %95 = vector.extract_strided_slice %41 {offsets = [8, 0], sizes = [1, 128], strides = [1, 1]} : vector<9x128xf32> to vector<1x128xf32>
    %96 = vector.shape_cast %95 : vector<1x128xf32> to vector<1x1x128xf32>
    %97 = vector.broadcast %96 : vector<1x1x128xf32> to vector<8x16x128xf32>
    %98 = arith.mulf %94, %97 : vector<8x16x128xf32>
    %99 = arith.addf %93, %98 : vector<8x16x128xf32>
    %cst_66 = arith.constant 5.000000e-01 : f32
    %100 = vector.broadcast %cst_66 : f32 to vector<8x16x128xf32>
    %101 = arith.mulf %100, %99 : vector<8x16x128xf32>
    %cst_67 = arith.constant 0.707106769 : f32
    %102 = vector.broadcast %cst_67 : f32 to vector<8x16x128xf32>
    %103 = arith.mulf %99, %102 : vector<8x16x128xf32>
    %104 = math.erf %103 : vector<8x16x128xf32>
    %cst_68 = arith.constant 1.000000e+00 : f32
    %105 = vector.broadcast %cst_68 : f32 to vector<8x16x128xf32>
    %106 = arith.addf %105, %104 : vector<8x16x128xf32>
    %107 = arith.mulf %101, %106 : vector<8x16x128xf32>
    %108 = vector.shape_cast %107 : vector<8x16x128xf32> to vector<128x128xf32>
    %109 = arith.truncf %108 : vector<128x128xf32> to vector<128x128xbf16>
    %c0_69 = arith.constant 0 : index
    %c0_70 = arith.constant 0 : index
    %c0_71 = arith.constant 0 : index
    %110 = vector.load %arg8[%c0_69, %c0_70, %c0_71] : memref<4x128x128xbf16, #tpu.memory_space<vmem>>, vector<1x128x128xbf16>
    %111 = vector.shape_cast %110 : vector<1x128x128xbf16> to vector<128x128xbf16>
    %cst_72 = arith.constant dense<0.000000e+00> : vector<128x128xf32>
    %112 = tpu.matmul %109, %111, %cst_72 {dimension_numbers = #tpu.dot_dimension_numbers<[1], [0], [0], [1], [0, 0, 1, 1], [], []>} : vector<128x128xbf16>, vector<128x128xbf16>, vector<128x128xf32> -> vector<128x128xf32>
    %113 = arith.addf %39, %112 : vector<128x128xf32>
    %c1_73 = arith.constant 1 : index
    %c0_74 = arith.constant 0 : index
    %c0_75 = arith.constant 0 : index
    %114 = vector.load %arg6[%c1_73, %c0_74, %c0_75] : memref<4x9x128xf32, #tpu.memory_space<vmem>>, vector<1x9x128xf32>
    %115 = vector.shape_cast %114 : vector<1x9x128xf32> to vector<9x128xf32>
    %c1_76 = arith.constant 1 : index
    %c0_77 = arith.constant 0 : index
    %c0_78 = arith.constant 0 : index
    %116 = vector.load %arg7[%c1_76, %c0_77, %c0_78] : memref<4x1x128xf32, #tpu.memory_space<vmem>>, vector<1x1x128xf32>
    %117 = vector.shape_cast %116 : vector<1x1x128xf32> to vector<1x128xf32>
    %118 = vector.shape_cast %117 : vector<1x128xf32> to vector<1x1x128xf32>
    %c1_79 = arith.constant 1 : index
    %c8_80 = arith.constant 8 : index
    %c0_81 = arith.constant 0 : index
    %119 = vector.load %arg12[%c1_79, %c8_80, %c0_81] : memref<10x32x128xf32, #tpu.memory_space<vmem>>, vector<8x16x128xf32>
    %120 = vector.extract_strided_slice %115 {offsets = [4, 0], sizes = [1, 128], strides = [1, 1]} : vector<9x128xf32> to vector<1x128xf32>
    %121 = vector.shape_cast %120 : vector<1x128xf32> to vector<1x1x128xf32>
    %122 = vector.broadcast %121 : vector<1x1x128xf32> to vector<8x16x128xf32>
    %123 = arith.mulf %119, %122 : vector<8x16x128xf32>
    %124 = vector.broadcast %118 : vector<1x1x128xf32> to vector<8x16x128xf32>
    %125 = arith.addf %123, %124 : vector<8x16x128xf32>
    %c0_82 = arith.constant 0 : index
    %c7_83 = arith.constant 7 : index
    %c0_84 = arith.constant 0 : index
    %126 = vector.load %arg12[%c0_82, %c7_83, %c0_84] : memref<10x32x128xf32, #tpu.memory_space<vmem>>, vector<8x16x128xf32>
    %127 = vector.extract_strided_slice %115 {offsets = [0, 0], sizes = [1, 128], strides = [1, 1]} : vector<9x128xf32> to vector<1x128xf32>
    %128 = vector.shape_cast %127 : vector<1x128xf32> to vector<1x1x128xf32>
    %129 = vector.broadcast %128 : vector<1x1x128xf32> to vector<8x16x128xf32>
    %130 = arith.mulf %126, %129 : vector<8x16x128xf32>
    %131 = arith.addf %125, %130 : vector<8x16x128xf32>
    %c0_85 = arith.constant 0 : index
    %c8_86 = arith.constant 8 : index
    %c0_87 = arith.constant 0 : index
    %132 = vector.load %arg12[%c0_85, %c8_86, %c0_87] : memref<10x32x128xf32, #tpu.memory_space<vmem>>, vector<8x16x128xf32>
    %133 = vector.extract_strided_slice %115 {offsets = [1, 0], sizes = [1, 128], strides = [1, 1]} : vector<9x128xf32> to vector<1x128xf32>
    %134 = vector.shape_cast %133 : vector<1x128xf32> to vector<1x1x128xf32>
    %135 = vector.broadcast %134 : vector<1x1x128xf32> to vector<8x16x128xf32>
    %136 = arith.mulf %132, %135 : vector<8x16x128xf32>
    %137 = arith.addf %131, %136 : vector<8x16x128xf32>
    %c0_88 = arith.constant 0 : index
    %c9_89 = arith.constant 9 : index
    %c0_90 = arith.constant 0 : index
    %138 = vector.load %arg12[%c0_88, %c9_89, %c0_90] : memref<10x32x128xf32, #tpu.memory_space<vmem>>, vector<8x16x128xf32>
    %139 = vector.extract_strided_slice %115 {offsets = [2, 0], sizes = [1, 128], strides = [1, 1]} : vector<9x128xf32> to vector<1x128xf32>
    %140 = vector.shape_cast %139 : vector<1x128xf32> to vector<1x1x128xf32>
    %141 = vector.broadcast %140 : vector<1x1x128xf32> to vector<8x16x128xf32>
    %142 = arith.mulf %138, %141 : vector<8x16x128xf32>
    %143 = arith.addf %137, %142 : vector<8x16x128xf32>
    %c1_91 = arith.constant 1 : index
    %c7_92 = arith.constant 7 : index
    %c0_93 = arith.constant 0 : index
    %144 = vector.load %arg12[%c1_91, %c7_92, %c0_93] : memref<10x32x128xf32, #tpu.memory_space<vmem>>, vector<8x16x128xf32>
    %145 = vector.extract_strided_slice %115 {offsets = [3, 0], sizes = [1, 128], strides = [1, 1]} : vector<9x128xf32> to vector<1x128xf32>
    %146 = vector.shape_cast %145 : vector<1x128xf32> to vector<1x1x128xf32>
    %147 = vector.broadcast %146 : vector<1x1x128xf32> to vector<8x16x128xf32>
    %148 = arith.mulf %144, %147 : vector<8x16x128xf32>
    %149 = arith.addf %143, %148 : vector<8x16x128xf32>
    %c1_94 = arith.constant 1 : index
    %c9_95 = arith.constant 9 : index
    %c0_96 = arith.constant 0 : index
    %150 = vector.load %arg12[%c1_94, %c9_95, %c0_96] : memref<10x32x128xf32, #tpu.memory_space<vmem>>, vector<8x16x128xf32>
    %151 = vector.extract_strided_slice %115 {offsets = [5, 0], sizes = [1, 128], strides = [1, 1]} : vector<9x128xf32> to vector<1x128xf32>
    %152 = vector.shape_cast %151 : vector<1x128xf32> to vector<1x1x128xf32>
    %153 = vector.broadcast %152 : vector<1x1x128xf32> to vector<8x16x128xf32>
    %154 = arith.mulf %150, %153 : vector<8x16x128xf32>
    %155 = arith.addf %149, %154 : vector<8x16x128xf32>
    %c2_97 = arith.constant 2 : index
    %c7_98 = arith.constant 7 : index
    %c0_99 = arith.constant 0 : index
    %156 = vector.load %arg12[%c2_97, %c7_98, %c0_99] : memref<10x32x128xf32, #tpu.memory_space<vmem>>, vector<8x16x128xf32>
    %157 = vector.extract_strided_slice %115 {offsets = [6, 0], sizes = [1, 128], strides = [1, 1]} : vector<9x128xf32> to vector<1x128xf32>
    %158 = vector.shape_cast %157 : vector<1x128xf32> to vector<1x1x128xf32>
    %159 = vector.broadcast %158 : vector<1x1x128xf32> to vector<8x16x128xf32>
    %160 = arith.mulf %156, %159 : vector<8x16x128xf32>
    %161 = arith.addf %155, %160 : vector<8x16x128xf32>
    %c2_100 = arith.constant 2 : index
    %c8_101 = arith.constant 8 : index
    %c0_102 = arith.constant 0 : index
    %162 = vector.load %arg12[%c2_100, %c8_101, %c0_102] : memref<10x32x128xf32, #tpu.memory_space<vmem>>, vector<8x16x128xf32>
    %163 = vector.extract_strided_slice %115 {offsets = [7, 0], sizes = [1, 128], strides = [1, 1]} : vector<9x128xf32> to vector<1x128xf32>
    %164 = vector.shape_cast %163 : vector<1x128xf32> to vector<1x1x128xf32>
    %165 = vector.broadcast %164 : vector<1x1x128xf32> to vector<8x16x128xf32>
    %166 = arith.mulf %162, %165 : vector<8x16x128xf32>
    %167 = arith.addf %161, %166 : vector<8x16x128xf32>
    %c2_103 = arith.constant 2 : index
    %c9_104 = arith.constant 9 : index
    %c0_105 = arith.constant 0 : index
    %168 = vector.load %arg12[%c2_103, %c9_104, %c0_105] : memref<10x32x128xf32, #tpu.memory_space<vmem>>, vector<8x16x128xf32>
    %169 = vector.extract_strided_slice %115 {offsets = [8, 0], sizes = [1, 128], strides = [1, 1]} : vector<9x128xf32> to vector<1x128xf32>
    %170 = vector.shape_cast %169 : vector<1x128xf32> to vector<1x1x128xf32>
    %171 = vector.broadcast %170 : vector<1x1x128xf32> to vector<8x16x128xf32>
    %172 = arith.mulf %168, %171 : vector<8x16x128xf32>
    %173 = arith.addf %167, %172 : vector<8x16x128xf32>
    %cst_106 = arith.constant 5.000000e-01 : f32
    %174 = vector.broadcast %cst_106 : f32 to vector<8x16x128xf32>
    %175 = arith.mulf %174, %173 : vector<8x16x128xf32>
    %cst_107 = arith.constant 0.707106769 : f32
    %176 = vector.broadcast %cst_107 : f32 to vector<8x16x128xf32>
    %177 = arith.mulf %173, %176 : vector<8x16x128xf32>
    %178 = math.erf %177 : vector<8x16x128xf32>
    %cst_108 = arith.constant 1.000000e+00 : f32
    %179 = vector.broadcast %cst_108 : f32 to vector<8x16x128xf32>
    %180 = arith.addf %179, %178 : vector<8x16x128xf32>
    %181 = arith.mulf %175, %180 : vector<8x16x128xf32>
    %182 = vector.shape_cast %181 : vector<8x16x128xf32> to vector<128x128xf32>
    %183 = arith.truncf %182 : vector<128x128xf32> to vector<128x128xbf16>
    %c1_109 = arith.constant 1 : index
    %c0_110 = arith.constant 0 : index
    %c0_111 = arith.constant 0 : index
    %184 = vector.load %arg8[%c1_109, %c0_110, %c0_111] : memref<4x128x128xbf16, #tpu.memory_space<vmem>>, vector<1x128x128xbf16>
    %185 = vector.shape_cast %184 : vector<1x128x128xbf16> to vector<128x128xbf16>
    %cst_112 = arith.constant dense<0.000000e+00> : vector<128x128xf32>
    %186 = tpu.matmul %183, %185, %cst_112 {dimension_numbers = #tpu.dot_dimension_numbers<[1], [0], [0], [1], [0, 0, 1, 1], [], []>} : vector<128x128xbf16>, vector<128x128xbf16>, vector<128x128xf32> -> vector<128x128xf32>
    %187 = arith.addf %113, %186 : vector<128x128xf32>
    %c2_113 = arith.constant 2 : index
    %c0_114 = arith.constant 0 : index
    %c0_115 = arith.constant 0 : index
    %188 = vector.load %arg6[%c2_113, %c0_114, %c0_115] : memref<4x9x128xf32, #tpu.memory_space<vmem>>, vector<1x9x128xf32>
    %189 = vector.shape_cast %188 : vector<1x9x128xf32> to vector<9x128xf32>
    %c2_116 = arith.constant 2 : index
    %c0_117 = arith.constant 0 : index
    %c0_118 = arith.constant 0 : index
    %190 = vector.load %arg7[%c2_116, %c0_117, %c0_118] : memref<4x1x128xf32, #tpu.memory_space<vmem>>, vector<1x1x128xf32>
    %191 = vector.shape_cast %190 : vector<1x1x128xf32> to vector<1x128xf32>
    %192 = vector.shape_cast %191 : vector<1x128xf32> to vector<1x1x128xf32>
    %c1_119 = arith.constant 1 : index
    %c8_120 = arith.constant 8 : index
    %c0_121 = arith.constant 0 : index
    %193 = vector.load %arg12[%c1_119, %c8_120, %c0_121] : memref<10x32x128xf32, #tpu.memory_space<vmem>>, vector<8x16x128xf32>
    %194 = vector.extract_strided_slice %189 {offsets = [4, 0], sizes = [1, 128], strides = [1, 1]} : vector<9x128xf32> to vector<1x128xf32>
    %195 = vector.shape_cast %194 : vector<1x128xf32> to vector<1x1x128xf32>
    %196 = vector.broadcast %195 : vector<1x1x128xf32> to vector<8x16x128xf32>
    %197 = arith.mulf %193, %196 : vector<8x16x128xf32>
    %198 = vector.broadcast %192 : vector<1x1x128xf32> to vector<8x16x128xf32>
    %199 = arith.addf %197, %198 : vector<8x16x128xf32>
    %c0_122 = arith.constant 0 : index
    %c7_123 = arith.constant 7 : index
    %c0_124 = arith.constant 0 : index
    %200 = vector.load %arg12[%c0_122, %c7_123, %c0_124] : memref<10x32x128xf32, #tpu.memory_space<vmem>>, vector<8x16x128xf32>
    %201 = vector.extract_strided_slice %189 {offsets = [0, 0], sizes = [1, 128], strides = [1, 1]} : vector<9x128xf32> to vector<1x128xf32>
    %202 = vector.shape_cast %201 : vector<1x128xf32> to vector<1x1x128xf32>
    %203 = vector.broadcast %202 : vector<1x1x128xf32> to vector<8x16x128xf32>
    %204 = arith.mulf %200, %203 : vector<8x16x128xf32>
    %205 = arith.addf %199, %204 : vector<8x16x128xf32>
    %c0_125 = arith.constant 0 : index
    %c8_126 = arith.constant 8 : index
    %c0_127 = arith.constant 0 : index
    %206 = vector.load %arg12[%c0_125, %c8_126, %c0_127] : memref<10x32x128xf32, #tpu.memory_space<vmem>>, vector<8x16x128xf32>
    %207 = vector.extract_strided_slice %189 {offsets = [1, 0], sizes = [1, 128], strides = [1, 1]} : vector<9x128xf32> to vector<1x128xf32>
    %208 = vector.shape_cast %207 : vector<1x128xf32> to vector<1x1x128xf32>
    %209 = vector.broadcast %208 : vector<1x1x128xf32> to vector<8x16x128xf32>
    %210 = arith.mulf %206, %209 : vector<8x16x128xf32>
    %211 = arith.addf %205, %210 : vector<8x16x128xf32>
    %c0_128 = arith.constant 0 : index
    %c9_129 = arith.constant 9 : index
    %c0_130 = arith.constant 0 : index
    %212 = vector.load %arg12[%c0_128, %c9_129, %c0_130] : memref<10x32x128xf32, #tpu.memory_space<vmem>>, vector<8x16x128xf32>
    %213 = vector.extract_strided_slice %189 {offsets = [2, 0], sizes = [1, 128], strides = [1, 1]} : vector<9x128xf32> to vector<1x128xf32>
    %214 = vector.shape_cast %213 : vector<1x128xf32> to vector<1x1x128xf32>
    %215 = vector.broadcast %214 : vector<1x1x128xf32> to vector<8x16x128xf32>
    %216 = arith.mulf %212, %215 : vector<8x16x128xf32>
    %217 = arith.addf %211, %216 : vector<8x16x128xf32>
    %c1_131 = arith.constant 1 : index
    %c7_132 = arith.constant 7 : index
    %c0_133 = arith.constant 0 : index
    %218 = vector.load %arg12[%c1_131, %c7_132, %c0_133] : memref<10x32x128xf32, #tpu.memory_space<vmem>>, vector<8x16x128xf32>
    %219 = vector.extract_strided_slice %189 {offsets = [3, 0], sizes = [1, 128], strides = [1, 1]} : vector<9x128xf32> to vector<1x128xf32>
    %220 = vector.shape_cast %219 : vector<1x128xf32> to vector<1x1x128xf32>
    %221 = vector.broadcast %220 : vector<1x1x128xf32> to vector<8x16x128xf32>
    %222 = arith.mulf %218, %221 : vector<8x16x128xf32>
    %223 = arith.addf %217, %222 : vector<8x16x128xf32>
    %c1_134 = arith.constant 1 : index
    %c9_135 = arith.constant 9 : index
    %c0_136 = arith.constant 0 : index
    %224 = vector.load %arg12[%c1_134, %c9_135, %c0_136] : memref<10x32x128xf32, #tpu.memory_space<vmem>>, vector<8x16x128xf32>
    %225 = vector.extract_strided_slice %189 {offsets = [5, 0], sizes = [1, 128], strides = [1, 1]} : vector<9x128xf32> to vector<1x128xf32>
    %226 = vector.shape_cast %225 : vector<1x128xf32> to vector<1x1x128xf32>
    %227 = vector.broadcast %226 : vector<1x1x128xf32> to vector<8x16x128xf32>
    %228 = arith.mulf %224, %227 : vector<8x16x128xf32>
    %229 = arith.addf %223, %228 : vector<8x16x128xf32>
    %c2_137 = arith.constant 2 : index
    %c7_138 = arith.constant 7 : index
    %c0_139 = arith.constant 0 : index
    %230 = vector.load %arg12[%c2_137, %c7_138, %c0_139] : memref<10x32x128xf32, #tpu.memory_space<vmem>>, vector<8x16x128xf32>
    %231 = vector.extract_strided_slice %189 {offsets = [6, 0], sizes = [1, 128], strides = [1, 1]} : vector<9x128xf32> to vector<1x128xf32>
    %232 = vector.shape_cast %231 : vector<1x128xf32> to vector<1x1x128xf32>
    %233 = vector.broadcast %232 : vector<1x1x128xf32> to vector<8x16x128xf32>
    %234 = arith.mulf %230, %233 : vector<8x16x128xf32>
    %235 = arith.addf %229, %234 : vector<8x16x128xf32>
    %c2_140 = arith.constant 2 : index
    %c8_141 = arith.constant 8 : index
    %c0_142 = arith.constant 0 : index
    %236 = vector.load %arg12[%c2_140, %c8_141, %c0_142] : memref<10x32x128xf32, #tpu.memory_space<vmem>>, vector<8x16x128xf32>
    %237 = vector.extract_strided_slice %189 {offsets = [7, 0], sizes = [1, 128], strides = [1, 1]} : vector<9x128xf32> to vector<1x128xf32>
    %238 = vector.shape_cast %237 : vector<1x128xf32> to vector<1x1x128xf32>
    %239 = vector.broadcast %238 : vector<1x1x128xf32> to vector<8x16x128xf32>
    %240 = arith.mulf %236, %239 : vector<8x16x128xf32>
    %241 = arith.addf %235, %240 : vector<8x16x128xf32>
    %c2_143 = arith.constant 2 : index
    %c9_144 = arith.constant 9 : index
    %c0_145 = arith.constant 0 : index
    %242 = vector.load %arg12[%c2_143, %c9_144, %c0_145] : memref<10x32x128xf32, #tpu.memory_space<vmem>>, vector<8x16x128xf32>
    %243 = vector.extract_strided_slice %189 {offsets = [8, 0], sizes = [1, 128], strides = [1, 1]} : vector<9x128xf32> to vector<1x128xf32>
    %244 = vector.shape_cast %243 : vector<1x128xf32> to vector<1x1x128xf32>
    %245 = vector.broadcast %244 : vector<1x1x128xf32> to vector<8x16x128xf32>
    %246 = arith.mulf %242, %245 : vector<8x16x128xf32>
    %247 = arith.addf %241, %246 : vector<8x16x128xf32>
    %cst_146 = arith.constant 5.000000e-01 : f32
    %248 = vector.broadcast %cst_146 : f32 to vector<8x16x128xf32>
    %249 = arith.mulf %248, %247 : vector<8x16x128xf32>
    %cst_147 = arith.constant 0.707106769 : f32
    %250 = vector.broadcast %cst_147 : f32 to vector<8x16x128xf32>
    %251 = arith.mulf %247, %250 : vector<8x16x128xf32>
    %252 = math.erf %251 : vector<8x16x128xf32>
    %cst_148 = arith.constant 1.000000e+00 : f32
    %253 = vector.broadcast %cst_148 : f32 to vector<8x16x128xf32>
    %254 = arith.addf %253, %252 : vector<8x16x128xf32>
    %255 = arith.mulf %249, %254 : vector<8x16x128xf32>
    %256 = vector.shape_cast %255 : vector<8x16x128xf32> to vector<128x128xf32>
    %257 = arith.truncf %256 : vector<128x128xf32> to vector<128x128xbf16>
    %c2_149 = arith.constant 2 : index
    %c0_150 = arith.constant 0 : index
    %c0_151 = arith.constant 0 : index
    %258 = vector.load %arg8[%c2_149, %c0_150, %c0_151] : memref<4x128x128xbf16, #tpu.memory_space<vmem>>, vector<1x128x128xbf16>
    %259 = vector.shape_cast %258 : vector<1x128x128xbf16> to vector<128x128xbf16>
    %cst_152 = arith.constant dense<0.000000e+00> : vector<128x128xf32>
    %260 = tpu.matmul %257, %259, %cst_152 {dimension_numbers = #tpu.dot_dimension_numbers<[1], [0], [0], [1], [0, 0, 1, 1], [], []>} : vector<128x128xbf16>, vector<128x128xbf16>, vector<128x128xf32> -> vector<128x128xf32>
    %261 = arith.addf %187, %260 : vector<128x128xf32>
    %c3 = arith.constant 3 : index
    %c0_153 = arith.constant 0 : index
    %c0_154 = arith.constant 0 : index
    %262 = vector.load %arg6[%c3, %c0_153, %c0_154] : memref<4x9x128xf32, #tpu.memory_space<vmem>>, vector<1x9x128xf32>
    %263 = vector.shape_cast %262 : vector<1x9x128xf32> to vector<9x128xf32>
    %c3_155 = arith.constant 3 : index
    %c0_156 = arith.constant 0 : index
    %c0_157 = arith.constant 0 : index
    %264 = vector.load %arg7[%c3_155, %c0_156, %c0_157] : memref<4x1x128xf32, #tpu.memory_space<vmem>>, vector<1x1x128xf32>
    %265 = vector.shape_cast %264 : vector<1x1x128xf32> to vector<1x128xf32>
    %266 = vector.shape_cast %265 : vector<1x128xf32> to vector<1x1x128xf32>
    %c1_158 = arith.constant 1 : index
    %c8_159 = arith.constant 8 : index
    %c0_160 = arith.constant 0 : index
    %267 = vector.load %arg12[%c1_158, %c8_159, %c0_160] : memref<10x32x128xf32, #tpu.memory_space<vmem>>, vector<8x16x128xf32>
    %268 = vector.extract_strided_slice %263 {offsets = [4, 0], sizes = [1, 128], strides = [1, 1]} : vector<9x128xf32> to vector<1x128xf32>
    %269 = vector.shape_cast %268 : vector<1x128xf32> to vector<1x1x128xf32>
    %270 = vector.broadcast %269 : vector<1x1x128xf32> to vector<8x16x128xf32>
    %271 = arith.mulf %267, %270 : vector<8x16x128xf32>
    %272 = vector.broadcast %266 : vector<1x1x128xf32> to vector<8x16x128xf32>
    %273 = arith.addf %271, %272 : vector<8x16x128xf32>
    %c0_161 = arith.constant 0 : index
    %c7_162 = arith.constant 7 : index
    %c0_163 = arith.constant 0 : index
    %274 = vector.load %arg12[%c0_161, %c7_162, %c0_163] : memref<10x32x128xf32, #tpu.memory_space<vmem>>, vector<8x16x128xf32>
    %275 = vector.extract_strided_slice %263 {offsets = [0, 0], sizes = [1, 128], strides = [1, 1]} : vector<9x128xf32> to vector<1x128xf32>
    %276 = vector.shape_cast %275 : vector<1x128xf32> to vector<1x1x128xf32>
    %277 = vector.broadcast %276 : vector<1x1x128xf32> to vector<8x16x128xf32>
    %278 = arith.mulf %274, %277 : vector<8x16x128xf32>
    %279 = arith.addf %273, %278 : vector<8x16x128xf32>
    %c0_164 = arith.constant 0 : index
    %c8_165 = arith.constant 8 : index
    %c0_166 = arith.constant 0 : index
    %280 = vector.load %arg12[%c0_164, %c8_165, %c0_166] : memref<10x32x128xf32, #tpu.memory_space<vmem>>, vector<8x16x128xf32>
    %281 = vector.extract_strided_slice %263 {offsets = [1, 0], sizes = [1, 128], strides = [1, 1]} : vector<9x128xf32> to vector<1x128xf32>
    %282 = vector.shape_cast %281 : vector<1x128xf32> to vector<1x1x128xf32>
    %283 = vector.broadcast %282 : vector<1x1x128xf32> to vector<8x16x128xf32>
    %284 = arith.mulf %280, %283 : vector<8x16x128xf32>
    %285 = arith.addf %279, %284 : vector<8x16x128xf32>
    %c0_167 = arith.constant 0 : index
    %c9_168 = arith.constant 9 : index
    %c0_169 = arith.constant 0 : index
    %286 = vector.load %arg12[%c0_167, %c9_168, %c0_169] : memref<10x32x128xf32, #tpu.memory_space<vmem>>, vector<8x16x128xf32>
    %287 = vector.extract_strided_slice %263 {offsets = [2, 0], sizes = [1, 128], strides = [1, 1]} : vector<9x128xf32> to vector<1x128xf32>
    %288 = vector.shape_cast %287 : vector<1x128xf32> to vector<1x1x128xf32>
    %289 = vector.broadcast %288 : vector<1x1x128xf32> to vector<8x16x128xf32>
    %290 = arith.mulf %286, %289 : vector<8x16x128xf32>
    %291 = arith.addf %285, %290 : vector<8x16x128xf32>
    %c1_170 = arith.constant 1 : index
    %c7_171 = arith.constant 7 : index
    %c0_172 = arith.constant 0 : index
    %292 = vector.load %arg12[%c1_170, %c7_171, %c0_172] : memref<10x32x128xf32, #tpu.memory_space<vmem>>, vector<8x16x128xf32>
    %293 = vector.extract_strided_slice %263 {offsets = [3, 0], sizes = [1, 128], strides = [1, 1]} : vector<9x128xf32> to vector<1x128xf32>
    %294 = vector.shape_cast %293 : vector<1x128xf32> to vector<1x1x128xf32>
    %295 = vector.broadcast %294 : vector<1x1x128xf32> to vector<8x16x128xf32>
    %296 = arith.mulf %292, %295 : vector<8x16x128xf32>
    %297 = arith.addf %291, %296 : vector<8x16x128xf32>
    %c1_173 = arith.constant 1 : index
    %c9_174 = arith.constant 9 : index
    %c0_175 = arith.constant 0 : index
    %298 = vector.load %arg12[%c1_173, %c9_174, %c0_175] : memref<10x32x128xf32, #tpu.memory_space<vmem>>, vector<8x16x128xf32>
    %299 = vector.extract_strided_slice %263 {offsets = [5, 0], sizes = [1, 128], strides = [1, 1]} : vector<9x128xf32> to vector<1x128xf32>
    %300 = vector.shape_cast %299 : vector<1x128xf32> to vector<1x1x128xf32>
    %301 = vector.broadcast %300 : vector<1x1x128xf32> to vector<8x16x128xf32>
    %302 = arith.mulf %298, %301 : vector<8x16x128xf32>
    %303 = arith.addf %297, %302 : vector<8x16x128xf32>
    %c2_176 = arith.constant 2 : index
    %c7_177 = arith.constant 7 : index
    %c0_178 = arith.constant 0 : index
    %304 = vector.load %arg12[%c2_176, %c7_177, %c0_178] : memref<10x32x128xf32, #tpu.memory_space<vmem>>, vector<8x16x128xf32>
    %305 = vector.extract_strided_slice %263 {offsets = [6, 0], sizes = [1, 128], strides = [1, 1]} : vector<9x128xf32> to vector<1x128xf32>
    %306 = vector.shape_cast %305 : vector<1x128xf32> to vector<1x1x128xf32>
    %307 = vector.broadcast %306 : vector<1x1x128xf32> to vector<8x16x128xf32>
    %308 = arith.mulf %304, %307 : vector<8x16x128xf32>
    %309 = arith.addf %303, %308 : vector<8x16x128xf32>
    %c2_179 = arith.constant 2 : index
    %c8_180 = arith.constant 8 : index
    %c0_181 = arith.constant 0 : index
    %310 = vector.load %arg12[%c2_179, %c8_180, %c0_181] : memref<10x32x128xf32, #tpu.memory_space<vmem>>, vector<8x16x128xf32>
    %311 = vector.extract_strided_slice %263 {offsets = [7, 0], sizes = [1, 128], strides = [1, 1]} : vector<9x128xf32> to vector<1x128xf32>
    %312 = vector.shape_cast %311 : vector<1x128xf32> to vector<1x1x128xf32>
    %313 = vector.broadcast %312 : vector<1x1x128xf32> to vector<8x16x128xf32>
    %314 = arith.mulf %310, %313 : vector<8x16x128xf32>
    %315 = arith.addf %309, %314 : vector<8x16x128xf32>
    %c2_182 = arith.constant 2 : index
    %c9_183 = arith.constant 9 : index
    %c0_184 = arith.constant 0 : index
    %316 = vector.load %arg12[%c2_182, %c9_183, %c0_184] : memref<10x32x128xf32, #tpu.memory_space<vmem>>, vector<8x16x128xf32>
    %317 = vector.extract_strided_slice %263 {offsets = [8, 0], sizes = [1, 128], strides = [1, 1]} : vector<9x128xf32> to vector<1x128xf32>
    %318 = vector.shape_cast %317 : vector<1x128xf32> to vector<1x1x128xf32>
    %319 = vector.broadcast %318 : vector<1x1x128xf32> to vector<8x16x128xf32>
    %320 = arith.mulf %316, %319 : vector<8x16x128xf32>
    %321 = arith.addf %315, %320 : vector<8x16x128xf32>
    %cst_185 = arith.constant 5.000000e-01 : f32
    %322 = vector.broadcast %cst_185 : f32 to vector<8x16x128xf32>
    %323 = arith.mulf %322, %321 : vector<8x16x128xf32>
    %cst_186 = arith.constant 0.707106769 : f32
    %324 = vector.broadcast %cst_186 : f32 to vector<8x16x128xf32>
    %325 = arith.mulf %321, %324 : vector<8x16x128xf32>
    %326 = math.erf %325 : vector<8x16x128xf32>
    %cst_187 = arith.constant 1.000000e+00 : f32
    %327 = vector.broadcast %cst_187 : f32 to vector<8x16x128xf32>
    %328 = arith.addf %327, %326 : vector<8x16x128xf32>
    %329 = arith.mulf %323, %328 : vector<8x16x128xf32>
    %330 = vector.shape_cast %329 : vector<8x16x128xf32> to vector<128x128xf32>
    %331 = arith.truncf %330 : vector<128x128xf32> to vector<128x128xbf16>
    %c3_188 = arith.constant 3 : index
    %c0_189 = arith.constant 0 : index
    %c0_190 = arith.constant 0 : index
    %332 = vector.load %arg8[%c3_188, %c0_189, %c0_190] : memref<4x128x128xbf16, #tpu.memory_space<vmem>>, vector<1x128x128xbf16>
    %333 = vector.shape_cast %332 : vector<1x128x128xbf16> to vector<128x128xbf16>
    %cst_191 = arith.constant dense<0.000000e+00> : vector<128x128xf32>
    %334 = tpu.matmul %331, %333, %cst_191 {dimension_numbers = #tpu.dot_dimension_numbers<[1], [0], [0], [1], [0, 0, 1, 1], [], []>} : vector<128x128xbf16>, vector<128x128xbf16>, vector<128x128xf32> -> vector<128x128xf32>
    %335 = arith.addf %261, %334 : vector<128x128xf32>
    %336 = vector.shape_cast %335 : vector<128x128xf32> to vector<1x8x16x128xf32>
    %337 = arith.truncf %336 : vector<1x8x16x128xf32> to vector<1x8x16x128xbf16>
    %c0_192 = arith.constant 0 : index
    %c0_193 = arith.constant 0 : index
    %c0_194 = arith.constant 0 : index
    %c0_195 = arith.constant 0 : index
    %338 = vector.load %arg10[%c0_192, %c0_193, %c0_194, %c0_195] : memref<1x8x16x128xbf16, #tpu.memory_space<vmem>>, vector<1x8x16x128xbf16>
    tpu.vector_store %arg10[%c0_192, %c0_193, %c0_194, %c0_195], %337 {strides = array<i32>} : memref<1x8x16x128xbf16, #tpu.memory_space<vmem>>, vector<1x8x16x128xbf16>,
    %cst_196 = arith.constant dense<0.000000e+00> : vector<128xf32>
    %339 = vector.multi_reduction <add>, %335, %cst_196 [0] : vector<128x128xf32> to vector<128xf32>
    %340 = vector.shape_cast %339 : vector<128xf32> to vector<1x128xf32>
    %341 = arith.mulf %335, %335 : vector<128x128xf32>
    %cst_197 = arith.constant dense<0.000000e+00> : vector<128xf32>
    %342 = vector.multi_reduction <add>, %341, %cst_197 [0] : vector<128x128xf32> to vector<128xf32>
    %343 = vector.shape_cast %342 : vector<128xf32> to vector<1x128xf32>
    %344 = tpu.concatenate %340, %343 in 0 : vector<1x128xf32>, vector<1x128xf32> -> vector<2x128xf32>
    %345 = vector.shape_cast %344 : vector<2x128xf32> to vector<1x2x128xf32>
    %c0_198 = arith.constant 0 : index
    %c0_199 = arith.constant 0 : index
    %c0_200 = arith.constant 0 : index
    %346 = vector.load %arg11[%c0_198, %c0_199, %c0_200] : memref<1x2x128xf32, #tpu.memory_space<vmem>>, vector<1x2x128xf32>
    tpu.vector_store %arg11[%c0_198, %c0_199, %c0_200], %345 {strides = array<i32>} : memref<1x2x128xf32, #tpu.memory_space<vmem>>, vector<1x2x128xf32>,
    return
  }
  func.func @transform_0(%arg0: i32, %arg1: i32) -> (i32, i32, i32, i32) {
    %c0_i32 = arith.constant 0 : i32
    %c0_i32_0 = arith.constant 0 : i32
    %c0_i32_1 = arith.constant 0 : i32
    return %arg0, %arg1, %c0_i32, %c0_i32_0 : i32, i32, i32, i32
  }
  func.func @transform_1(%arg0: i32, %arg1: i32) -> (i32, i32, i32, i32) {
    %c2_i32 = arith.constant 2 : i32
    %0 = arith.muli %arg0, %c2_i32 : i32
    %1 = arith.addi %0, %arg1 : i32
    %c0_i32 = arith.constant 0 : i32
    %c0_i32_0 = arith.constant 0 : i32
    %c0_i32_1 = arith.constant 0 : i32
    %c0_i32_2 = arith.constant 0 : i32
    return %1, %c0_i32, %c0_i32_0, %c0_i32_1 : i32, i32, i32, i32
  }
  func.func @transform_2(%arg0: i32, %arg1: i32) -> (i32, i32) {
    %c0_i32 = arith.constant 0 : i32
    %c0_i32_0 = arith.constant 0 : i32
    %c0_i32_1 = arith.constant 0 : i32
    return %c0_i32, %c0_i32_0 : i32, i32
  }
  func.func @transform_3(%arg0: i32, %arg1: i32) -> (i32, i32) {
    %c0_i32 = arith.constant 0 : i32
    %c0_i32_0 = arith.constant 0 : i32
    %c0_i32_1 = arith.constant 0 : i32
    return %c0_i32, %c0_i32_0 : i32, i32
  }
  func.func @transform_4(%arg0: i32, %arg1: i32) -> (i32, i32, i32) {
    %c0_i32 = arith.constant 0 : i32
    %c0_i32_0 = arith.constant 0 : i32
    %c0_i32_1 = arith.constant 0 : i32
    %c0_i32_2 = arith.constant 0 : i32
    return %c0_i32, %c0_i32_0, %c0_i32_1 : i32, i32, i32
  }
  func.func @transform_5(%arg0: i32, %arg1: i32) -> (i32, i32, i32) {
    %c0_i32 = arith.constant 0 : i32
    %c0_i32_0 = arith.constant 0 : i32
    %c0_i32_1 = arith.constant 0 : i32
    %c0_i32_2 = arith.constant 0 : i32
    return %c0_i32, %c0_i32_0, %c0_i32_1 : i32, i32, i32
  }
  func.func @transform_6(%arg0: i32, %arg1: i32) -> (i32, i32, i32) {
    %c0_i32 = arith.constant 0 : i32
    %c0_i32_0 = arith.constant 0 : i32
    %c0_i32_1 = arith.constant 0 : i32
    %c0_i32_2 = arith.constant 0 : i32
    return %c0_i32, %c0_i32_0, %c0_i32_1 : i32, i32, i32
  }
  func.func @transform_7(%arg0: i32, %arg1: i32) -> (i32, i32) {
    %c0_i32 = arith.constant 0 : i32
    %c0_i32_0 = arith.constant 0 : i32
    %c0_i32_1 = arith.constant 0 : i32
    return %c0_i32, %c0_i32_0 : i32, i32
  }
  func.func @transform_8(%arg0: i32, %arg1: i32) -> (i32, i32, i32, i32) {
    %c0_i32 = arith.constant 0 : i32
    %c0_i32_0 = arith.constant 0 : i32
    %c0_i32_1 = arith.constant 0 : i32
    return %arg0, %arg1, %c0_i32, %c0_i32_0 : i32, i32, i32, i32
  }
  func.func @transform_9(%arg0: i32, %arg1: i32) -> (i32, i32, i32) {
    %c2_i32 = arith.constant 2 : i32
    %0 = arith.muli %arg0, %c2_i32 : i32
    %1 = arith.addi %0, %arg1 : i32
    %c0_i32 = arith.constant 0 : i32
    %c0_i32_0 = arith.constant 0 : i32
    %c0_i32_1 = arith.constant 0 : i32
    return %1, %c0_i32, %c0_i32_0 : i32, i32, i32
  }
}

</mosaic_0001>

<llo_original>
// kernel: tpu_custom_call.1
$region0: #{tpu_custom_call.1}
  #allocation0 [shape = 'u32[]', space=smem, size = 0x4, offset = 0x4, fixed_abs, tag = 'smem constant byte address 0x4 - core index']
  #allocation1 [shape = 'u32[72,128]{1,0:T(1,128)}', space=vmem, size = 0x9000, scoped, tag = 'internal scratch']
  #allocation2 [shape = 'f32[10,32,128]{2,1,0:T(8,128)}', space=vmem, size = 0x28000, scoped, tag = 'scratch operand']
  %s0 = inlined_call_operand.hbm [shape: f32[2,16,16,128], index: 0, kind: input, shape index: {}]
  %s1 = inlined_call_operand.hbm [shape: f32[4,2,16,128], index: 1, kind: input, shape index: {}]
  %s2 = inlined_call_operand.vmem [shape: bf16[128,128], index: 2, kind: input, shape index: {}]
  %s3 = inlined_call_operand.vmem [shape: f32[1,128], index: 3, kind: input, shape index: {}]
  %s4 = inlined_call_operand.vmem [shape: f32[4,9,128], index: 4, kind: input, shape index: {}]
  %s5 = inlined_call_operand.vmem [shape: f32[4,1,128], index: 5, kind: input, shape index: {}]
  %s6 = inlined_call_operand.hbm [shape: bf16[4,128,128], index: 6, kind: input, shape index: {}]
  %s7 = inlined_call_operand.vmem [shape: f32[1,128], index: 7, kind: input, shape index: {}]
  %s8 = inlined_call_operand.hbm [shape: bf16[2,16,16,128], index: 8, kind: output, shape index: {0}]
  %s9 = inlined_call_operand.hbm [shape: f32[4,2,128], index: 9, kind: output, shape index: {1}]
  %10 = xla_tuple %s8, %s9
  %s11 = sld [smem:[#allocation0]]
  $region85: #{tpu_custom_call.1} parent=0
    _
  %s13 = ssub.s32 1, %s11
  %s14 = scalar_select 0, %s13, %s11
  $region1: #{tpu_custom_call.1} parent=0
    #allocation3 [shape = 'u8[131072]{0}', space=vmem, size = 0x20000, scoped, tag = 'input window, operand 0']
    #allocation4 [shape = 's32[2]{0}', space=sflag, size = 0x8, scoped, tag = 'scoped memory for tpu_custom_call.1']
    #allocation5 [shape = 's32[2]{0}', space=sflag, size = 0x8, scoped, tag = 'scoped memory for tpu_custom_call.1']
    #allocation6 [shape = 'u8[32768]{0}', space=vmem, size = 0x8000, scoped, tag = 'input window, operand 1']
    #allocation7 [shape = 's32[2]{0}', space=sflag, size = 0x8, scoped, tag = 'scoped memory for tpu_custom_call.1']
    #allocation8 [shape = 'u8[131072]{0}', space=vmem, size = 0x20000, scoped, tag = 'input window, operand 6, single buffered']
    #allocation9 [shape = 'u8[65536]{0}', space=vmem, size = 0x10000, scoped, tag = 'output window, operand 0']
    #allocation10 [shape = 'u8[2048]{0}', space=vmem, size = 0x800, scoped, tag = 'output window, operand 1']
    #allocation11 [shape = 's32[2]{0}', space=sflag, size = 0x8, scoped, tag = 'scoped memory for tpu_custom_call.1']
    %15 = vsyncpa [#allocation4], 0
    %s16 = scalar_lea.sflag [#allocation4], 1
    %17 = vsyncpa %s16, 0
    %18 = vsyncpa [#allocation7], 0
    %s19 = scalar_lea.sflag [#allocation7], 1
    %20 = vsyncpa %s19, 0
    %21 = vsyncpa [#allocation5], 0
    %s22 = scalar_lea.sflag [#allocation5], 1
    %23 = vsyncpa %s22, 0
    %24 = vsyncpa [#allocation11], 0
    %s25 = scalar_lea.sflag [#allocation11], 1
    %26 = vsyncpa %s25, 0
    loop: start=0, step=1, limit=6
    $region2: #{tpu_custom_call.1} parent=1 // loop_pre_header
      _
    $region3: #{tpu_custom_call.1} parent=1 // loop_header
      %s28 = sphi 0, %s32
      %p29 = scmp.ge.s32.totalorder %s28, 6
      %s35 = sphi 0, %s47
      %s36 = sphi 0, %s43
      %s37 = sphi 0, %s35
      %s38 = sphi 0, %s36
      %s39 = sphi 0, %s37
      %s40 = sphi 0, %s38
      %s52 = sphi 0, %s54
      %s55 = sphi 0, %s52
      %s56 = sphi 0, %s55
      %s72 = sphi 0, %s56
      %s82 = sphi 0, %s84
      %s85 = sphi 0, %s82
      %s86 = sphi 0, %s85
      %s102 = sphi 0, %s86
      %s106 = sphi 0, %s106
      %s108 = sphi 0, %s106
      %s109 = sphi 0, %s108
      %s123 = sphi 0, %s109
      %s127 = sphi 0, %s127
      %s129 = sphi 0, %s127
      %s130 = sphi 0, %s129
      %s144 = sphi 0, %s130
      %s148 = sphi 0, %s148
      %s150 = sphi 0, %s148
      %s151 = sphi 0, %s150
      %s165 = sphi 0, %s151
      %s169 = sphi 0, %s169
      %s171 = sphi 0, %s169
      %s172 = sphi 0, %s171
      %s186 = sphi 0, %s172
      %s190 = sphi 0, %s190
      %s192 = sphi 0, %s190
      %s193 = sphi 0, %s192
      %s207 = sphi 0, %s193
      %s211 = sphi 0, %s211
      %s213 = sphi 0, %s211
      %s214 = sphi 0, %s213
      %s228 = sphi 0, %s214
      %s236 = sphi 0, %s238
      %s239 = sphi 0, %s236
      %s240 = sphi 0, %s239
      %s256 = sphi 0, %s240
      %s266 = sphi 0, %s268
      %s269 = sphi 0, %s266
      %s270 = sphi 0, %s269
      %s286 = sphi 0, %s270
    $region4: #{tpu_custom_call.1} parent=1 // loop_header_branch
      %31 = sbr.rel (%p29) target = $region8
    $region5: #{tpu_custom_call.1} parent=1 // loop_body
      %s33 = ssub.s32 %s28, 1
      %s34 = ssub.s32 %s28, 2
      %s41 = sadd.s32 1, %s36
      %p42 = scmp.ge.s32.totalorder %s41, 2
      %s43 = scalar_select %p42, 0, %s41
      %s44 = sadd.s32 1, %s35
      %s45 = scalar_select %p42, %s44, %s35
      %p46 = scmp.ge.s32.totalorder %s45, 2
      %s47 = scalar_select %p46, 0, %s45
      %s48 = ssub.s32 %s35, %s47
      %s49 = ssub.s32 %s36, %s43
      %s50 = sor.u32 %s48, %s49
      %p51 = scmp.eq.s32.totalorder %s50, 0
      %s53 = sadd.s32 %s52, 1
      %s54 = scalar_select %p51, %s52, %s53
      %p57 = pneg %p51
      %p58 = scmp.eq.s32.totalorder %s28, 3
      %p59 = por %p57, %p58
      %p60 = scmp.ne.s32.totalorder %s52, %s55
      %p61 = scmp.eq.s32.totalorder %s28, 0
      %p62 = por %p60, %p61
      %p63 = scmp.ne.s32.totalorder %s52, %s55
      %p64 = scmp.eq.s32.totalorder %s33, 3
      %p65 = por %p63, %p64
      %p66 = scmp.ne.s32.totalorder %s55, %s56
      %p67 = scmp.eq.s32.totalorder %s33, 0
      %p68 = por %p66, %p67
      %p69 = scmp.ne.s32.totalorder %s55, %s56
      %p70 = scmp.eq.s32.totalorder %s34, 3
      %p71 = por %p69, %p70
      %p73 = scmp.ne.s32.totalorder %s56, %s72
      %p74 = scmp.eq.s32.totalorder %s34, 0
      %p75 = por %p73, %p74
      %s76 = smul.u32 %s35, 2
      %s77 = sadd.s32 %s76, %s36
      %s78 = smul.u32 %s47, 2
      %s79 = sadd.s32 %s78, %s43
      %s80 = ssub.s32 %s77, %s79
      %p81 = scmp.eq.s32.totalorder %s80, 0
      %s83 = sadd.s32 %s82, 1
      %s84 = scalar_select %p81, %s82, %s83
      %p87 = pneg %p81
      %p88 = scmp.eq.s32.totalorder %s28, 3
      %p89 = por %p87, %p88
      %p90 = scmp.ne.s32.totalorder %s82, %s85
      %p91 = scmp.eq.s32.totalorder %s28, 0
      %p92 = por %p90, %p91
      %p93 = scmp.ne.s32.totalorder %s82, %s85
      %p94 = scmp.eq.s32.totalorder %s33, 3
      %p95 = por %p93, %p94
      %p96 = scmp.ne.s32.totalorder %s85, %s86
      %p97 = scmp.eq.s32.totalorder %s33, 0
      %p98 = por %p96, %p97
      %p99 = scmp.ne.s32.totalorder %s85, %s86
      %p100 = scmp.eq.s32.totalorder %s34, 3
      %p101 = por %p99, %p100
      %p103 = scmp.ne.s32.totalorder %s86, %s102
      %p104 = scmp.eq.s32.totalorder %s34, 0
      %p105 = por %p103, %p104
      %s107 = sadd.s32 %s106, 1
      %p110 = scmp.eq.s32.totalorder %s28, 3
      %p111 = scmp.ne.s32.totalorder %s106, %s108
      %p112 = scmp.eq.s32.totalorder %s28, 0
      %p113 = por %p111, %p112
      %p114 = scmp.ne.s32.totalorder %s106, %s108
      %p115 = scmp.eq.s32.totalorder %s33, 3
      %p116 = por %p114, %p115
      %p117 = scmp.ne.s32.totalorder %s108, %s109
      %p118 = scmp.eq.s32.totalorder %s33, 0
      %p119 = por %p117, %p118
      %p120 = scmp.ne.s32.totalorder %s108, %s109
      %p121 = scmp.eq.s32.totalorder %s34, 3
      %p122 = por %p120, %p121
      %p124 = scmp.ne.s32.totalorder %s109, %s123
      %p125 = scmp.eq.s32.totalorder %s34, 0
      %p126 = por %p124, %p125
      %s128 = sadd.s32 %s127, 1
      %p131 = scmp.eq.s32.totalorder %s28, 3
      %p132 = scmp.ne.s32.totalorder %s127, %s129
      %p133 = scmp.eq.s32.totalorder %s28, 0
      %p134 = por %p132, %p133
      %p135 = scmp.ne.s32.totalorder %s127, %s129
      %p136 = scmp.eq.s32.totalorder %s33, 3
      %p137 = por %p135, %p136
      %p138 = scmp.ne.s32.totalorder %s129, %s130
      %p139 = scmp.eq.s32.totalorder %s33, 0
      %p140 = por %p138, %p139
      %p141 = scmp.ne.s32.totalorder %s129, %s130
      %p142 = scmp.eq.s32.totalorder %s34, 3
      %p143 = por %p141, %p142
      %p145 = scmp.ne.s32.totalorder %s130, %s144
      %p146 = scmp.eq.s32.totalorder %s34, 0
      %p147 = por %p145, %p146
      %s149 = sadd.s32 %s148, 1
      %p152 = scmp.eq.s32.totalorder %s28, 3
      %p153 = scmp.ne.s32.totalorder %s148, %s150
      %p154 = scmp.eq.s32.totalorder %s28, 0
      %p155 = por %p153, %p154
      %p156 = scmp.ne.s32.totalorder %s148, %s150
      %p157 = scmp.eq.s32.totalorder %s33, 3
      %p158 = por %p156, %p157
      %p159 = scmp.ne.s32.totalorder %s150, %s151
      %p160 = scmp.eq.s32.totalorder %s33, 0
      %p161 = por %p159, %p160
      %p162 = scmp.ne.s32.totalorder %s150, %s151
      %p163 = scmp.eq.s32.totalorder %s34, 3
      %p164 = por %p162, %p163
      %p166 = scmp.ne.s32.totalorder %s151, %s165
      %p167 = scmp.eq.s32.totalorder %s34, 0
      %p168 = por %p166, %p167
      %s170 = sadd.s32 %s169, 1
      %p173 = scmp.eq.s32.totalorder %s28, 3
      %p174 = scmp.ne.s32.totalorder %s169, %s171
      %p175 = scmp.eq.s32.totalorder %s28, 0
      %p176 = por %p174, %p175
      %p177 = scmp.ne.s32.totalorder %s169, %s171
      %p178 = scmp.eq.s32.totalorder %s33, 3
      %p179 = por %p177, %p178
      %p180 = scmp.ne.s32.totalorder %s171, %s172
      %p181 = scmp.eq.s32.totalorder %s33, 0
      %p182 = por %p180, %p181
      %p183 = scmp.ne.s32.totalorder %s171, %s172
      %p184 = scmp.eq.s32.totalorder %s34, 3
      %p185 = por %p183, %p184
      %p187 = scmp.ne.s32.totalorder %s172, %s186
      %p188 = scmp.eq.s32.totalorder %s34, 0
      %p189 = por %p187, %p188
      %s191 = sadd.s32 %s190, 1
      %p194 = scmp.eq.s32.totalorder %s28, 3
      %p195 = scmp.ne.s32.totalorder %s190, %s192
      %p196 = scmp.eq.s32.totalorder %s28, 0
      %p197 = por %p195, %p196
      %p198 = scmp.ne.s32.totalorder %s190, %s192
      %p199 = scmp.eq.s32.totalorder %s33, 3
      %p200 = por %p198, %p199
      %p201 = scmp.ne.s32.totalorder %s192, %s193
      %p202 = scmp.eq.s32.totalorder %s33, 0
      %p203 = por %p201, %p202
      %p204 = scmp.ne.s32.totalorder %s192, %s193
      %p205 = scmp.eq.s32.totalorder %s34, 3
      %p206 = por %p204, %p205
      %p208 = scmp.ne.s32.totalorder %s193, %s207
      %p209 = scmp.eq.s32.totalorder %s34, 0
      %p210 = por %p208, %p209
      %s212 = sadd.s32 %s211, 1
      %p215 = scmp.eq.s32.totalorder %s28, 3
      %p216 = scmp.ne.s32.totalorder %s211, %s213
      %p217 = scmp.eq.s32.totalorder %s28, 0
      %p218 = por %p216, %p217
      %p219 = scmp.ne.s32.totalorder %s211, %s213
      %p220 = scmp.eq.s32.totalorder %s33, 3
      %p221 = por %p219, %p220
      %p222 = scmp.ne.s32.totalorder %s213, %s214
      %p223 = scmp.eq.s32.totalorder %s33, 0
      %p224 = por %p222, %p223
      %p225 = scmp.ne.s32.totalorder %s213, %s214
      %p226 = scmp.eq.s32.totalorder %s34, 3
      %p227 = por %p225, %p226
      %p229 = scmp.ne.s32.totalorder %s214, %s228
      %p230 = scmp.eq.s32.totalorder %s34, 0
      %p231 = por %p229, %p230
      %s232 = ssub.s32 %s35, %s47
      %s233 = ssub.s32 %s36, %s43
      %s234 = sor.u32 %s232, %s233
      %p235 = scmp.eq.s32.totalorder %s234, 0
      %s237 = sadd.s32 %s236, 1
      %s238 = scalar_select %p235, %s236, %s237
      %p241 = pneg %p235
      %p242 = scmp.eq.s32.totalorder %s28, 3
      %p243 = por %p241, %p242
      %p244 = scmp.ne.s32.totalorder %s236, %s239
      %p245 = scmp.eq.s32.totalorder %s28, 0
      %p246 = por %p244, %p245
      %p247 = scmp.ne.s32.totalorder %s236, %s239
      %p248 = scmp.eq.s32.totalorder %s33, 3
      %p249 = por %p247, %p248
      %p250 = scmp.ne.s32.totalorder %s239, %s240
      %p251 = scmp.eq.s32.totalorder %s33, 0
      %p252 = por %p250, %p251
      %p253 = scmp.ne.s32.totalorder %s239, %s240
      %p254 = scmp.eq.s32.totalorder %s34, 3
      %p255 = por %p253, %p254
      %p257 = scmp.ne.s32.totalorder %s240, %s256
      %p258 = scmp.eq.s32.totalorder %s34, 0
      %p259 = por %p257, %p258
      %s260 = smul.u32 %s35, 2
      %s261 = sadd.s32 %s260, %s36
      %s262 = smul.u32 %s47, 2
      %s263 = sadd.s32 %s262, %s43
      %s264 = ssub.s32 %s261, %s263
      %p265 = scmp.eq.s32.totalorder %s264, 0
      %s267 = sadd.s32 %s266, 1
      %s268 = scalar_select %p265, %s266, %s267
      %p271 = pneg %p265
      %p272 = scmp.eq.s32.totalorder %s28, 3
      %p273 = por %p271, %p272
      %p274 = scmp.ne.s32.totalorder %s266, %s269
      %p275 = scmp.eq.s32.totalorder %s28, 0
      %p276 = por %p274, %p275
      %p277 = scmp.ne.s32.totalorder %s266, %s269
      %p278 = scmp.eq.s32.totalorder %s33, 3
      %p279 = por %p277, %p278
      %p280 = scmp.ne.s32.totalorder %s269, %s270
      %p281 = scmp.eq.s32.totalorder %s33, 0
      %p282 = por %p280, %p281
      %p283 = scmp.ne.s32.totalorder %s269, %s270
      %p284 = scmp.eq.s32.totalorder %s34, 3
      %p285 = por %p283, %p284
      %p287 = scmp.ne.s32.totalorder %s270, %s286
      %p288 = scmp.eq.s32.totalorder %s34, 0
      %p289 = por %p287, %p288
      %p290 = scmp.le.s32.totalorder 1, %s28
      %p291 = scmp.lt.s32.totalorder %s28, 5
      %p292 = pnand %p290, %p291
      %p293 = pneg %p292
      // Predicated region
      $region9: #{tpu_custom_call.1} parent=5 // pred_check
        _
      $region10: #{tpu_custom_call.1} parent=5 // pred_check_branch
        %295 = sbr.rel (%p292) target = $region12
      $region11: #{tpu_custom_call.1} parent=5 // pred_region
        %s296 = ssub.s32 %s28, 1
        // Predicated region
        $region13: #{tpu_custom_call.1} parent=11 // pred_check
          %p297 = pneg %p119
        $region14: #{tpu_custom_call.1} parent=11 // pred_check_branch
          %299 = sbr.rel (%p297) target = $region16
        $region15: #{tpu_custom_call.1} parent=11 // pred_region
          _
        $region16: #{tpu_custom_call.1} parent=11 // pred_fallthru
          _
        // Predicated region
        $region17: #{tpu_custom_call.1} parent=11 // pred_check
          %p300 = pneg %p140
        $region18: #{tpu_custom_call.1} parent=11 // pred_check_branch
          %302 = sbr.rel (%p300) target = $region20
        $region19: #{tpu_custom_call.1} parent=11 // pred_region
          _
        $region20: #{tpu_custom_call.1} parent=11 // pred_fallthru
          _
        // Predicated region
        $region21: #{tpu_custom_call.1} parent=11 // pred_check
          %p303 = pneg %p161
        $region22: #{tpu_custom_call.1} parent=11 // pred_check_branch
          %305 = sbr.rel (%p303) target = $region24
        $region23: #{tpu_custom_call.1} parent=11 // pred_region
          _
        $region24: #{tpu_custom_call.1} parent=11 // pred_fallthru
          _
        // Predicated region
        $region25: #{tpu_custom_call.1} parent=11 // pred_check
          %p306 = pneg %p182
        $region26: #{tpu_custom_call.1} parent=11 // pred_check_branch
          %308 = sbr.rel (%p306) target = $region28
        $region27: #{tpu_custom_call.1} parent=11 // pred_region
          _
        $region28: #{tpu_custom_call.1} parent=11 // pred_fallthru
          _
        // Predicated region
        $region29: #{tpu_custom_call.1} parent=11 // pred_check
          %p309 = pneg %p203
        $region30: #{tpu_custom_call.1} parent=11 // pred_check_branch
          %311 = sbr.rel (%p309) target = $region32
        $region31: #{tpu_custom_call.1} parent=11 // pred_region
          %313 = vsyncadd [#allocation7], 0
          %s314 = sshll.u32 %s6, 4
          %s315 = int_to_ptr.hbm [resolvable:$true] %s314
          %s316 = sshll.u32 [#allocation8], 4
          %s317 = int_to_ptr.vmem [resolvable:$true] %s316
          %322 = dma.hbm_to_vmem [thread:$0]  %s315, 4096, %s317, [#allocation7], 64, 64, 4
        $region32: #{tpu_custom_call.1} parent=11 // pred_fallthru
          _
        // Predicated region
        $region33: #{tpu_custom_call.1} parent=11 // pred_check
          %p323 = pneg %p224
        $region34: #{tpu_custom_call.1} parent=11 // pred_check_branch
          %325 = sbr.rel (%p323) target = $region36
        $region35: #{tpu_custom_call.1} parent=11 // pred_region
          _
        $region36: #{tpu_custom_call.1} parent=11 // pred_fallthru
          _
      $region12: #{tpu_custom_call.1} parent=5 // pred_fallthru
        _
      %p326 = scmp.lt.s32.totalorder %s28, 4
      // Predicated region
      $region37: #{tpu_custom_call.1} parent=5 // pred_check
        %p327 = pneg %p326
      $region38: #{tpu_custom_call.1} parent=5 // pred_check_branch
        %329 = sbr.rel (%p327) target = $region40
      $region39: #{tpu_custom_call.1} parent=5 // pred_region
        // Predicated region
        $region41: #{tpu_custom_call.1} parent=39 // pred_check
          %p330 = pneg %p62
        $region42: #{tpu_custom_call.1} parent=39 // pred_check_branch
          %332 = sbr.rel (%p330) target = $region44
        $region43: #{tpu_custom_call.1} parent=39 // pred_region
          %s333 = sand.u32 %s52, 1
          %s334 = scalar_lea.sflag [#allocation4], %s333
          %s335 = sand.u32 %s52, 1
          %s336 = smul.addr %s335, 128
          %s337 = scalar_lea.vmem [#allocation3], %s336
          %s338 = smul.u32 8, %s36
          %340 = vsyncadd %s334, 0
          %s341 = smul.addr %s338, 2
          %s342 = smul.addr %s35, 32
          %s343 = sadd.s32 %s341, %s342
          %s344 = smul.addr %s343, 8
          %s345 = scalar_lea.hbm %s0, %s344
          %s346 = sshll.u32 %s345, 4
          %s347 = int_to_ptr.hbm [resolvable:$true] %s346
          %s348 = sshll.u32 %s337, 4
          %s349 = int_to_ptr.vmem [resolvable:$true] %s348
          %354 = dma.hbm_to_vmem [thread:$0]  %s347, 2048, %s349, %s334, 128, 128, 8
        $region44: #{tpu_custom_call.1} parent=39 // pred_fallthru
          _
        // Predicated region
        $region45: #{tpu_custom_call.1} parent=39 // pred_check
          %p355 = pneg %p92
        $region46: #{tpu_custom_call.1} parent=39 // pred_check_branch
          %357 = sbr.rel (%p355) target = $region48
        $region47: #{tpu_custom_call.1} parent=39 // pred_region
          %s358 = sand.u32 %s28, 1
          %s359 = scalar_lea.sflag [#allocation7], %s358
          %s360 = sand.u32 %s82, 1
          %s361 = smul.addr %s360, 32
          %s362 = scalar_lea.vmem [#allocation6], %s361
          %s363 = smul.u32 %s35, 2
          %s364 = sadd.s32 %s363, %s36
          %366 = vsyncadd %s359, 0
          %s367 = smul.addr %s364, 4
          %s368 = smul.addr %s367, 8
          %s369 = scalar_lea.hbm %s1, %s368
          %s370 = sshll.u32 %s369, 4
          %s371 = int_to_ptr.hbm [resolvable:$true] %s370
          %s372 = sshll.u32 %s362, 4
          %s373 = int_to_ptr.vmem [resolvable:$true] %s372
          %378 = dma.hbm_to_vmem [thread:$0]  %s371, 512, %s373, %s359, 128, 128, 8
        $region48: #{tpu_custom_call.1} parent=39 // pred_fallthru
          _
      $region40: #{tpu_custom_call.1} parent=5 // pred_fallthru
        _
      %p379 = scmp.le.s32.totalorder 1, %s28
      %p380 = scmp.lt.s32.totalorder %s28, 5
      %p381 = pnand %p379, %p380
      %p382 = pneg %p381
      // Predicated region
      $region49: #{tpu_custom_call.1} parent=5 // pred_check
        _
      $region50: #{tpu_custom_call.1} parent=5 // pred_check_branch
        %384 = sbr.rel (%p381) target = $region52
      $region51: #{tpu_custom_call.1} parent=5 // pred_region
        %s385 = ssub.s32 %s28, 1
        %s386 = sand.u32 %s55, 1
        %s387 = scalar_lea.sflag [#allocation4], %s386
        %s388 = sand.u32 %s55, 1
        %s389 = smul.addr %s388, 128
        %s390 = scalar_lea.vmem [#allocation3], %s389
        // Predicated region
        $region53: #{tpu_custom_call.1} parent=51 // pred_check
          %p391 = pneg %p68
        $region54: #{tpu_custom_call.1} parent=51 // pred_check_branch
          %393 = sbr.rel (%p391) target = $region56
        $region55: #{tpu_custom_call.1} parent=51 // pred_region
          %395 = dma.done %s387, 2048
        $region56: #{tpu_custom_call.1} parent=51 // pred_fallthru
          _
        %s396 = sand.u32 %s33, 1
        %s397 = scalar_lea.sflag [#allocation7], %s396
        %s398 = sand.u32 %s85, 1
        %s399 = smul.addr %s398, 32
        %s400 = scalar_lea.vmem [#allocation6], %s399
        // Predicated region
        $region57: #{tpu_custom_call.1} parent=51 // pred_check
          %p401 = pneg %p98
        $region58: #{tpu_custom_call.1} parent=51 // pred_check_branch
          %403 = sbr.rel (%p401) target = $region60
        $region59: #{tpu_custom_call.1} parent=51 // pred_region
          %405 = dma.done %s397, 512
        $region60: #{tpu_custom_call.1} parent=51 // pred_fallthru
          _
        // Predicated region
        $region61: #{tpu_custom_call.1} parent=51 // pred_check
          %p406 = pneg %p203
        $region62: #{tpu_custom_call.1} parent=51 // pred_check_branch
          %408 = sbr.rel (%p406) target = $region64
        $region63: #{tpu_custom_call.1} parent=51 // pred_region
          %410 = dma.done [#allocation7], 4096
        $region64: #{tpu_custom_call.1} parent=51 // pred_fallthru
          _
        %s411 = sand.u32 %s55, 1
        %s412 = scalar_lea.sflag [#allocation4], %s411
        %s413 = sand.u32 %s55, 1
        %s414 = smul.addr %s413, 128
        %s415 = scalar_lea.vmem [#allocation3], %s414
        %p416 = pneg %p68
        %p417 = pneg %p65
        %s418 = sand.u32 %s33, 1
        %s419 = scalar_lea.sflag [#allocation7], %s418
        %s420 = sand.u32 %s85, 1
        %s421 = smul.addr %s420, 32
        %s422 = scalar_lea.vmem [#allocation6], %s421
        %p423 = pneg %p98
        %p424 = pneg %p95
        %p425 = pneg %p119
        %p426 = pneg %p116
        %p427 = pneg %p140
        %p428 = pneg %p137
        %p429 = pneg %p161
        %p430 = pneg %p158
        %p431 = pneg %p182
        %p432 = pneg %p179
        %p433 = pneg %p203
        %p434 = pneg %p200
        %p435 = pneg %p224
        %p436 = pneg %p221
        %p437 = pneg %p252
        %p438 = pneg %p249
        %s439 = sand.u32 %s239, 1
        %s440 = scalar_lea.sflag [#allocation5], %s439
        %s441 = sand.u32 %s239, 1
        %s442 = smul.addr %s441, 64
        %s443 = scalar_lea.vmem [#allocation9], %s442
        %p444 = pneg %p282
        %p445 = pneg %p279
        %s446 = sand.u32 %s269, 1
        %s447 = scalar_lea.sflag [#allocation11], %s446
        %s448 = sand.u32 %s269, 1
        %s449 = smul.addr %s448, 2
        %s450 = scalar_lea.vmem [#allocation10], %s449
        %s451 = smul.u32 8, %s38
        %s452 = smul.u32 %s37, 2
        %s453 = sadd.s32 %s452, %s38
        %s454 = smul.u32 8, %s38
        %s455 = smul.u32 %s37, 2
        %s456 = sadd.s32 %s455, %s38
        %v457 = vld [vmem:[%s390] sm:$0xff]
        %v458 = vld [vmem:[%s390 + $0x8] sm:$0xff]
        %v459 = vld [vmem:[%s390 + $0x10] sm:$0xff]
        %v460 = vld [vmem:[%s390 + $0x18] sm:$0xff]
        %v461 = vld [vmem:[%s390 + $0x20] sm:$0xff]
        %v462 = vld [vmem:[%s390 + $0x28] sm:$0xff]
        %v463 = vld [vmem:[%s390 + $0x30] sm:$0xff]
        %v464 = vld [vmem:[%s390 + $0x38] sm:$0xff]
        %v465 = vld [vmem:[%s390 + $0x40] sm:$0xff]
        %v466 = vld [vmem:[%s390 + $0x48] sm:$0xff]
        %v467 = vld [vmem:[%s390 + $0x50] sm:$0xff]
        %v468 = vld [vmem:[%s390 + $0x58] sm:$0xff]
        %v469 = vld [vmem:[%s390 + $0x60] sm:$0xff]
        %v470 = vld [vmem:[%s390 + $0x68] sm:$0xff]
        %v471 = vld [vmem:[%s390 + $0x70] sm:$0xff]
        %v472 = vld [vmem:[%s390 + $0x78] sm:$0xff]
        %v473 = vpack.c.bf16 %v458, %v457
        %v474 = vpack.c.bf16 %v460, %v459
        %v475 = vpack.c.bf16 %v462, %v461
        %v476 = vpack.c.bf16 %v464, %v463
        %v477 = vpack.c.bf16 %v466, %v465
        %v478 = vpack.c.bf16 %v468, %v467
        %v479 = vpack.c.bf16 %v470, %v469
        %v480 = vpack.c.bf16 %v472, %v471
        %v481 = vld [vmem:[%s2] sm:$0xf]
        %v482 = vld [vmem:[%s2 + $0x4] sm:$0xf]
        %v483 = vld [vmem:[%s2 + $0x8] sm:$0xf]
        %v484 = vld [vmem:[%s2 + $0xc] sm:$0xf]
        %v485 = vld [vmem:[%s2 + $0x10] sm:$0xf]
        %v486 = vld [vmem:[%s2 + $0x14] sm:$0xf]
        %v487 = vld [vmem:[%s2 + $0x18] sm:$0xf]
        %v488 = vld [vmem:[%s2 + $0x1c] sm:$0xf]
        %v489 = vld [vmem:[%s2 + $0x20] sm:$0xf]
        %v490 = vld [vmem:[%s2 + $0x24] sm:$0xf]
        %v491 = vld [vmem:[%s2 + $0x28] sm:$0xf]
        %v492 = vld [vmem:[%s2 + $0x2c] sm:$0xf]
        %v493 = vld [vmem:[%s2 + $0x30] sm:$0xf]
        %v494 = vld [vmem:[%s2 + $0x34] sm:$0xf]
        %v495 = vld [vmem:[%s2 + $0x38] sm:$0xf]
        %v496 = vld [vmem:[%s2 + $0x3c] sm:$0xf]
        %v497 = vld [vmem:[%s3] sm:$0x1]
        %v499 = vperm.slane %v497, 0
        %v517 = vunpack.c.l.b16 %v481
        %v518 = vunpack.c.l.b16 %v482
        %v519 = vunpack.c.l.b16 %v483
        %v520 = vunpack.c.l.b16 %v484
        %v521 = vunpack.c.l.b16 %v485
        %v522 = vunpack.c.l.b16 %v486
        %v523 = vunpack.c.l.b16 %v487
        %v524 = vunpack.c.l.b16 %v488
        %v525 = vunpack.c.l.b16 %v489
        %v526 = vunpack.c.l.b16 %v490
        %v527 = vunpack.c.l.b16 %v491
        %v528 = vunpack.c.l.b16 %v492
        %v529 = vunpack.c.l.b16 %v493
        %v530 = vunpack.c.l.b16 %v494
        %v531 = vunpack.c.l.b16 %v495
        %v532 = vunpack.c.l.b16 %v496
        %v533 = vpack.c.b16 %v518, %v517
        %v534 = vpack.c.b16 %v520, %v519
        %v535 = vpack.c.b16 %v522, %v521
        %v536 = vpack.c.b16 %v524, %v523
        %v537 = vpack.c.b16 %v526, %v525
        %v538 = vpack.c.b16 %v528, %v527
        %v539 = vpack.c.b16 %v530, %v529
        %v540 = vpack.c.b16 %v532, %v531
        %549 = vmatpush.bf16.msra.mxu0 %v540
        %550 = vmatpush.bf16.msra.mxu0 %v539
        %551 = vmatpush.bf16.msra.mxu0 %v538
        %552 = vmatpush.bf16.msra.mxu0 %v537
        %553 = vmatpush.bf16.msra.mxu0 %v536
        %554 = vmatpush.bf16.msra.mxu0 %v535
        %555 = vmatpush.bf16.msra.mxu0 %v534
        %556 = vmatpush.bf16.msra.mxu0 %v533
        %557 = vmatmul.bf16.gmra.mxu0 %v473
        %v558 = vpop.f32.mrf.mxu0
        %v559 = vadd.f32 %v499, %v558
        %v560 = vpop.f32.mrf.mxu0
        %v561 = vadd.f32 %v499, %v560
        %562 = vmatmul.bf16.gmra.mxu0 %v474
        %v563 = vpop.f32.mrf.mxu0
        %v564 = vadd.f32 %v499, %v563
        %v565 = vpop.f32.mrf.mxu0
        %v566 = vadd.f32 %v499, %v565
        %567 = vmatmul.bf16.gmra.mxu0 %v475
        %v568 = vpop.f32.mrf.mxu0
        %v569 = vadd.f32 %v499, %v568
        %v570 = vpop.f32.mrf.mxu0
        %v571 = vadd.f32 %v499, %v570
        %572 = vmatmul.bf16.gmra.mxu0 %v476
        %v573 = vpop.f32.mrf.mxu0
        %v574 = vadd.f32 %v499, %v573
        %v575 = vpop.f32.mrf.mxu0
        %v576 = vadd.f32 %v499, %v575
        %577 = vmatmul.bf16.gmra.mxu0 %v477
        %v578 = vpop.f32.mrf.mxu0
        %v579 = vadd.f32 %v499, %v578
        %v580 = vpop.f32.mrf.mxu0
        %v581 = vadd.f32 %v499, %v580
        %582 = vmatmul.bf16.gmra.mxu0 %v478
        %v583 = vpop.f32.mrf.mxu0
        %v584 = vadd.f32 %v499, %v583
        %v585 = vpop.f32.mrf.mxu0
        %v586 = vadd.f32 %v499, %v585
        %587 = vmatmul.bf16.gmra.mxu0 %v479
        %v588 = vpop.f32.mrf.mxu0
        %v589 = vadd.f32 %v499, %v588
        %v590 = vpop.f32.mrf.mxu0
        %v591 = vadd.f32 %v499, %v590
        %592 = vmatmul.bf16.gmra.mxu0 %v480
        %v593 = vpop.f32.mrf.mxu0
        %v594 = vadd.f32 %v499, %v593
        %v595 = vpop.f32.mrf.mxu0
        %v596 = vadd.f32 %v499, %v595
        %597 = vdwg.mxu0
        %v598 = vld [vmem:[%s400] sm:$0xff]
        %v599 = vld [vmem:[%s400 + $0x8] sm:$0xff]
        %v600 = vld [vmem:[%s400 + $0x10] sm:$0xff]
        %v601 = vld [vmem:[%s400 + $0x18] sm:$0xff]
        %v602 = vpack.c.bf16 %v599, %v598
        %v603 = vpack.c.bf16 %v601, %v600
        %604 = vmatpush.bf16.msra.mxu0 %v540
        %605 = vmatpush.bf16.msra.mxu0 %v539
        %606 = vmatpush.bf16.msra.mxu0 %v538
        %607 = vmatpush.bf16.msra.mxu0 %v537
        %608 = vmatpush.bf16.msra.mxu0 %v536
        %609 = vmatpush.bf16.msra.mxu0 %v535
        %610 = vmatpush.bf16.msra.mxu0 %v534
        %611 = vmatpush.bf16.msra.mxu0 %v533
        %612 = vmatmul.bf16.gmra.mxu0 %v602
        %v613 = vpop.f32.mrf.mxu0
        %v614 = vadd.f32 %v499, %v613
        %v615 = vpop.f32.mrf.mxu0
        %v616 = vadd.f32 %v499, %v615
        %617 = vmatmul.bf16.gmra.mxu0 %v603
        %v618 = vpop.f32.mrf.mxu0
        %v619 = vadd.f32 %v499, %v618
        %v620 = vpop.f32.mrf.mxu0
        %v621 = vadd.f32 %v499, %v620
        %622 = vdwg.mxu0
        %p623 = scmp.eq.s32.totalorder %s38, 0
        %s624 = scalar_select %p623, 0.0, 1.0
        %v625 = vstv %s624
        %v626 = vmul.f32 %v614, %v625
        %v627 = vmul.f32 %v616, %v625
        %p628 = scmp.eq.s32.totalorder %s38, 1
        %s629 = scalar_select %p628, 0.0, 1.0
        %v630 = vstv %s629
        %v631 = vmul.f32 %v619, %v630
        %v632 = vmul.f32 %v621, %v630
        %633 = vst [vmem:[#allocation2 + $0x7] sm:$0x1] 0.0
        %634 = vst [vmem:[#allocation2 + $0x27] sm:$0x1] 0.0
        %635 = vst [vmem:[#allocation2 + $0x47] sm:$0x1] 0.0
        %636 = vst [vmem:[#allocation2 + $0x67] sm:$0x1] 0.0
        %637 = vst [vmem:[#allocation2 + $0x87] sm:$0x1] 0.0
        %638 = vst [vmem:[#allocation2 + $0xa7] sm:$0x1] 0.0
        %639 = vst [vmem:[#allocation2 + $0xc7] sm:$0x1] 0.0
        %640 = vst [vmem:[#allocation2 + $0xe7] sm:$0x1] 0.0
        %641 = vst [vmem:[#allocation2 + $0x107] sm:$0x1] 0.0
        %642 = vst [vmem:[#allocation2 + $0x127] sm:$0x1] 0.0
        %643 = vst [vmem:[#allocation2 + $0x18] sm:$0x1] 0.0
        %644 = vst [vmem:[#allocation2 + $0x38] sm:$0x1] 0.0
        %645 = vst [vmem:[#allocation2 + $0x58] sm:$0x1] 0.0
        %646 = vst [vmem:[#allocation2 + $0x78] sm:$0x1] 0.0
        %647 = vst [vmem:[#allocation2 + $0x98] sm:$0x1] 0.0
        %648 = vst [vmem:[#allocation2 + $0xb8] sm:$0x1] 0.0
        %649 = vst [vmem:[#allocation2 + $0xd8] sm:$0x1] 0.0
        %650 = vst [vmem:[#allocation2 + $0xf8] sm:$0x1] 0.0
        %651 = vst [vmem:[#allocation2 + $0x118] sm:$0x1] 0.0
        %652 = vst [vmem:[#allocation2 + $0x138] sm:$0x1] 0.0
        %653 = vst [vmem:[#allocation2 + $0x8] sm:$0xff] %v626
        %654 = vst [vmem:[#allocation2 + $0x10] sm:$0xff] %v627
        %s655 = scalar_lea.vmem [#allocation2], 288
        %656 = vst [vmem:[%s655 + $0x8] sm:$0xff] %v631
        %657 = vst [vmem:[%s655 + $0x10] sm:$0xff] %v632
        %s658 = scalar_lea.vmem [#allocation2], 32
        %659 = vst [vmem:[%s658 + $0x8] sm:$0xff] %v559
        %660 = vst [vmem:[%s658 + $0x10] sm:$0xff] %v561
        %661 = vst [vmem:[%s658 + $0x28] sm:$0xff] %v564
        %662 = vst [vmem:[%s658 + $0x30] sm:$0xff] %v566
        %663 = vst [vmem:[%s658 + $0x48] sm:$0xff] %v569
        %664 = vst [vmem:[%s658 + $0x50] sm:$0xff] %v571
        %665 = vst [vmem:[%s658 + $0x68] sm:$0xff] %v574
        %666 = vst [vmem:[%s658 + $0x70] sm:$0xff] %v576
        %667 = vst [vmem:[%s658 + $0x88] sm:$0xff] %v579
        %668 = vst [vmem:[%s658 + $0x90] sm:$0xff] %v581
        %669 = vst [vmem:[%s658 + $0xa8] sm:$0xff] %v584
        %670 = vst [vmem:[%s658 + $0xb0] sm:$0xff] %v586
        %671 = vst [vmem:[%s658 + $0xc8] sm:$0xff] %v589
        %672 = vst [vmem:[%s658 + $0xd0] sm:$0xff] %v591
        %673 = vst [vmem:[%s658 + $0xe8] sm:$0xff] %v594
        %674 = vst [vmem:[%s658 + $0xf0] sm:$0xff] %v596
        %v675 = vld [vmem:[%s7] sm:$0x1]
        %v677 = vperm.slane %v675, 0
        %v679 = vadd.f32 %v457, %v677
        %v680 = vadd.f32 %v458, %v677
        %v681 = vadd.f32 %v459, %v677
        %v682 = vadd.f32 %v460, %v677
        %v683 = vadd.f32 %v461, %v677
        %v684 = vadd.f32 %v462, %v677
        %v685 = vadd.f32 %v463, %v677
        %v686 = vadd.f32 %v464, %v677
        %v687 = vadd.f32 %v465, %v677
        %v688 = vadd.f32 %v466, %v677
        %v689 = vadd.f32 %v467, %v677
        %v690 = vadd.f32 %v468, %v677
        %v691 = vadd.f32 %v469, %v677
        %v692 = vadd.f32 %v470, %v677
        %v693 = vadd.f32 %v471, %v677
        %v694 = vadd.f32 %v472, %v677
        %v695 = vld [vmem:[%s4] sm:$0xff]
        %v696 = vld [vmem:[%s4 + $0x8] sm:$0x1]
        %v697 = vld [vmem:[%s5] sm:$0x1]
        %v698 = vld [vmem:[%s658 + $0x8] sm:$0xff]
        %v699 = vld [vmem:[%s658 + $0x10] sm:$0xff]
        %v700 = vld [vmem:[%s658 + $0x28] sm:$0xff]
        %v701 = vld [vmem:[%s658 + $0x30] sm:$0xff]
        %v702 = vld [vmem:[%s658 + $0x48] sm:$0xff]
        %v703 = vld [vmem:[%s658 + $0x50] sm:$0xff]
        %v704 = vld [vmem:[%s658 + $0x68] sm:$0xff]
        %v705 = vld [vmem:[%s658 + $0x70] sm:$0xff]
        %v706 = vld [vmem:[%s658 + $0x88] sm:$0xff]
        %v707 = vld [vmem:[%s658 + $0x90] sm:$0xff]
        %v708 = vld [vmem:[%s658 + $0xa8] sm:$0xff]
        %v709 = vld [vmem:[%s658 + $0xb0] sm:$0xff]
        %v710 = vld [vmem:[%s658 + $0xc8] sm:$0xff]
        %v711 = vld [vmem:[%s658 + $0xd0] sm:$0xff]
        %v712 = vld [vmem:[%s658 + $0xe8] sm:$0xff]
        %v713 = vld [vmem:[%s658 + $0xf0] sm:$0xff]
        %v714 = vperm.slane %v695, 4
        %v715 = vmul.f32 %v698, %v714
        %v716 = vmul.f32 %v699, %v714
        %v717 = vmul.f32 %v700, %v714
        %v718 = vmul.f32 %v701, %v714
        %v719 = vmul.f32 %v702, %v714
        %v720 = vmul.f32 %v703, %v714
        %v721 = vmul.f32 %v704, %v714
        %v722 = vmul.f32 %v705, %v714
        %v723 = vmul.f32 %v706, %v714
        %v724 = vmul.f32 %v707, %v714
        %v725 = vmul.f32 %v708, %v714
        %v726 = vmul.f32 %v709, %v714
        %v727 = vmul.f32 %v710, %v714
        %v728 = vmul.f32 %v711, %v714
        %v729 = vmul.f32 %v712, %v714
        %v730 = vmul.f32 %v713, %v714
        %v732 = vperm.slane %v697, 0
        %v734 = vadd.f32 %v715, %v732
        %v735 = vadd.f32 %v716, %v732
        %v736 = vadd.f32 %v717, %v732
        %v737 = vadd.f32 %v718, %v732
        %v738 = vadd.f32 %v719, %v732
        %v739 = vadd.f32 %v720, %v732
        %v740 = vadd.f32 %v721, %v732
        %v741 = vadd.f32 %v722, %v732
        %v742 = vadd.f32 %v723, %v732
        %v743 = vadd.f32 %v724, %v732
        %v744 = vadd.f32 %v725, %v732
        %v745 = vadd.f32 %v726, %v732
        %v746 = vadd.f32 %v727, %v732
        %v747 = vadd.f32 %v728, %v732
        %v748 = vadd.f32 %v729, %v732
        %v749 = vadd.f32 %v730, %v732
        %v750 = vld [vmem:[#allocation2 + $0x7] sm:$0xff]
        %v751 = vld [vmem:[#allocation2 + $0xf] sm:$0xff]
        %v752 = vld [vmem:[#allocation2 + $0x27] sm:$0xff]
        %v753 = vld [vmem:[#allocation2 + $0x2f] sm:$0xff]
        %v754 = vld [vmem:[#allocation2 + $0x47] sm:$0xff]
        %v755 = vld [vmem:[#allocation2 + $0x4f] sm:$0xff]
        %v756 = vld [vmem:[#allocation2 + $0x67] sm:$0xff]
        %v757 = vld [vmem:[#allocation2 + $0x6f] sm:$0xff]
        %v758 = vld [vmem:[#allocation2 + $0x87] sm:$0xff]
        %v759 = vld [vmem:[#allocation2 + $0x8f] sm:$0xff]
        %v760 = vld [vmem:[#allocation2 + $0xa7] sm:$0xff]
        %v761 = vld [vmem:[#allocation2 + $0xaf] sm:$0xff]
        %v762 = vld [vmem:[#allocation2 + $0xc7] sm:$0xff]
        %v763 = vld [vmem:[#allocation2 + $0xcf] sm:$0xff]
        %v764 = vld [vmem:[#allocation2 + $0xe7] sm:$0xff]
        %v765 = vld [vmem:[#allocation2 + $0xef] sm:$0xff]
        %v766 = vperm.slane %v695, 0
        %v767 = vmul.f32 %v750, %v766
        %v768 = vmul.f32 %v751, %v766
        %v769 = vmul.f32 %v752, %v766
        %v770 = vmul.f32 %v753, %v766
        %v771 = vmul.f32 %v754, %v766
        %v772 = vmul.f32 %v755, %v766
        %v773 = vmul.f32 %v756, %v766
        %v774 = vmul.f32 %v757, %v766
        %v775 = vmul.f32 %v758, %v766
        %v776 = vmul.f32 %v759, %v766
        %v777 = vmul.f32 %v760, %v766
        %v778 = vmul.f32 %v761, %v766
        %v779 = vmul.f32 %v762, %v766
        %v780 = vmul.f32 %v763, %v766
        %v781 = vmul.f32 %v764, %v766
        %v782 = vmul.f32 %v765, %v766
        %v783 = vadd.f32 %v734, %v767
        %v784 = vadd.f32 %v735, %v768
        %v785 = vadd.f32 %v736, %v769
        %v786 = vadd.f32 %v737, %v770
        %v787 = vadd.f32 %v738, %v771
        %v788 = vadd.f32 %v739, %v772
        %v789 = vadd.f32 %v740, %v773
        %v790 = vadd.f32 %v741, %v774
        %v791 = vadd.f32 %v742, %v775
        %v792 = vadd.f32 %v743, %v776
        %v793 = vadd.f32 %v744, %v777
        %v794 = vadd.f32 %v745, %v778
        %v795 = vadd.f32 %v746, %v779
        %v796 = vadd.f32 %v747, %v780
        %v797 = vadd.f32 %v748, %v781
        %v798 = vadd.f32 %v749, %v782
        %v799 = vld [vmem:[#allocation2 + $0x8] sm:$0xff]
        %v800 = vld [vmem:[#allocation2 + $0x10] sm:$0xff]
        %v801 = vld [vmem:[#allocation2 + $0x28] sm:$0xff]
        %v802 = vld [vmem:[#allocation2 + $0x30] sm:$0xff]
        %v803 = vld [vmem:[#allocation2 + $0x48] sm:$0xff]
        %v804 = vld [vmem:[#allocation2 + $0x50] sm:$0xff]
        %v805 = vld [vmem:[#allocation2 + $0x68] sm:$0xff]
        %v806 = vld [vmem:[#allocation2 + $0x70] sm:$0xff]
        %v807 = vld [vmem:[#allocation2 + $0x88] sm:$0xff]
        %v808 = vld [vmem:[#allocation2 + $0x90] sm:$0xff]
        %v809 = vld [vmem:[#allocation2 + $0xa8] sm:$0xff]
        %v810 = vld [vmem:[#allocation2 + $0xb0] sm:$0xff]
        %v811 = vld [vmem:[#allocation2 + $0xc8] sm:$0xff]
        %v812 = vld [vmem:[#allocation2 + $0xd0] sm:$0xff]
        %v813 = vld [vmem:[#allocation2 + $0xe8] sm:$0xff]
        %v814 = vld [vmem:[#allocation2 + $0xf0] sm:$0xff]
        %v815 = vperm.slane %v695, 1
        %v816 = vmul.f32 %v799, %v815
        %v817 = vmul.f32 %v800, %v815
        %v818 = vmul.f32 %v801, %v815
        %v819 = vmul.f32 %v802, %v815
        %v820 = vmul.f32 %v803, %v815
        %v821 = vmul.f32 %v804, %v815
        %v822 = vmul.f32 %v805, %v815
        %v823 = vmul.f32 %v806, %v815
        %v824 = vmul.f32 %v807, %v815
        %v825 = vmul.f32 %v808, %v815
        %v826 = vmul.f32 %v809, %v815
        %v827 = vmul.f32 %v810, %v815
        %v828 = vmul.f32 %v811, %v815
        %v829 = vmul.f32 %v812, %v815
        %v830 = vmul.f32 %v813, %v815
        %v831 = vmul.f32 %v814, %v815
        %v832 = vadd.f32 %v783, %v816
        %v833 = vadd.f32 %v784, %v817
        %v834 = vadd.f32 %v785, %v818
        %v835 = vadd.f32 %v786, %v819
        %v836 = vadd.f32 %v787, %v820
        %v837 = vadd.f32 %v788, %v821
        %v838 = vadd.f32 %v789, %v822
        %v839 = vadd.f32 %v790, %v823
        %v840 = vadd.f32 %v791, %v824
        %v841 = vadd.f32 %v792, %v825
        %v842 = vadd.f32 %v793, %v826
        %v843 = vadd.f32 %v794, %v827
        %v844 = vadd.f32 %v795, %v828
        %v845 = vadd.f32 %v796, %v829
        %v846 = vadd.f32 %v797, %v830
        %v847 = vadd.f32 %v798, %v831
        %v848 = vld [vmem:[#allocation2 + $0x9] sm:$0xff]
        %v849 = vld [vmem:[#allocation2 + $0x11] sm:$0xff]
        %v850 = vld [vmem:[#allocation2 + $0x29] sm:$0xff]
        %v851 = vld [vmem:[#allocation2 + $0x31] sm:$0xff]
        %v852 = vld [vmem:[#allocation2 + $0x49] sm:$0xff]
        %v853 = vld [vmem:[#allocation2 + $0x51] sm:$0xff]
        %v854 = vld [vmem:[#allocation2 + $0x69] sm:$0xff]
        %v855 = vld [vmem:[#allocation2 + $0x71] sm:$0xff]
        %v856 = vld [vmem:[#allocation2 + $0x89] sm:$0xff]
        %v857 = vld [vmem:[#allocation2 + $0x91] sm:$0xff]
        %v858 = vld [vmem:[#allocation2 + $0xa9] sm:$0xff]
        %v859 = vld [vmem:[#allocation2 + $0xb1] sm:$0xff]
        %v860 = vld [vmem:[#allocation2 + $0xc9] sm:$0xff]
        %v861 = vld [vmem:[#allocation2 + $0xd1] sm:$0xff]
        %v862 = vld [vmem:[#allocation2 + $0xe9] sm:$0xff]
        %v863 = vld [vmem:[#allocation2 + $0xf1] sm:$0xff]
        %v864 = vperm.slane %v695, 2
        %v865 = vmul.f32 %v848, %v864
        %v866 = vmul.f32 %v849, %v864
        %v867 = vmul.f32 %v850, %v864
        %v868 = vmul.f32 %v851, %v864
        %v869 = vmul.f32 %v852, %v864
        %v870 = vmul.f32 %v853, %v864
        %v871 = vmul.f32 %v854, %v864
        %v872 = vmul.f32 %v855, %v864
        %v873 = vmul.f32 %v856, %v864
        %v874 = vmul.f32 %v857, %v864
        %v875 = vmul.f32 %v858, %v864
        %v876 = vmul.f32 %v859, %v864
        %v877 = vmul.f32 %v860, %v864
        %v878 = vmul.f32 %v861, %v864
        %v879 = vmul.f32 %v862, %v864
        %v880 = vmul.f32 %v863, %v864
        %v881 = vadd.f32 %v832, %v865
        %v882 = vadd.f32 %v833, %v866
        %v883 = vadd.f32 %v834, %v867
        %v884 = vadd.f32 %v835, %v868
        %v885 = vadd.f32 %v836, %v869
        %v886 = vadd.f32 %v837, %v870
        %v887 = vadd.f32 %v838, %v871
        %v888 = vadd.f32 %v839, %v872
        %v889 = vadd.f32 %v840, %v873
        %v890 = vadd.f32 %v841, %v874
        %v891 = vadd.f32 %v842, %v875
        %v892 = vadd.f32 %v843, %v876
        %v893 = vadd.f32 %v844, %v877
        %v894 = vadd.f32 %v845, %v878
        %v895 = vadd.f32 %v846, %v879
        %v896 = vadd.f32 %v847, %v880
        %v897 = vld [vmem:[%s658 + $0x7] sm:$0xff]
        %v898 = vld [vmem:[%s658 + $0xf] sm:$0xff]
        %v899 = vld [vmem:[%s658 + $0x27] sm:$0xff]
        %v900 = vld [vmem:[%s658 + $0x2f] sm:$0xff]
        %v901 = vld [vmem:[%s658 + $0x47] sm:$0xff]
        %v902 = vld [vmem:[%s658 + $0x4f] sm:$0xff]
        %v903 = vld [vmem:[%s658 + $0x67] sm:$0xff]
        %v904 = vld [vmem:[%s658 + $0x6f] sm:$0xff]
        %v905 = vld [vmem:[%s658 + $0x87] sm:$0xff]
        %v906 = vld [vmem:[%s658 + $0x8f] sm:$0xff]
        %v907 = vld [vmem:[%s658 + $0xa7] sm:$0xff]
        %v908 = vld [vmem:[%s658 + $0xaf] sm:$0xff]
        %v909 = vld [vmem:[%s658 + $0xc7] sm:$0xff]
        %v910 = vld [vmem:[%s658 + $0xcf] sm:$0xff]
        %v911 = vld [vmem:[%s658 + $0xe7] sm:$0xff]
        %v912 = vld [vmem:[%s658 + $0xef] sm:$0xff]
        %v913 = vperm.slane %v695, 3
        %v914 = vmul.f32 %v897, %v913
        %v915 = vmul.f32 %v898, %v913
        %v916 = vmul.f32 %v899, %v913
        %v917 = vmul.f32 %v900, %v913
        %v918 = vmul.f32 %v901, %v913
        %v919 = vmul.f32 %v902, %v913
        %v920 = vmul.f32 %v903, %v913
        %v921 = vmul.f32 %v904, %v913
        %v922 = vmul.f32 %v905, %v913
        %v923 = vmul.f32 %v906, %v913
        %v924 = vmul.f32 %v907, %v913
        %v925 = vmul.f32 %v908, %v913
        %v926 = vmul.f32 %v909, %v913
        %v927 = vmul.f32 %v910, %v913
        %v928 = vmul.f32 %v911, %v913
        %v929 = vmul.f32 %v912, %v913
        %v930 = vadd.f32 %v881, %v914
        %v931 = vadd.f32 %v882, %v915
        %v932 = vadd.f32 %v883, %v916
        %v933 = vadd.f32 %v884, %v917
        %v934 = vadd.f32 %v885, %v918
        %v935 = vadd.f32 %v886, %v919
        %v936 = vadd.f32 %v887, %v920
        %v937 = vadd.f32 %v888, %v921
        %v938 = vadd.f32 %v889, %v922
        %v939 = vadd.f32 %v890, %v923
        %v940 = vadd.f32 %v891, %v924
        %v941 = vadd.f32 %v892, %v925
        %v942 = vadd.f32 %v893, %v926
        %v943 = vadd.f32 %v894, %v927
        %v944 = vadd.f32 %v895, %v928
        %v945 = vadd.f32 %v896, %v929
        %v946 = vld [vmem:[%s658 + $0x9] sm:$0xff]
        %v947 = vld [vmem:[%s658 + $0x11] sm:$0xff]
        %v948 = vld [vmem:[%s658 + $0x29] sm:$0xff]
        %v949 = vld [vmem:[%s658 + $0x31] sm:$0xff]
        %v950 = vld [vmem:[%s658 + $0x49] sm:$0xff]
        %v951 = vld [vmem:[%s658 + $0x51] sm:$0xff]
        %v952 = vld [vmem:[%s658 + $0x69] sm:$0xff]
        %v953 = vld [vmem:[%s658 + $0x71] sm:$0xff]
        %v954 = vld [vmem:[%s658 + $0x89] sm:$0xff]
        %v955 = vld [vmem:[%s658 + $0x91] sm:$0xff]
        %v956 = vld [vmem:[%s658 + $0xa9] sm:$0xff]
        %v957 = vld [vmem:[%s658 + $0xb1] sm:$0xff]
        %v958 = vld [vmem:[%s658 + $0xc9] sm:$0xff]
        %v959 = vld [vmem:[%s658 + $0xd1] sm:$0xff]
        %v960 = vld [vmem:[%s658 + $0xe9] sm:$0xff]
        %v961 = vld [vmem:[%s658 + $0xf1] sm:$0xff]
        %v962 = vperm.slane %v695, 5
        %v963 = vmul.f32 %v946, %v962
        %v964 = vmul.f32 %v947, %v962
        %v965 = vmul.f32 %v948, %v962
        %v966 = vmul.f32 %v949, %v962
        %v967 = vmul.f32 %v950, %v962
        %v968 = vmul.f32 %v951, %v962
        %v969 = vmul.f32 %v952, %v962
        %v970 = vmul.f32 %v953, %v962
        %v971 = vmul.f32 %v954, %v962
        %v972 = vmul.f32 %v955, %v962
        %v973 = vmul.f32 %v956, %v962
        %v974 = vmul.f32 %v957, %v962
        %v975 = vmul.f32 %v958, %v962
        %v976 = vmul.f32 %v959, %v962
        %v977 = vmul.f32 %v960, %v962
        %v978 = vmul.f32 %v961, %v962
        %v979 = vadd.f32 %v930, %v963
        %v980 = vadd.f32 %v931, %v964
        %v981 = vadd.f32 %v932, %v965
        %v982 = vadd.f32 %v933, %v966
        %v983 = vadd.f32 %v934, %v967
        %v984 = vadd.f32 %v935, %v968
        %v985 = vadd.f32 %v936, %v969
        %v986 = vadd.f32 %v937, %v970
        %v987 = vadd.f32 %v938, %v971
        %v988 = vadd.f32 %v939, %v972
        %v989 = vadd.f32 %v940, %v973
        %v990 = vadd.f32 %v941, %v974
        %v991 = vadd.f32 %v942, %v975
        %v992 = vadd.f32 %v943, %v976
        %v993 = vadd.f32 %v944, %v977
        %v994 = vadd.f32 %v945, %v978
        %s995 = scalar_lea.vmem [#allocation2], 64
        %v996 = vld [vmem:[%s995 + $0x7] sm:$0xff]
        %v997 = vld [vmem:[%s995 + $0xf] sm:$0xff]
        %v998 = vld [vmem:[%s995 + $0x27] sm:$0xff]
        %v999 = vld [vmem:[%s995 + $0x2f] sm:$0xff]
        %v1000 = vld [vmem:[%s995 + $0x47] sm:$0xff]
        %v1001 = vld [vmem:[%s995 + $0x4f] sm:$0xff]
        %v1002 = vld [vmem:[%s995 + $0x67] sm:$0xff]
        %v1003 = vld [vmem:[%s995 + $0x6f] sm:$0xff]
        %v1004 = vld [vmem:[%s995 + $0x87] sm:$0xff]
        %v1005 = vld [vmem:[%s995 + $0x8f] sm:$0xff]
        %v1006 = vld [vmem:[%s995 + $0xa7] sm:$0xff]
        %v1007 = vld [vmem:[%s995 + $0xaf] sm:$0xff]
        %v1008 = vld [vmem:[%s995 + $0xc7] sm:$0xff]
        %v1009 = vld [vmem:[%s995 + $0xcf] sm:$0xff]
        %v1010 = vld [vmem:[%s995 + $0xe7] sm:$0xff]
        %v1011 = vld [vmem:[%s995 + $0xef] sm:$0xff]
        %v1012 = vperm.slane %v695, 6
        %v1013 = vmul.f32 %v996, %v1012
        %v1014 = vmul.f32 %v997, %v1012
        %v1015 = vmul.f32 %v998, %v1012
        %v1016 = vmul.f32 %v999, %v1012
        %v1017 = vmul.f32 %v1000, %v1012
        %v1018 = vmul.f32 %v1001, %v1012
        %v1019 = vmul.f32 %v1002, %v1012
        %v1020 = vmul.f32 %v1003, %v1012
        %v1021 = vmul.f32 %v1004, %v1012
        %v1022 = vmul.f32 %v1005, %v1012
        %v1023 = vmul.f32 %v1006, %v1012
        %v1024 = vmul.f32 %v1007, %v1012
        %v1025 = vmul.f32 %v1008, %v1012
        %v1026 = vmul.f32 %v1009, %v1012
        %v1027 = vmul.f32 %v1010, %v1012
        %v1028 = vmul.f32 %v1011, %v1012
        %v1029 = vadd.f32 %v979, %v1013
        %v1030 = vadd.f32 %v980, %v1014
        %v1031 = vadd.f32 %v981, %v1015
        %v1032 = vadd.f32 %v982, %v1016
        %v1033 = vadd.f32 %v983, %v1017
        %v1034 = vadd.f32 %v984, %v1018
        %v1035 = vadd.f32 %v985, %v1019
        %v1036 = vadd.f32 %v986, %v1020
        %v1037 = vadd.f32 %v987, %v1021
        %v1038 = vadd.f32 %v988, %v1022
        %v1039 = vadd.f32 %v989, %v1023
        %v1040 = vadd.f32 %v990, %v1024
        %v1041 = vadd.f32 %v991, %v1025
        %v1042 = vadd.f32 %v992, %v1026
        %v1043 = vadd.f32 %v993, %v1027
        %v1044 = vadd.f32 %v994, %v1028
        %v1045 = vld [vmem:[%s995 + $0x8] sm:$0xff]
        %v1046 = vld [vmem:[%s995 + $0x10] sm:$0xff]
        %v1047 = vld [vmem:[%s995 + $0x28] sm:$0xff]
        %v1048 = vld [vmem:[%s995 + $0x30] sm:$0xff]
        %v1049 = vld [vmem:[%s995 + $0x48] sm:$0xff]
        %v1050 = vld [vmem:[%s995 + $0x50] sm:$0xff]
        %v1051 = vld [vmem:[%s995 + $0x68] sm:$0xff]
        %v1052 = vld [vmem:[%s995 + $0x70] sm:$0xff]
        %v1053 = vld [vmem:[%s995 + $0x88] sm:$0xff]
        %v1054 = vld [vmem:[%s995 + $0x90] sm:$0xff]
        %v1055 = vld [vmem:[%s995 + $0xa8] sm:$0xff]
        %v1056 = vld [vmem:[%s995 + $0xb0] sm:$0xff]
        %v1057 = vld [vmem:[%s995 + $0xc8] sm:$0xff]
        %v1058 = vld [vmem:[%s995 + $0xd0] sm:$0xff]
        %v1059 = vld [vmem:[%s995 + $0xe8] sm:$0xff]
        %v1060 = vld [vmem:[%s995 + $0xf0] sm:$0xff]
        %v1061 = vperm.slane %v695, 7
        %v1062 = vmul.f32 %v1045, %v1061
        %v1063 = vmul.f32 %v1046, %v1061
        %v1064 = vmul.f32 %v1047, %v1061
        %v1065 = vmul.f32 %v1048, %v1061
        %v1066 = vmul.f32 %v1049, %v1061
        %v1067 = vmul.f32 %v1050, %v1061
        %v1068 = vmul.f32 %v1051, %v1061
        %v1069 = vmul.f32 %v1052, %v1061
        %v1070 = vmul.f32 %v1053, %v1061
        %v1071 = vmul.f32 %v1054, %v1061
        %v1072 = vmul.f32 %v1055, %v1061
        %v1073 = vmul.f32 %v1056, %v1061
        %v1074 = vmul.f32 %v1057, %v1061
        %v1075 = vmul.f32 %v1058, %v1061
        %v1076 = vmul.f32 %v1059, %v1061
        %v1077 = vmul.f32 %v1060, %v1061
        %v1078 = vadd.f32 %v1029, %v1062
        %v1079 = vadd.f32 %v1030, %v1063
        %v1080 = vadd.f32 %v1031, %v1064
        %v1081 = vadd.f32 %v1032, %v1065
        %v1082 = vadd.f32 %v1033, %v1066
        %v1083 = vadd.f32 %v1034, %v1067
        %v1084 = vadd.f32 %v1035, %v1068
        %v1085 = vadd.f32 %v1036, %v1069
        %v1086 = vadd.f32 %v1037, %v1070
        %v1087 = vadd.f32 %v1038, %v1071
        %v1088 = vadd.f32 %v1039, %v1072
        %v1089 = vadd.f32 %v1040, %v1073
        %v1090 = vadd.f32 %v1041, %v1074
        %v1091 = vadd.f32 %v1042, %v1075
        %v1092 = vadd.f32 %v1043, %v1076
        %v1093 = vadd.f32 %v1044, %v1077
        %v1094 = vld [vmem:[%s995 + $0x9] sm:$0xff]
        %v1095 = vld [vmem:[%s995 + $0x11] sm:$0xff]
        %v1096 = vld [vmem:[%s995 + $0x29] sm:$0xff]
        %v1097 = vld [vmem:[%s995 + $0x31] sm:$0xff]
        %v1098 = vld [vmem:[%s995 + $0x49] sm:$0xff]
        %v1099 = vld [vmem:[%s995 + $0x51] sm:$0xff]
        %v1100 = vld [vmem:[%s995 + $0x69] sm:$0xff]
        %v1101 = vld [vmem:[%s995 + $0x71] sm:$0xff]
        %v1102 = vld [vmem:[%s995 + $0x89] sm:$0xff]
        %v1103 = vld [vmem:[%s995 + $0x91] sm:$0xff]
        %v1104 = vld [vmem:[%s995 + $0xa9] sm:$0xff]
        %v1105 = vld [vmem:[%s995 + $0xb1] sm:$0xff]
        %v1106 = vld [vmem:[%s995 + $0xc9] sm:$0xff]
        %v1107 = vld [vmem:[%s995 + $0xd1] sm:$0xff]
        %v1108 = vld [vmem:[%s995 + $0xe9] sm:$0xff]
        %v1109 = vld [vmem:[%s995 + $0xf1] sm:$0xff]
        %v1110 = vperm.slane %v696, 0
        %v1111 = vmul.f32 %v1094, %v1110
        %v1112 = vmul.f32 %v1095, %v1110
        %v1113 = vmul.f32 %v1096, %v1110
        %v1114 = vmul.f32 %v1097, %v1110
        %v1115 = vmul.f32 %v1098, %v1110
        %v1116 = vmul.f32 %v1099, %v1110
        %v1117 = vmul.f32 %v1100, %v1110
        %v1118 = vmul.f32 %v1101, %v1110
        %v1119 = vmul.f32 %v1102, %v1110
        %v1120 = vmul.f32 %v1103, %v1110
        %v1121 = vmul.f32 %v1104, %v1110
        %v1122 = vmul.f32 %v1105, %v1110
        %v1123 = vmul.f32 %v1106, %v1110
        %v1124 = vmul.f32 %v1107, %v1110
        %v1125 = vmul.f32 %v1108, %v1110
        %v1126 = vmul.f32 %v1109, %v1110
        %v1127 = vadd.f32 %v1078, %v1111
        %v1128 = vadd.f32 %v1079, %v1112
        %v1129 = vadd.f32 %v1080, %v1113
        %v1130 = vadd.f32 %v1081, %v1114
        %v1131 = vadd.f32 %v1082, %v1115
        %v1132 = vadd.f32 %v1083, %v1116
        %v1133 = vadd.f32 %v1084, %v1117
        %v1134 = vadd.f32 %v1085, %v1118
        %v1135 = vadd.f32 %v1086, %v1119
        %v1136 = vadd.f32 %v1087, %v1120
        %v1137 = vadd.f32 %v1088, %v1121
        %v1138 = vadd.f32 %v1089, %v1122
        %v1139 = vadd.f32 %v1090, %v1123
        %v1140 = vadd.f32 %v1091, %v1124
        %v1141 = vadd.f32 %v1092, %v1125
        %v1142 = vadd.f32 %v1093, %v1126
        %v1143 = vmul.f32 %v1127, 0.5
        %v1144 = vmul.f32 %v1128, 0.5
        %v1145 = vmul.f32 %v1129, 0.5
        %v1146 = vmul.f32 %v1130, 0.5
        %v1147 = vmul.f32 %v1131, 0.5
        %v1148 = vmul.f32 %v1132, 0.5
        %v1149 = vmul.f32 %v1133, 0.5
        %v1150 = vmul.f32 %v1134, 0.5
        %v1151 = vmul.f32 %v1135, 0.5
        %v1152 = vmul.f32 %v1136, 0.5
        %v1153 = vmul.f32 %v1137, 0.5
        %v1154 = vmul.f32 %v1138, 0.5
        %v1155 = vmul.f32 %v1139, 0.5
        %v1156 = vmul.f32 %v1140, 0.5
        %v1157 = vmul.f32 %v1141, 0.5
        %v1158 = vmul.f32 %v1142, 0.5
        %v1159 = vmul.f32 %v1127, 0.70710677
        %v1160 = vmul.f32 %v1128, 0.70710677
        %v1161 = vmul.f32 %v1129, 0.70710677
        %v1162 = vmul.f32 %v1130, 0.70710677
        %v1163 = vmul.f32 %v1131, 0.70710677
        %v1164 = vmul.f32 %v1132, 0.70710677
        %v1165 = vmul.f32 %v1133, 0.70710677
        %v1166 = vmul.f32 %v1134, 0.70710677
        %v1167 = vmul.f32 %v1135, 0.70710677
        %v1168 = vmul.f32 %v1136, 0.70710677
        %v1169 = vmul.f32 %v1137, 0.70710677
        %v1170 = vmul.f32 %v1138, 0.70710677
        %v1171 = vmul.f32 %v1139, 0.70710677
        %v1172 = vmul.f32 %v1140, 0.70710677
        %v1173 = vmul.f32 %v1141, 0.70710677
        %v1174 = vmul.f32 %v1142, 0.70710677
        %v1175 = vmul.f32 %v1159, %v1159
        %v1176 = vmin.f32 16.0, %v1175
        %v1177 = vmul.f32 %v1176, 2.1237322e-06
        %v1178 = vadd.f32 %v1177, 0.00028619796
        %v1179 = vmul.f32 %v1176, %v1178
        %v1180 = vadd.f32 %v1179, 0.0036580483
        %v1181 = vmul.f32 %v1176, %v1180
        %v1182 = vadd.f32 %v1181, 0.05243302
        %v1183 = vmul.f32 %v1176, %v1182
        %v1184 = vadd.f32 %v1183, 0.18741608
        %v1185 = vmul.f32 %v1176, %v1184
        %v1186 = vadd.f32 %v1185, 1.1283791
        %v1187 = vmul.f32 %v1159, %v1186
        %v1188 = vmul.f32 %v1176, 3.8918573e-05
        %v1189 = vadd.f32 %v1188, 0.001143296
        %v1190 = vmul.f32 %v1176, %v1189
        %v1191 = vadd.f32 %v1190, 0.014752088
        %v1192 = vmul.f32 %v1176, %v1191
        %v1193 = vadd.f32 %v1192, 0.112945676
        %v1194 = vmul.f32 %v1176, %v1193
        %v1195 = vadd.f32 %v1194, 0.4994258
        %v1196 = vmul.f32 %v1176, %v1195
        %v1197 = vadd.f32 %v1196, 1.0
        %v1198 = vrcp.pop %v1197
        %v1199 = vmul.f32 %v1197, %v1198
        %v1200 = vsub.f32 1.0, %v1199
        %v1201 = vmul.f32 %v1198, %v1200
        %v1202 = vadd.f32 %v1198, %v1201
        %vm1203 = vweird.f32 %v1197
        %vm1204 = vweird.f32 %v1198
        %vm1205 = vmor %vm1203, %vm1204
        %v1206 = vsel %vm1205, %v1198, %v1202
        %v1207 = vand.u32 2147483647, %v1197
        %vm1208 = vcmp.eq.f32.partialorder %v1207, 8.507059e+37
        %v1209 = vand.u32 %v1197, 2147483648
        %v1210 = vor.u32 1.1754944e-38, %v1209
        %v1211 = vsel %vm1208, %v1210, %v1206
        %v1212 = vmul.f32 %v1187, %v1211
        %v1213 = vmin.f32 %v1212, 1.0
        %v1214 = vmax.f32 %v1213, -1.0
        %v1215 = vmul.f32 %v1160, %v1160
        %v1216 = vmin.f32 16.0, %v1215
        %v1217 = vmul.f32 %v1216, 2.1237322e-06
        %v1218 = vadd.f32 %v1217, 0.00028619796
        %v1219 = vmul.f32 %v1216, %v1218
        %v1220 = vadd.f32 %v1219, 0.0036580483
        %v1221 = vmul.f32 %v1216, %v1220
        %v1222 = vadd.f32 %v1221, 0.05243302
        %v1223 = vmul.f32 %v1216, %v1222
        %v1224 = vadd.f32 %v1223, 0.18741608
        %v1225 = vmul.f32 %v1216, %v1224
        %v1226 = vadd.f32 %v1225, 1.1283791
        %v1227 = vmul.f32 %v1160, %v1226
        %v1228 = vmul.f32 %v1216, 3.8918573e-05
        %v1229 = vadd.f32 %v1228, 0.001143296
        %v1230 = vmul.f32 %v1216, %v1229
        %v1231 = vadd.f32 %v1230, 0.014752088
        %v1232 = vmul.f32 %v1216, %v1231
        %v1233 = vadd.f32 %v1232, 0.112945676
        %v1234 = vmul.f32 %v1216, %v1233
        %v1235 = vadd.f32 %v1234, 0.4994258
        %v1236 = vmul.f32 %v1216, %v1235
        %v1237 = vadd.f32 %v1236, 1.0
        %v1238 = vrcp.pop %v1237
        %v1239 = vmul.f32 %v1237, %v1238
        %v1240 = vsub.f32 1.0, %v1239
        %v1241 = vmul.f32 %v1238, %v1240
        %v1242 = vadd.f32 %v1238, %v1241
        %vm1243 = vweird.f32 %v1237
        %vm1244 = vweird.f32 %v1238
        %vm1245 = vmor %vm1243, %vm1244
        %v1246 = vsel %vm1245, %v1238, %v1242
        %v1247 = vand.u32 2147483647, %v1237
        %vm1248 = vcmp.eq.f32.partialorder %v1247, 8.507059e+37
        %v1249 = vand.u32 %v1237, 2147483648
        %v1250 = vor.u32 1.1754944e-38, %v1249
        %v1251 = vsel %vm1248, %v1250, %v1246
        %v1252 = vmul.f32 %v1227, %v1251
        %v1253 = vmin.f32 %v1252, 1.0
        %v1254 = vmax.f32 %v1253, -1.0
        %v1255 = vmul.f32 %v1161, %v1161
        %v1256 = vmin.f32 16.0, %v1255
        %v1257 = vmul.f32 %v1256, 2.1237322e-06
        %v1258 = vadd.f32 %v1257, 0.00028619796
        %v1259 = vmul.f32 %v1256, %v1258
        %v1260 = vadd.f32 %v1259, 0.0036580483
        %v1261 = vmul.f32 %v1256, %v1260
        %v1262 = vadd.f32 %v1261, 0.05243302
        %v1263 = vmul.f32 %v1256, %v1262
        %v1264 = vadd.f32 %v1263, 0.18741608
        %v1265 = vmul.f32 %v1256, %v1264
        %v1266 = vadd.f32 %v1265, 1.1283791
        %v1267 = vmul.f32 %v1161, %v1266
        %v1268 = vmul.f32 %v1256, 3.8918573e-05
        %v1269 = vadd.f32 %v1268, 0.001143296
        %v1270 = vmul.f32 %v1256, %v1269
        %v1271 = vadd.f32 %v1270, 0.014752088
        %v1272 = vmul.f32 %v1256, %v1271
        %v1273 = vadd.f32 %v1272, 0.112945676
        %v1274 = vmul.f32 %v1256, %v1273
        %v1275 = vadd.f32 %v1274, 0.4994258
        %v1276 = vmul.f32 %v1256, %v1275
        %v1277 = vadd.f32 %v1276, 1.0
        %v1278 = vrcp.pop %v1277
        %v1279 = vmul.f32 %v1277, %v1278
        %v1280 = vsub.f32 1.0, %v1279
        %v1281 = vmul.f32 %v1278, %v1280
        %v1282 = vadd.f32 %v1278, %v1281
        %vm1283 = vweird.f32 %v1277
        %vm1284 = vweird.f32 %v1278
        %vm1285 = vmor %vm1283, %vm1284
        %v1286 = vsel %vm1285, %v1278, %v1282
        %v1287 = vand.u32 2147483647, %v1277
        %vm1288 = vcmp.eq.f32.partialorder %v1287, 8.507059e+37
        %v1289 = vand.u32 %v1277, 2147483648
        %v1290 = vor.u32 1.1754944e-38, %v1289
        %v1291 = vsel %vm1288, %v1290, %v1286
        %v1292 = vmul.f32 %v1267, %v1291
        %v1293 = vmin.f32 %v1292, 1.0
        %v1294 = vmax.f32 %v1293, -1.0
        %v1295 = vmul.f32 %v1162, %v1162
        %v1296 = vmin.f32 16.0, %v1295
        %v1297 = vmul.f32 %v1296, 2.1237322e-06
        %v1298 = vadd.f32 %v1297, 0.00028619796
        %v1299 = vmul.f32 %v1296, %v1298
        %v1300 = vadd.f32 %v1299, 0.0036580483
        %v1301 = vmul.f32 %v1296, %v1300
        %v1302 = vadd.f32 %v1301, 0.05243302
        %v1303 = vmul.f32 %v1296, %v1302
        %v1304 = vadd.f32 %v1303, 0.18741608
        %v1305 = vmul.f32 %v1296, %v1304
        %v1306 = vadd.f32 %v1305, 1.1283791
        %v1307 = vmul.f32 %v1162, %v1306
        %v1308 = vmul.f32 %v1296, 3.8918573e-05
        %v1309 = vadd.f32 %v1308, 0.001143296
        %v1310 = vmul.f32 %v1296, %v1309
        %v1311 = vadd.f32 %v1310, 0.014752088
        %v1312 = vmul.f32 %v1296, %v1311
        %v1313 = vadd.f32 %v1312, 0.112945676
        %v1314 = vmul.f32 %v1296, %v1313
        %v1315 = vadd.f32 %v1314, 0.4994258
        %v1316 = vmul.f32 %v1296, %v1315
        %v1317 = vadd.f32 %v1316, 1.0
        %v1318 = vrcp.pop %v1317
        %v1319 = vmul.f32 %v1317, %v1318
        %v1320 = vsub.f32 1.0, %v1319
        %v1321 = vmul.f32 %v1318, %v1320
        %v1322 = vadd.f32 %v1318, %v1321
        %vm1323 = vweird.f32 %v1317
        %vm1324 = vweird.f32 %v1318
        %vm1325 = vmor %vm1323, %vm1324
        %v1326 = vsel %vm1325, %v1318, %v1322
        %v1327 = vand.u32 2147483647, %v1317
        %vm1328 = vcmp.eq.f32.partialorder %v1327, 8.507059e+37
        %v1329 = vand.u32 %v1317, 2147483648
        %v1330 = vor.u32 1.1754944e-38, %v1329
        %v1331 = vsel %vm1328, %v1330, %v1326
        %v1332 = vmul.f32 %v1307, %v1331
        %v1333 = vmin.f32 %v1332, 1.0
        %v1334 = vmax.f32 %v1333, -1.0
        %v1335 = vmul.f32 %v1163, %v1163
        %v1336 = vmin.f32 16.0, %v1335
        %v1337 = vmul.f32 %v1336, 2.1237322e-06
        %v1338 = vadd.f32 %v1337, 0.00028619796
        %v1339 = vmul.f32 %v1336, %v1338
        %v1340 = vadd.f32 %v1339, 0.0036580483
        %v1341 = vmul.f32 %v1336, %v1340
        %v1342 = vadd.f32 %v1341, 0.05243302
        %v1343 = vmul.f32 %v1336, %v1342
        %v1344 = vadd.f32 %v1343, 0.18741608
        %v1345 = vmul.f32 %v1336, %v1344
        %v1346 = vadd.f32 %v1345, 1.1283791
        %v1347 = vmul.f32 %v1163, %v1346
        %v1348 = vmul.f32 %v1336, 3.8918573e-05
        %v1349 = vadd.f32 %v1348, 0.001143296
        %v1350 = vmul.f32 %v1336, %v1349
        %v1351 = vadd.f32 %v1350, 0.014752088
        %v1352 = vmul.f32 %v1336, %v1351
        %v1353 = vadd.f32 %v1352, 0.112945676
        %v1354 = vmul.f32 %v1336, %v1353
        %v1355 = vadd.f32 %v1354, 0.4994258
        %v1356 = vmul.f32 %v1336, %v1355
        %v1357 = vadd.f32 %v1356, 1.0
        %v1358 = vrcp.pop %v1357
        %v1359 = vmul.f32 %v1357, %v1358
        %v1360 = vsub.f32 1.0, %v1359
        %v1361 = vmul.f32 %v1358, %v1360
        %v1362 = vadd.f32 %v1358, %v1361
        %vm1363 = vweird.f32 %v1357
        %vm1364 = vweird.f32 %v1358
        %vm1365 = vmor %vm1363, %vm1364
        %v1366 = vsel %vm1365, %v1358, %v1362
        %v1367 = vand.u32 2147483647, %v1357
        %vm1368 = vcmp.eq.f32.partialorder %v1367, 8.507059e+37
        %v1369 = vand.u32 %v1357, 2147483648
        %v1370 = vor.u32 1.1754944e-38, %v1369
        %v1371 = vsel %vm1368, %v1370, %v1366
        %v1372 = vmul.f32 %v1347, %v1371
        %v1373 = vmin.f32 %v1372, 1.0
        %v1374 = vmax.f32 %v1373, -1.0
        %v1375 = vmul.f32 %v1164, %v1164
        %v1376 = vmin.f32 16.0, %v1375
        %v1377 = vmul.f32 %v1376, 2.1237322e-06
        %v1378 = vadd.f32 %v1377, 0.00028619796
        %v1379 = vmul.f32 %v1376, %v1378
        %v1380 = vadd.f32 %v1379, 0.0036580483
        %v1381 = vmul.f32 %v1376, %v1380
        %v1382 = vadd.f32 %v1381, 0.05243302
        %v1383 = vmul.f32 %v1376, %v1382
        %v1384 = vadd.f32 %v1383, 0.18741608
        %v1385 = vmul.f32 %v1376, %v1384
        %v1386 = vadd.f32 %v1385, 1.1283791
        %v1387 = vmul.f32 %v1164, %v1386
        %v1388 = vmul.f32 %v1376, 3.8918573e-05
        %v1389 = vadd.f32 %v1388, 0.001143296
        %v1390 = vmul.f32 %v1376, %v1389
        %v1391 = vadd.f32 %v1390, 0.014752088
        %v1392 = vmul.f32 %v1376, %v1391
        %v1393 = vadd.f32 %v1392, 0.112945676
        %v1394 = vmul.f32 %v1376, %v1393
        %v1395 = vadd.f32 %v1394, 0.4994258
        %v1396 = vmul.f32 %v1376, %v1395
        %v1397 = vadd.f32 %v1396, 1.0
        %v1398 = vrcp.pop %v1397
        %v1399 = vmul.f32 %v1397, %v1398
        %v1400 = vsub.f32 1.0, %v1399
        %v1401 = vmul.f32 %v1398, %v1400
        %v1402 = vadd.f32 %v1398, %v1401
        %vm1403 = vweird.f32 %v1397
        %vm1404 = vweird.f32 %v1398
        %vm1405 = vmor %vm1403, %vm1404
        %v1406 = vsel %vm1405, %v1398, %v1402
        %v1407 = vand.u32 2147483647, %v1397
        %vm1408 = vcmp.eq.f32.partialorder %v1407, 8.507059e+37
        %v1409 = vand.u32 %v1397, 2147483648
        %v1410 = vor.u32 1.1754944e-38, %v1409
        %v1411 = vsel %vm1408, %v1410, %v1406
        %v1412 = vmul.f32 %v1387, %v1411
        %v1413 = vmin.f32 %v1412, 1.0
        %v1414 = vmax.f32 %v1413, -1.0
        %v1415 = vmul.f32 %v1165, %v1165
        %v1416 = vmin.f32 16.0, %v1415
        %v1417 = vmul.f32 %v1416, 2.1237322e-06
        %v1418 = vadd.f32 %v1417, 0.00028619796
        %v1419 = vmul.f32 %v1416, %v1418
        %v1420 = vadd.f32 %v1419, 0.0036580483
        %v1421 = vmul.f32 %v1416, %v1420
        %v1422 = vadd.f32 %v1421, 0.05243302
        %v1423 = vmul.f32 %v1416, %v1422
        %v1424 = vadd.f32 %v1423, 0.18741608
        %v1425 = vmul.f32 %v1416, %v1424
        %v1426 = vadd.f32 %v1425, 1.1283791
        %v1427 = vmul.f32 %v1165, %v1426
        %v1428 = vmul.f32 %v1416, 3.8918573e-05
        %v1429 = vadd.f32 %v1428, 0.001143296
        %v1430 = vmul.f32 %v1416, %v1429
        %v1431 = vadd.f32 %v1430, 0.014752088
        %v1432 = vmul.f32 %v1416, %v1431
        %v1433 = vadd.f32 %v1432, 0.112945676
        %v1434 = vmul.f32 %v1416, %v1433
        %v1435 = vadd.f32 %v1434, 0.4994258
        %v1436 = vmul.f32 %v1416, %v1435
        %v1437 = vadd.f32 %v1436, 1.0
        %v1438 = vrcp.pop %v1437
        %v1439 = vmul.f32 %v1437, %v1438
        %v1440 = vsub.f32 1.0, %v1439
        %v1441 = vmul.f32 %v1438, %v1440
        %v1442 = vadd.f32 %v1438, %v1441
        %vm1443 = vweird.f32 %v1437
        %vm1444 = vweird.f32 %v1438
        %vm1445 = vmor %vm1443, %vm1444
        %v1446 = vsel %vm1445, %v1438, %v1442
        %v1447 = vand.u32 2147483647, %v1437
        %vm1448 = vcmp.eq.f32.partialorder %v1447, 8.507059e+37
        %v1449 = vand.u32 %v1437, 2147483648
        %v1450 = vor.u32 1.1754944e-38, %v1449
        %v1451 = vsel %vm1448, %v1450, %v1446
        %v1452 = vmul.f32 %v1427, %v1451
        %v1453 = vmin.f32 %v1452, 1.0
        %v1454 = vmax.f32 %v1453, -1.0
        %v1455 = vmul.f32 %v1166, %v1166
        %v1456 = vmin.f32 16.0, %v1455
        %v1457 = vmul.f32 %v1456, 2.1237322e-06
        %v1458 = vadd.f32 %v1457, 0.00028619796
        %v1459 = vmul.f32 %v1456, %v1458
        %v1460 = vadd.f32 %v1459, 0.0036580483
        %v1461 = vmul.f32 %v1456, %v1460
        %v1462 = vadd.f32 %v1461, 0.05243302
        %v1463 = vmul.f32 %v1456, %v1462
        %v1464 = vadd.f32 %v1463, 0.18741608
        %v1465 = vmul.f32 %v1456, %v1464
        %v1466 = vadd.f32 %v1465, 1.1283791
        %v1467 = vmul.f32 %v1166, %v1466
        %v1468 = vmul.f32 %v1456, 3.8918573e-05
        %v1469 = vadd.f32 %v1468, 0.001143296
        %v1470 = vmul.f32 %v1456, %v1469
        %v1471 = vadd.f32 %v1470, 0.014752088
        %v1472 = vmul.f32 %v1456, %v1471
        %v1473 = vadd.f32 %v1472, 0.112945676
        %v1474 = vmul.f32 %v1456, %v1473
        %v1475 = vadd.f32 %v1474, 0.4994258
        %v1476 = vmul.f32 %v1456, %v1475
        %v1477 = vadd.f32 %v1476, 1.0
        %v1478 = vrcp.pop %v1477
        %v1479 = vmul.f32 %v1477, %v1478
        %v1480 = vsub.f32 1.0, %v1479
        %v1481 = vmul.f32 %v1478, %v1480
        %v1482 = vadd.f32 %v1478, %v1481
        %vm1483 = vweird.f32 %v1477
        %vm1484 = vweird.f32 %v1478
        %vm1485 = vmor %vm1483, %vm1484
        %v1486 = vsel %vm1485, %v1478, %v1482
        %v1487 = vand.u32 2147483647, %v1477
        %vm1488 = vcmp.eq.f32.partialorder %v1487, 8.507059e+37
        %v1489 = vand.u32 %v1477, 2147483648
        %v1490 = vor.u32 1.1754944e-38, %v1489
        %v1491 = vsel %vm1488, %v1490, %v1486
        %v1492 = vmul.f32 %v1467, %v1491
        %v1493 = vmin.f32 %v1492, 1.0
        %v1494 = vmax.f32 %v1493, -1.0
        %v1495 = vmul.f32 %v1167, %v1167
        %v1496 = vmin.f32 16.0, %v1495
        %v1497 = vmul.f32 %v1496, 2.1237322e-06
        %v1498 = vadd.f32 %v1497, 0.00028619796
        %v1499 = vmul.f32 %v1496, %v1498
        %v1500 = vadd.f32 %v1499, 0.0036580483
        %v1501 = vmul.f32 %v1496, %v1500
        %v1502 = vadd.f32 %v1501, 0.05243302
        %v1503 = vmul.f32 %v1496, %v1502
        %v1504 = vadd.f32 %v1503, 0.18741608
        %v1505 = vmul.f32 %v1496, %v1504
        %v1506 = vadd.f32 %v1505, 1.1283791
        %v1507 = vmul.f32 %v1167, %v1506
        %v1508 = vmul.f32 %v1496, 3.8918573e-05
        %v1509 = vadd.f32 %v1508, 0.001143296
        %v1510 = vmul.f32 %v1496, %v1509
        %v1511 = vadd.f32 %v1510, 0.014752088
        %v1512 = vmul.f32 %v1496, %v1511
        %v1513 = vadd.f32 %v1512, 0.112945676
        %v1514 = vmul.f32 %v1496, %v1513
        %v1515 = vadd.f32 %v1514, 0.4994258
        %v1516 = vmul.f32 %v1496, %v1515
        %v1517 = vadd.f32 %v1516, 1.0
        %v1518 = vrcp.pop %v1517
        %v1519 = vmul.f32 %v1517, %v1518
        %v1520 = vsub.f32 1.0, %v1519
        %v1521 = vmul.f32 %v1518, %v1520
        %v1522 = vadd.f32 %v1518, %v1521
        %vm1523 = vweird.f32 %v1517
        %vm1524 = vweird.f32 %v1518
        %vm1525 = vmor %vm1523, %vm1524
        %v1526 = vsel %vm1525, %v1518, %v1522
        %v1527 = vand.u32 2147483647, %v1517
        %vm1528 = vcmp.eq.f32.partialorder %v1527, 8.507059e+37
        %v1529 = vand.u32 %v1517, 2147483648
        %v1530 = vor.u32 1.1754944e-38, %v1529
        %v1531 = vsel %vm1528, %v1530, %v1526
        %v1532 = vmul.f32 %v1507, %v1531
        %v1533 = vmin.f32 %v1532, 1.0
        %v1534 = vmax.f32 %v1533, -1.0
        %v1535 = vmul.f32 %v1168, %v1168
        %v1536 = vmin.f32 16.0, %v1535
        %v1537 = vmul.f32 %v1536, 2.1237322e-06
        %v1538 = vadd.f32 %v1537, 0.00028619796
        %v1539 = vmul.f32 %v1536, %v1538
        %v1540 = vadd.f32 %v1539, 0.0036580483
        %v1541 = vmul.f32 %v1536, %v1540
        %v1542 = vadd.f32 %v1541, 0.05243302
        %v1543 = vmul.f32 %v1536, %v1542
        %v1544 = vadd.f32 %v1543, 0.18741608
        %v1545 = vmul.f32 %v1536, %v1544
        %v1546 = vadd.f32 %v1545, 1.1283791
        %v1547 = vmul.f32 %v1168, %v1546
        %v1548 = vmul.f32 %v1536, 3.8918573e-05
        %v1549 = vadd.f32 %v1548, 0.001143296
        %v1550 = vmul.f32 %v1536, %v1549
        %v1551 = vadd.f32 %v1550, 0.014752088
        %v1552 = vmul.f32 %v1536, %v1551
        %v1553 = vadd.f32 %v1552, 0.112945676
        %v1554 = vmul.f32 %v1536, %v1553
        %v1555 = vadd.f32 %v1554, 0.4994258
        %v1556 = vmul.f32 %v1536, %v1555
        %v1557 = vadd.f32 %v1556, 1.0
        %v1558 = vrcp.pop %v1557
        %v1559 = vmul.f32 %v1557, %v1558
        %v1560 = vsub.f32 1.0, %v1559
        %v1561 = vmul.f32 %v1558, %v1560
        %v1562 = vadd.f32 %v1558, %v1561
        %vm1563 = vweird.f32 %v1557
        %vm1564 = vweird.f32 %v1558
        %vm1565 = vmor %vm1563, %vm1564
        %v1566 = vsel %vm1565, %v1558, %v1562
        %v1567 = vand.u32 2147483647, %v1557
        %vm1568 = vcmp.eq.f32.partialorder %v1567, 8.507059e+37
        %v1569 = vand.u32 %v1557, 2147483648
        %v1570 = vor.u32 1.1754944e-38, %v1569
        %v1571 = vsel %vm1568, %v1570, %v1566
        %v1572 = vmul.f32 %v1547, %v1571
        %v1573 = vmin.f32 %v1572, 1.0
        %v1574 = vmax.f32 %v1573, -1.0
        %v1575 = vmul.f32 %v1169, %v1169
        %v1576 = vmin.f32 16.0, %v1575
        %v1577 = vmul.f32 %v1576, 2.1237322e-06
        %v1578 = vadd.f32 %v1577, 0.00028619796
        %v1579 = vmul.f32 %v1576, %v1578
        %v1580 = vadd.f32 %v1579, 0.0036580483
        %v1581 = vmul.f32 %v1576, %v1580
        %v1582 = vadd.f32 %v1581, 0.05243302
        %v1583 = vmul.f32 %v1576, %v1582
        %v1584 = vadd.f32 %v1583, 0.18741608
        %v1585 = vmul.f32 %v1576, %v1584
        %v1586 = vadd.f32 %v1585, 1.1283791
        %v1587 = vmul.f32 %v1169, %v1586
        %v1588 = vmul.f32 %v1576, 3.8918573e-05
        %v1589 = vadd.f32 %v1588, 0.001143296
        %v1590 = vmul.f32 %v1576, %v1589
        %v1591 = vadd.f32 %v1590, 0.014752088
        %v1592 = vmul.f32 %v1576, %v1591
        %v1593 = vadd.f32 %v1592, 0.112945676
        %v1594 = vmul.f32 %v1576, %v1593
        %v1595 = vadd.f32 %v1594, 0.4994258
        %v1596 = vmul.f32 %v1576, %v1595
        %v1597 = vadd.f32 %v1596, 1.0
        %v1598 = vrcp.pop %v1597
        %v1599 = vmul.f32 %v1597, %v1598
        %v1600 = vsub.f32 1.0, %v1599
        %v1601 = vmul.f32 %v1598, %v1600
        %v1602 = vadd.f32 %v1598, %v1601
        %vm1603 = vweird.f32 %v1597
        %vm1604 = vweird.f32 %v1598
        %vm1605 = vmor %vm1603, %vm1604
        %v1606 = vsel %vm1605, %v1598, %v1602
        %v1607 = vand.u32 2147483647, %v1597
        %vm1608 = vcmp.eq.f32.partialorder %v1607, 8.507059e+37
        %v1609 = vand.u32 %v1597, 2147483648
        %v1610 = vor.u32 1.1754944e-38, %v1609
        %v1611 = vsel %vm1608, %v1610, %v1606
        %v1612 = vmul.f32 %v1587, %v1611
        %v1613 = vmin.f32 %v1612, 1.0
        %v1614 = vmax.f32 %v1613, -1.0
        %v1615 = vmul.f32 %v1170, %v1170
        %v1616 = vmin.f32 16.0, %v1615
        %v1617 = vmul.f32 %v1616, 2.1237322e-06
        %v1618 = vadd.f32 %v1617, 0.00028619796
        %v1619 = vmul.f32 %v1616, %v1618
        %v1620 = vadd.f32 %v1619, 0.0036580483
        %v1621 = vmul.f32 %v1616, %v1620
        %v1622 = vadd.f32 %v1621, 0.05243302
        %v1623 = vmul.f32 %v1616, %v1622
        %v1624 = vadd.f32 %v1623, 0.18741608
        %v1625 = vmul.f32 %v1616, %v1624
        %v1626 = vadd.f32 %v1625, 1.1283791
        %v1627 = vmul.f32 %v1170, %v1626
        %v1628 = vmul.f32 %v1616, 3.8918573e-05
        %v1629 = vadd.f32 %v1628, 0.001143296
        %v1630 = vmul.f32 %v1616, %v1629
        %v1631 = vadd.f32 %v1630, 0.014752088
        %v1632 = vmul.f32 %v1616, %v1631
        %v1633 = vadd.f32 %v1632, 0.112945676
        %v1634 = vmul.f32 %v1616, %v1633
        %v1635 = vadd.f32 %v1634, 0.4994258
        %v1636 = vmul.f32 %v1616, %v1635
        %v1637 = vadd.f32 %v1636, 1.0
        %v1638 = vrcp.pop %v1637
        %v1639 = vmul.f32 %v1637, %v1638
        %v1640 = vsub.f32 1.0, %v1639
        %v1641 = vmul.f32 %v1638, %v1640
        %v1642 = vadd.f32 %v1638, %v1641
        %vm1643 = vweird.f32 %v1637
        %vm1644 = vweird.f32 %v1638
        %vm1645 = vmor %vm1643, %vm1644
        %v1646 = vsel %vm1645, %v1638, %v1642
        %v1647 = vand.u32 2147483647, %v1637
        %vm1648 = vcmp.eq.f32.partialorder %v1647, 8.507059e+37
        %v1649 = vand.u32 %v1637, 2147483648
        %v1650 = vor.u32 1.1754944e-38, %v1649
        %v1651 = vsel %vm1648, %v1650, %v1646
        %v1652 = vmul.f32 %v1627, %v1651
        %v1653 = vmin.f32 %v1652, 1.0
        %v1654 = vmax.f32 %v1653, -1.0
        %v1655 = vmul.f32 %v1171, %v1171
        %v1656 = vmin.f32 16.0, %v1655
        %v1657 = vmul.f32 %v1656, 2.1237322e-06
        %v1658 = vadd.f32 %v1657, 0.00028619796
        %v1659 = vmul.f32 %v1656, %v1658
        %v1660 = vadd.f32 %v1659, 0.0036580483
        %v1661 = vmul.f32 %v1656, %v1660
        %v1662 = vadd.f32 %v1661, 0.05243302
        %v1663 = vmul.f32 %v1656, %v1662
        %v1664 = vadd.f32 %v1663, 0.18741608
        %v1665 = vmul.f32 %v1656, %v1664
        %v1666 = vadd.f32 %v1665, 1.1283791
        %v1667 = vmul.f32 %v1171, %v1666
        %v1668 = vmul.f32 %v1656, 3.8918573e-05
        %v1669 = vadd.f32 %v1668, 0.001143296
        %v1670 = vmul.f32 %v1656, %v1669
        %v1671 = vadd.f32 %v1670, 0.014752088
        %v1672 = vmul.f32 %v1656, %v1671
        %v1673 = vadd.f32 %v1672, 0.112945676
        %v1674 = vmul.f32 %v1656, %v1673
        %v1675 = vadd.f32 %v1674, 0.4994258
        %v1676 = vmul.f32 %v1656, %v1675
        %v1677 = vadd.f32 %v1676, 1.0
        %v1678 = vrcp.pop %v1677
        %v1679 = vmul.f32 %v1677, %v1678
        %v1680 = vsub.f32 1.0, %v1679
        %v1681 = vmul.f32 %v1678, %v1680
        %v1682 = vadd.f32 %v1678, %v1681
        %vm1683 = vweird.f32 %v1677
        %vm1684 = vweird.f32 %v1678
        %vm1685 = vmor %vm1683, %vm1684
        %v1686 = vsel %vm1685, %v1678, %v1682
        %v1687 = vand.u32 2147483647, %v1677
        %vm1688 = vcmp.eq.f32.partialorder %v1687, 8.507059e+37
        %v1689 = vand.u32 %v1677, 2147483648
        %v1690 = vor.u32 1.1754944e-38, %v1689
        %v1691 = vsel %vm1688, %v1690, %v1686
        %v1692 = vmul.f32 %v1667, %v1691
        %v1693 = vmin.f32 %v1692, 1.0
        %v1694 = vmax.f32 %v1693, -1.0
        %v1695 = vmul.f32 %v1172, %v1172
        %v1696 = vmin.f32 16.0, %v1695
        %v1697 = vmul.f32 %v1696, 2.1237322e-06
        %v1698 = vadd.f32 %v1697, 0.00028619796
        %v1699 = vmul.f32 %v1696, %v1698
        %v1700 = vadd.f32 %v1699, 0.0036580483
        %v1701 = vmul.f32 %v1696, %v1700
        %v1702 = vadd.f32 %v1701, 0.05243302
        %v1703 = vmul.f32 %v1696, %v1702
        %v1704 = vadd.f32 %v1703, 0.18741608
        %v1705 = vmul.f32 %v1696, %v1704
        %v1706 = vadd.f32 %v1705, 1.1283791
        %v1707 = vmul.f32 %v1172, %v1706
        %v1708 = vmul.f32 %v1696, 3.8918573e-05
        %v1709 = vadd.f32 %v1708, 0.001143296
        %v1710 = vmul.f32 %v1696, %v1709
        %v1711 = vadd.f32 %v1710, 0.014752088
        %v1712 = vmul.f32 %v1696, %v1711
        %v1713 = vadd.f32 %v1712, 0.112945676
        %v1714 = vmul.f32 %v1696, %v1713
        %v1715 = vadd.f32 %v1714, 0.4994258
        %v1716 = vmul.f32 %v1696, %v1715
        %v1717 = vadd.f32 %v1716, 1.0
        %v1718 = vrcp.pop %v1717
        %v1719 = vmul.f32 %v1717, %v1718
        %v1720 = vsub.f32 1.0, %v1719
        %v1721 = vmul.f32 %v1718, %v1720
        %v1722 = vadd.f32 %v1718, %v1721
        %vm1723 = vweird.f32 %v1717
        %vm1724 = vweird.f32 %v1718
        %vm1725 = vmor %vm1723, %vm1724
        %v1726 = vsel %vm1725, %v1718, %v1722
        %v1727 = vand.u32 2147483647, %v1717
        %vm1728 = vcmp.eq.f32.partialorder %v1727, 8.507059e+37
        %v1729 = vand.u32 %v1717, 2147483648
        %v1730 = vor.u32 1.1754944e-38, %v1729
        %v1731 = vsel %vm1728, %v1730, %v1726
        %v1732 = vmul.f32 %v1707, %v1731
        %v1733 = vmin.f32 %v1732, 1.0
        %v1734 = vmax.f32 %v1733, -1.0
        %v1735 = vmul.f32 %v1173, %v1173
        %v1736 = vmin.f32 16.0, %v1735
        %v1737 = vmul.f32 %v1736, 2.1237322e-06
        %v1738 = vadd.f32 %v1737, 0.00028619796
        %v1739 = vmul.f32 %v1736, %v1738
        %v1740 = vadd.f32 %v1739, 0.0036580483
        %v1741 = vmul.f32 %v1736, %v1740
        %v1742 = vadd.f32 %v1741, 0.05243302
        %v1743 = vmul.f32 %v1736, %v1742
        %v1744 = vadd.f32 %v1743, 0.18741608
        %v1745 = vmul.f32 %v1736, %v1744
        %v1746 = vadd.f32 %v1745, 1.1283791
        %v1747 = vmul.f32 %v1173, %v1746
        %v1748 = vmul.f32 %v1736, 3.8918573e-05
        %v1749 = vadd.f32 %v1748, 0.001143296
        %v1750 = vmul.f32 %v1736, %v1749
        %v1751 = vadd.f32 %v1750, 0.014752088
        %v1752 = vmul.f32 %v1736, %v1751
        %v1753 = vadd.f32 %v1752, 0.112945676
        %v1754 = vmul.f32 %v1736, %v1753
        %v1755 = vadd.f32 %v1754, 0.4994258
        %v1756 = vmul.f32 %v1736, %v1755
        %v1757 = vadd.f32 %v1756, 1.0
        %v1758 = vrcp.pop %v1757
        %v1759 = vmul.f32 %v1757, %v1758
        %v1760 = vsub.f32 1.0, %v1759
        %v1761 = vmul.f32 %v1758, %v1760
        %v1762 = vadd.f32 %v1758, %v1761
        %vm1763 = vweird.f32 %v1757
        %vm1764 = vweird.f32 %v1758
        %vm1765 = vmor %vm1763, %vm1764
        %v1766 = vsel %vm1765, %v1758, %v1762
        %v1767 = vand.u32 2147483647, %v1757
        %vm1768 = vcmp.eq.f32.partialorder %v1767, 8.507059e+37
        %v1769 = vand.u32 %v1757, 2147483648
        %v1770 = vor.u32 1.1754944e-38, %v1769
        %v1771 = vsel %vm1768, %v1770, %v1766
        %v1772 = vmul.f32 %v1747, %v1771
        %v1773 = vmin.f32 %v1772, 1.0
        %v1774 = vmax.f32 %v1773, -1.0
        %v1775 = vmul.f32 %v1174, %v1174
        %v1776 = vmin.f32 16.0, %v1775
        %v1777 = vmul.f32 %v1776, 2.1237322e-06
        %v1778 = vadd.f32 %v1777, 0.00028619796
        %v1779 = vmul.f32 %v1776, %v1778
        %v1780 = vadd.f32 %v1779, 0.0036580483
        %v1781 = vmul.f32 %v1776, %v1780
        %v1782 = vadd.f32 %v1781, 0.05243302
        %v1783 = vmul.f32 %v1776, %v1782
        %v1784 = vadd.f32 %v1783, 0.18741608
        %v1785 = vmul.f32 %v1776, %v1784
        %v1786 = vadd.f32 %v1785, 1.1283791
        %v1787 = vmul.f32 %v1174, %v1786
        %v1788 = vmul.f32 %v1776, 3.8918573e-05
        %v1789 = vadd.f32 %v1788, 0.001143296
        %v1790 = vmul.f32 %v1776, %v1789
        %v1791 = vadd.f32 %v1790, 0.014752088
        %v1792 = vmul.f32 %v1776, %v1791
        %v1793 = vadd.f32 %v1792, 0.112945676
        %v1794 = vmul.f32 %v1776, %v1793
        %v1795 = vadd.f32 %v1794, 0.4994258
        %v1796 = vmul.f32 %v1776, %v1795
        %v1797 = vadd.f32 %v1796, 1.0
        %v1798 = vrcp.pop %v1797
        %v1799 = vmul.f32 %v1797, %v1798
        %v1800 = vsub.f32 1.0, %v1799
        %v1801 = vmul.f32 %v1798, %v1800
        %v1802 = vadd.f32 %v1798, %v1801
        %vm1803 = vweird.f32 %v1797
        %vm1804 = vweird.f32 %v1798
        %vm1805 = vmor %vm1803, %vm1804
        %v1806 = vsel %vm1805, %v1798, %v1802
        %v1807 = vand.u32 2147483647, %v1797
        %vm1808 = vcmp.eq.f32.partialorder %v1807, 8.507059e+37
        %v1809 = vand.u32 %v1797, 2147483648
        %v1810 = vor.u32 1.1754944e-38, %v1809
        %v1811 = vsel %vm1808, %v1810, %v1806
        %v1812 = vmul.f32 %v1787, %v1811
        %v1813 = vmin.f32 %v1812, 1.0
        %v1814 = vmax.f32 %v1813, -1.0
        %v1815 = vadd.f32 %v1214, 1.0
        %v1816 = vadd.f32 %v1254, 1.0
        %v1817 = vadd.f32 %v1294, 1.0
        %v1818 = vadd.f32 %v1334, 1.0
        %v1819 = vadd.f32 %v1374, 1.0
        %v1820 = vadd.f32 %v1414, 1.0
        %v1821 = vadd.f32 %v1454, 1.0
        %v1822 = vadd.f32 %v1494, 1.0
        %v1823 = vadd.f32 %v1534, 1.0
        %v1824 = vadd.f32 %v1574, 1.0
        %v1825 = vadd.f32 %v1614, 1.0
        %v1826 = vadd.f32 %v1654, 1.0
        %v1827 = vadd.f32 %v1694, 1.0
        %v1828 = vadd.f32 %v1734, 1.0
        %v1829 = vadd.f32 %v1774, 1.0
        %v1830 = vadd.f32 %v1814, 1.0
        %v1831 = vmul.f32 %v1143, %v1815
        %v1832 = vmul.f32 %v1144, %v1816
        %v1833 = vmul.f32 %v1145, %v1817
        %v1834 = vmul.f32 %v1146, %v1818
        %v1835 = vmul.f32 %v1147, %v1819
        %v1836 = vmul.f32 %v1148, %v1820
        %v1837 = vmul.f32 %v1149, %v1821
        %v1838 = vmul.f32 %v1150, %v1822
        %v1839 = vmul.f32 %v1151, %v1823
        %v1840 = vmul.f32 %v1152, %v1824
        %v1841 = vmul.f32 %v1153, %v1825
        %v1842 = vmul.f32 %v1154, %v1826
        %v1843 = vmul.f32 %v1155, %v1827
        %v1844 = vmul.f32 %v1156, %v1828
        %v1845 = vmul.f32 %v1157, %v1829
        %v1846 = vmul.f32 %v1158, %v1830
        %v1847 = vpack.c.bf16 %v1832, %v1831
        %v1848 = vpack.c.bf16 %v1834, %v1833
        %v1849 = vpack.c.bf16 %v1836, %v1835
        %v1850 = vpack.c.bf16 %v1838, %v1837
        %v1851 = vpack.c.bf16 %v1840, %v1839
        %v1852 = vpack.c.bf16 %v1842, %v1841
        %v1853 = vpack.c.bf16 %v1844, %v1843
        %v1854 = vpack.c.bf16 %v1846, %v1845
        %v1855 = vld [vmem:[#allocation8] sm:$0xf]
        %v1856 = vld [vmem:[#allocation8 + $0x4] sm:$0xf]
        %v1857 = vld [vmem:[#allocation8 + $0x8] sm:$0xf]
        %v1858 = vld [vmem:[#allocation8 + $0xc] sm:$0xf]
        %v1859 = vld [vmem:[#allocation8 + $0x10] sm:$0xf]
        %v1860 = vld [vmem:[#allocation8 + $0x14] sm:$0xf]
        %v1861 = vld [vmem:[#allocation8 + $0x18] sm:$0xf]
        %v1862 = vld [vmem:[#allocation8 + $0x1c] sm:$0xf]
        %v1863 = vld [vmem:[#allocation8 + $0x20] sm:$0xf]
        %v1864 = vld [vmem:[#allocation8 + $0x24] sm:$0xf]
        %v1865 = vld [vmem:[#allocation8 + $0x28] sm:$0xf]
        %v1866 = vld [vmem:[#allocation8 + $0x2c] sm:$0xf]
        %v1867 = vld [vmem:[#allocation8 + $0x30] sm:$0xf]
        %v1868 = vld [vmem:[#allocation8 + $0x34] sm:$0xf]
        %v1869 = vld [vmem:[#allocation8 + $0x38] sm:$0xf]
        %v1870 = vld [vmem:[#allocation8 + $0x3c] sm:$0xf]
        %v1887 = vunpack.c.l.b16 %v1855
        %v1888 = vunpack.c.l.b16 %v1856
        %v1889 = vunpack.c.l.b16 %v1857
        %v1890 = vunpack.c.l.b16 %v1858
        %v1891 = vunpack.c.l.b16 %v1859
        %v1892 = vunpack.c.l.b16 %v1860
        %v1893 = vunpack.c.l.b16 %v1861
        %v1894 = vunpack.c.l.b16 %v1862
        %v1895 = vunpack.c.l.b16 %v1863
        %v1896 = vunpack.c.l.b16 %v1864
        %v1897 = vunpack.c.l.b16 %v1865
        %v1898 = vunpack.c.l.b16 %v1866
        %v1899 = vunpack.c.l.b16 %v1867
        %v1900 = vunpack.c.l.b16 %v1868
        %v1901 = vunpack.c.l.b16 %v1869
        %v1902 = vunpack.c.l.b16 %v1870
        %v1903 = vpack.c.b16 %v1888, %v1887
        %v1904 = vpack.c.b16 %v1890, %v1889
        %v1905 = vpack.c.b16 %v1892, %v1891
        %v1906 = vpack.c.b16 %v1894, %v1893
        %v1907 = vpack.c.b16 %v1896, %v1895
        %v1908 = vpack.c.b16 %v1898, %v1897
        %v1909 = vpack.c.b16 %v1900, %v1899
        %v1910 = vpack.c.b16 %v1902, %v1901
        %1919 = vmatpush.bf16.msra.mxu0 %v1910
        %1920 = vmatpush.bf16.msra.mxu0 %v1909
        %1921 = vmatpush.bf16.msra.mxu0 %v1908
        %1922 = vmatpush.bf16.msra.mxu0 %v1907
        %1923 = vmatpush.bf16.msra.mxu0 %v1906
        %1924 = vmatpush.bf16.msra.mxu0 %v1905
        %1925 = vmatpush.bf16.msra.mxu0 %v1904
        %1926 = vmatpush.bf16.msra.mxu0 %v1903
        %1927 = vmatmul.bf16.gmra.mxu0 %v1847
        %v1928 = vpop.f32.mrf.mxu0
        %v1929 = vadd.f32 0.0, %v1928
        %v1930 = vpop.f32.mrf.mxu0
        %v1931 = vadd.f32 0.0, %v1930
        %1932 = vmatmul.bf16.gmra.mxu0 %v1848
        %v1933 = vpop.f32.mrf.mxu0
        %v1934 = vadd.f32 0.0, %v1933
        %v1935 = vpop.f32.mrf.mxu0
        %v1936 = vadd.f32 0.0, %v1935
        %1937 = vmatmul.bf16.gmra.mxu0 %v1849
        %v1938 = vpop.f32.mrf.mxu0
        %v1939 = vadd.f32 0.0, %v1938
        %v1940 = vpop.f32.mrf.mxu0
        %v1941 = vadd.f32 0.0, %v1940
        %1942 = vmatmul.bf16.gmra.mxu0 %v1850
        %v1943 = vpop.f32.mrf.mxu0
        %v1944 = vadd.f32 0.0, %v1943
        %v1945 = vpop.f32.mrf.mxu0
        %v1946 = vadd.f32 0.0, %v1945
        %1947 = vmatmul.bf16.gmra.mxu0 %v1851
        %v1948 = vpop.f32.mrf.mxu0
        %v1949 = vadd.f32 0.0, %v1948
        %v1950 = vpop.f32.mrf.mxu0
        %v1951 = vadd.f32 0.0, %v1950
        %1952 = vmatmul.bf16.gmra.mxu0 %v1852
        %v1953 = vpop.f32.mrf.mxu0
        %v1954 = vadd.f32 0.0, %v1953
        %v1955 = vpop.f32.mrf.mxu0
        %v1956 = vadd.f32 0.0, %v1955
        %1957 = vmatmul.bf16.gmra.mxu0 %v1853
        %v1958 = vpop.f32.mrf.mxu0
        %v1959 = vadd.f32 0.0, %v1958
        %v1960 = vpop.f32.mrf.mxu0
        %v1961 = vadd.f32 0.0, %v1960
        %1962 = vmatmul.bf16.gmra.mxu0 %v1854
        %v1963 = vpop.f32.mrf.mxu0
        %v1964 = vadd.f32 0.0, %v1963
        %v1965 = vpop.f32.mrf.mxu0
        %v1966 = vadd.f32 0.0, %v1965
        %1967 = vdwg.mxu0
        %v1968 = vadd.f32 %v679, %v1929
        %v1969 = vadd.f32 %v680, %v1931
        %v1970 = vadd.f32 %v681, %v1934
        %v1971 = vadd.f32 %v682, %v1936
        %v1972 = vadd.f32 %v683, %v1939
        %v1973 = vadd.f32 %v684, %v1941
        %v1974 = vadd.f32 %v685, %v1944
        %v1975 = vadd.f32 %v686, %v1946
        %v1976 = vadd.f32 %v687, %v1949
        %v1977 = vadd.f32 %v688, %v1951
        %v1978 = vadd.f32 %v689, %v1954
        %v1979 = vadd.f32 %v690, %v1956
        %v1980 = vadd.f32 %v691, %v1959
        %v1981 = vadd.f32 %v692, %v1961
        %v1982 = vadd.f32 %v693, %v1964
        %v1983 = vadd.f32 %v694, %v1966
        %s1984 = scalar_lea.vmem %s4, 16
        %v1985 = vld [vmem:[%s1984] sm:$0xff]
        %v1986 = vld [vmem:[%s1984 + $0x8] sm:$0x1]
        %s1987 = scalar_lea.vmem %s5, 1
        %v1988 = vld [vmem:[%s1987] sm:$0x1]
        %v1989 = vperm.slane %v1985, 4
        %v1990 = vmul.f32 %v698, %v1989
        %v1991 = vmul.f32 %v699, %v1989
        %v1992 = vmul.f32 %v700, %v1989
        %v1993 = vmul.f32 %v701, %v1989
        %v1994 = vmul.f32 %v702, %v1989
        %v1995 = vmul.f32 %v703, %v1989
        %v1996 = vmul.f32 %v704, %v1989
        %v1997 = vmul.f32 %v705, %v1989
        %v1998 = vmul.f32 %v706, %v1989
        %v1999 = vmul.f32 %v707, %v1989
        %v2000 = vmul.f32 %v708, %v1989
        %v2001 = vmul.f32 %v709, %v1989
        %v2002 = vmul.f32 %v710, %v1989
        %v2003 = vmul.f32 %v711, %v1989
        %v2004 = vmul.f32 %v712, %v1989
        %v2005 = vmul.f32 %v713, %v1989
        %v2007 = vperm.slane %v1988, 0
        %v2009 = vadd.f32 %v1990, %v2007
        %v2010 = vadd.f32 %v1991, %v2007
        %v2011 = vadd.f32 %v1992, %v2007
        %v2012 = vadd.f32 %v1993, %v2007
        %v2013 = vadd.f32 %v1994, %v2007
        %v2014 = vadd.f32 %v1995, %v2007
        %v2015 = vadd.f32 %v1996, %v2007
        %v2016 = vadd.f32 %v1997, %v2007
        %v2017 = vadd.f32 %v1998, %v2007
        %v2018 = vadd.f32 %v1999, %v2007
        %v2019 = vadd.f32 %v2000, %v2007
        %v2020 = vadd.f32 %v2001, %v2007
        %v2021 = vadd.f32 %v2002, %v2007
        %v2022 = vadd.f32 %v2003, %v2007
        %v2023 = vadd.f32 %v2004, %v2007
        %v2024 = vadd.f32 %v2005, %v2007
        %v2025 = vperm.slane %v1985, 0
        %v2026 = vmul.f32 %v750, %v2025
        %v2027 = vmul.f32 %v751, %v2025
        %v2028 = vmul.f32 %v752, %v2025
        %v2029 = vmul.f32 %v753, %v2025
        %v2030 = vmul.f32 %v754, %v2025
        %v2031 = vmul.f32 %v755, %v2025
        %v2032 = vmul.f32 %v756, %v2025
        %v2033 = vmul.f32 %v757, %v2025
        %v2034 = vmul.f32 %v758, %v2025
        %v2035 = vmul.f32 %v759, %v2025
        %v2036 = vmul.f32 %v760, %v2025
        %v2037 = vmul.f32 %v761, %v2025
        %v2038 = vmul.f32 %v762, %v2025
        %v2039 = vmul.f32 %v763, %v2025
        %v2040 = vmul.f32 %v764, %v2025
        %v2041 = vmul.f32 %v765, %v2025
        %v2042 = vadd.f32 %v2009, %v2026
        %v2043 = vadd.f32 %v2010, %v2027
        %v2044 = vadd.f32 %v2011, %v2028
        %v2045 = vadd.f32 %v2012, %v2029
        %v2046 = vadd.f32 %v2013, %v2030
        %v2047 = vadd.f32 %v2014, %v2031
        %v2048 = vadd.f32 %v2015, %v2032
        %v2049 = vadd.f32 %v2016, %v2033
        %v2050 = vadd.f32 %v2017, %v2034
        %v2051 = vadd.f32 %v2018, %v2035
        %v2052 = vadd.f32 %v2019, %v2036
        %v2053 = vadd.f32 %v2020, %v2037
        %v2054 = vadd.f32 %v2021, %v2038
        %v2055 = vadd.f32 %v2022, %v2039
        %v2056 = vadd.f32 %v2023, %v2040
        %v2057 = vadd.f32 %v2024, %v2041
        %v2058 = vperm.slane %v1985, 1
        %v2059 = vmul.f32 %v799, %v2058
        %v2060 = vmul.f32 %v800, %v2058
        %v2061 = vmul.f32 %v801, %v2058
        %v2062 = vmul.f32 %v802, %v2058
        %v2063 = vmul.f32 %v803, %v2058
        %v2064 = vmul.f32 %v804, %v2058
        %v2065 = vmul.f32 %v805, %v2058
        %v2066 = vmul.f32 %v806, %v2058
        %v2067 = vmul.f32 %v807, %v2058
        %v2068 = vmul.f32 %v808, %v2058
        %v2069 = vmul.f32 %v809, %v2058
        %v2070 = vmul.f32 %v810, %v2058
        %v2071 = vmul.f32 %v811, %v2058
        %v2072 = vmul.f32 %v812, %v2058
        %v2073 = vmul.f32 %v813, %v2058
        %v2074 = vmul.f32 %v814, %v2058
        %v2075 = vadd.f32 %v2042, %v2059
        %v2076 = vadd.f32 %v2043, %v2060
        %v2077 = vadd.f32 %v2044, %v2061
        %v2078 = vadd.f32 %v2045, %v2062
        %v2079 = vadd.f32 %v2046, %v2063
        %v2080 = vadd.f32 %v2047, %v2064
        %v2081 = vadd.f32 %v2048, %v2065
        %v2082 = vadd.f32 %v2049, %v2066
        %v2083 = vadd.f32 %v2050, %v2067
        %v2084 = vadd.f32 %v2051, %v2068
        %v2085 = vadd.f32 %v2052, %v2069
        %v2086 = vadd.f32 %v2053, %v2070
        %v2087 = vadd.f32 %v2054, %v2071
        %v2088 = vadd.f32 %v2055, %v2072
        %v2089 = vadd.f32 %v2056, %v2073
        %v2090 = vadd.f32 %v2057, %v2074
        %v2091 = vperm.slane %v1985, 2
        %v2092 = vmul.f32 %v848, %v2091
        %v2093 = vmul.f32 %v849, %v2091
        %v2094 = vmul.f32 %v850, %v2091
        %v2095 = vmul.f32 %v851, %v2091
        %v2096 = vmul.f32 %v852, %v2091
        %v2097 = vmul.f32 %v853, %v2091
        %v2098 = vmul.f32 %v854, %v2091
        %v2099 = vmul.f32 %v855, %v2091
        %v2100 = vmul.f32 %v856, %v2091
        %v2101 = vmul.f32 %v857, %v2091
        %v2102 = vmul.f32 %v858, %v2091
        %v2103 = vmul.f32 %v859, %v2091
        %v2104 = vmul.f32 %v860, %v2091
        %v2105 = vmul.f32 %v861, %v2091
        %v2106 = vmul.f32 %v862, %v2091
        %v2107 = vmul.f32 %v863, %v2091
        %v2108 = vadd.f32 %v2075, %v2092
        %v2109 = vadd.f32 %v2076, %v2093
        %v2110 = vadd.f32 %v2077, %v2094
        %v2111 = vadd.f32 %v2078, %v2095
        %v2112 = vadd.f32 %v2079, %v2096
        %v2113 = vadd.f32 %v2080, %v2097
        %v2114 = vadd.f32 %v2081, %v2098
        %v2115 = vadd.f32 %v2082, %v2099
        %v2116 = vadd.f32 %v2083, %v2100
        %v2117 = vadd.f32 %v2084, %v2101
        %v2118 = vadd.f32 %v2085, %v2102
        %v2119 = vadd.f32 %v2086, %v2103
        %v2120 = vadd.f32 %v2087, %v2104
        %v2121 = vadd.f32 %v2088, %v2105
        %v2122 = vadd.f32 %v2089, %v2106
        %v2123 = vadd.f32 %v2090, %v2107
        %v2124 = vperm.slane %v1985, 3
        %v2125 = vmul.f32 %v897, %v2124
        %v2126 = vmul.f32 %v898, %v2124
        %v2127 = vmul.f32 %v899, %v2124
        %v2128 = vmul.f32 %v900, %v2124
        %v2129 = vmul.f32 %v901, %v2124
        %v2130 = vmul.f32 %v902, %v2124
        %v2131 = vmul.f32 %v903, %v2124
        %v2132 = vmul.f32 %v904, %v2124
        %v2133 = vmul.f32 %v905, %v2124
        %v2134 = vmul.f32 %v906, %v2124
        %v2135 = vmul.f32 %v907, %v2124
        %v2136 = vmul.f32 %v908, %v2124
        %v2137 = vmul.f32 %v909, %v2124
        %v2138 = vmul.f32 %v910, %v2124
        %v2139 = vmul.f32 %v911, %v2124
        %v2140 = vmul.f32 %v912, %v2124
        %v2141 = vadd.f32 %v2108, %v2125
        %v2142 = vadd.f32 %v2109, %v2126
        %v2143 = vadd.f32 %v2110, %v2127
        %v2144 = vadd.f32 %v2111, %v2128
        %v2145 = vadd.f32 %v2112, %v2129
        %v2146 = vadd.f32 %v2113, %v2130
        %v2147 = vadd.f32 %v2114, %v2131
        %v2148 = vadd.f32 %v2115, %v2132
        %v2149 = vadd.f32 %v2116, %v2133
        %v2150 = vadd.f32 %v2117, %v2134
        %v2151 = vadd.f32 %v2118, %v2135
        %v2152 = vadd.f32 %v2119, %v2136
        %v2153 = vadd.f32 %v2120, %v2137
        %v2154 = vadd.f32 %v2121, %v2138
        %v2155 = vadd.f32 %v2122, %v2139
        %v2156 = vadd.f32 %v2123, %v2140
        %v2157 = vperm.slane %v1985, 5
        %v2158 = vmul.f32 %v946, %v2157
        %v2159 = vmul.f32 %v947, %v2157
        %v2160 = vmul.f32 %v948, %v2157
        %v2161 = vmul.f32 %v949, %v2157
        %v2162 = vmul.f32 %v950, %v2157
        %v2163 = vmul.f32 %v951, %v2157
        %v2164 = vmul.f32 %v952, %v2157
        %v2165 = vmul.f32 %v953, %v2157
        %v2166 = vmul.f32 %v954, %v2157
        %v2167 = vmul.f32 %v955, %v2157
        %v2168 = vmul.f32 %v956, %v2157
        %v2169 = vmul.f32 %v957, %v2157
        %v2170 = vmul.f32 %v958, %v2157
        %v2171 = vmul.f32 %v959, %v2157
        %v2172 = vmul.f32 %v960, %v2157
        %v2173 = vmul.f32 %v961, %v2157
        %v2174 = vadd.f32 %v2141, %v2158
        %v2175 = vadd.f32 %v2142, %v2159
        %v2176 = vadd.f32 %v2143, %v2160
        %v2177 = vadd.f32 %v2144, %v2161
        %v2178 = vadd.f32 %v2145, %v2162
        %v2179 = vadd.f32 %v2146, %v2163
        %v2180 = vadd.f32 %v2147, %v2164
        %v2181 = vadd.f32 %v2148, %v2165
        %v2182 = vadd.f32 %v2149, %v2166
        %v2183 = vadd.f32 %v2150, %v2167
        %v2184 = vadd.f32 %v2151, %v2168
        %v2185 = vadd.f32 %v2152, %v2169
        %v2186 = vadd.f32 %v2153, %v2170
        %v2187 = vadd.f32 %v2154, %v2171
        %v2188 = vadd.f32 %v2155, %v2172
        %v2189 = vadd.f32 %v2156, %v2173
        %v2190 = vperm.slane %v1985, 6
        %v2191 = vmul.f32 %v996, %v2190
        %v2192 = vmul.f32 %v997, %v2190
        %v2193 = vmul.f32 %v998, %v2190
        %v2194 = vmul.f32 %v999, %v2190
        %v2195 = vmul.f32 %v1000, %v2190
        %v2196 = vmul.f32 %v1001, %v2190
        %v2197 = vmul.f32 %v1002, %v2190
        %v2198 = vmul.f32 %v1003, %v2190
        %v2199 = vmul.f32 %v1004, %v2190
        %v2200 = vmul.f32 %v1005, %v2190
        %v2201 = vmul.f32 %v1006, %v2190
        %v2202 = vmul.f32 %v1007, %v2190
        %v2203 = vmul.f32 %v1008, %v2190
        %v2204 = vmul.f32 %v1009, %v2190
        %v2205 = vmul.f32 %v1010, %v2190
        %v2206 = vmul.f32 %v1011, %v2190
        %v2207 = vadd.f32 %v2174, %v2191
        %v2208 = vadd.f32 %v2175, %v2192
        %v2209 = vadd.f32 %v2176, %v2193
        %v2210 = vadd.f32 %v2177, %v2194
        %v2211 = vadd.f32 %v2178, %v2195
        %v2212 = vadd.f32 %v2179, %v2196
        %v2213 = vadd.f32 %v2180, %v2197
        %v2214 = vadd.f32 %v2181, %v2198
        %v2215 = vadd.f32 %v2182, %v2199
        %v2216 = vadd.f32 %v2183, %v2200
        %v2217 = vadd.f32 %v2184, %v2201
        %v2218 = vadd.f32 %v2185, %v2202
        %v2219 = vadd.f32 %v2186, %v2203
        %v2220 = vadd.f32 %v2187, %v2204
        %v2221 = vadd.f32 %v2188, %v2205
        %v2222 = vadd.f32 %v2189, %v2206
        %v2223 = vperm.slane %v1985, 7
        %v2224 = vmul.f32 %v1045, %v2223
        %v2225 = vmul.f32 %v1046, %v2223
        %v2226 = vmul.f32 %v1047, %v2223
        %v2227 = vmul.f32 %v1048, %v2223
        %v2228 = vmul.f32 %v1049, %v2223
        %v2229 = vmul.f32 %v1050, %v2223
        %v2230 = vmul.f32 %v1051, %v2223
        %v2231 = vmul.f32 %v1052, %v2223
        %v2232 = vmul.f32 %v1053, %v2223
        %v2233 = vmul.f32 %v1054, %v2223
        %v2234 = vmul.f32 %v1055, %v2223
        %v2235 = vmul.f32 %v1056, %v2223
        %v2236 = vmul.f32 %v1057, %v2223
        %v2237 = vmul.f32 %v1058, %v2223
        %v2238 = vmul.f32 %v1059, %v2223
        %v2239 = vmul.f32 %v1060, %v2223
        %v2240 = vadd.f32 %v2207, %v2224
        %v2241 = vadd.f32 %v2208, %v2225
        %v2242 = vadd.f32 %v2209, %v2226
        %v2243 = vadd.f32 %v2210, %v2227
        %v2244 = vadd.f32 %v2211, %v2228
        %v2245 = vadd.f32 %v2212, %v2229
        %v2246 = vadd.f32 %v2213, %v2230
        %v2247 = vadd.f32 %v2214, %v2231
        %v2248 = vadd.f32 %v2215, %v2232
        %v2249 = vadd.f32 %v2216, %v2233
        %v2250 = vadd.f32 %v2217, %v2234
        %v2251 = vadd.f32 %v2218, %v2235
        %v2252 = vadd.f32 %v2219, %v2236
        %v2253 = vadd.f32 %v2220, %v2237
        %v2254 = vadd.f32 %v2221, %v2238
        %v2255 = vadd.f32 %v2222, %v2239
        %v2256 = vperm.slane %v1986, 0
        %v2257 = vmul.f32 %v1094, %v2256
        %v2258 = vmul.f32 %v1095, %v2256
        %v2259 = vmul.f32 %v1096, %v2256
        %v2260 = vmul.f32 %v1097, %v2256
        %v2261 = vmul.f32 %v1098, %v2256
        %v2262 = vmul.f32 %v1099, %v2256
        %v2263 = vmul.f32 %v1100, %v2256
        %v2264 = vmul.f32 %v1101, %v2256
        %v2265 = vmul.f32 %v1102, %v2256
        %v2266 = vmul.f32 %v1103, %v2256
        %v2267 = vmul.f32 %v1104, %v2256
        %v2268 = vmul.f32 %v1105, %v2256
        %v2269 = vmul.f32 %v1106, %v2256
        %v2270 = vmul.f32 %v1107, %v2256
        %v2271 = vmul.f32 %v1108, %v2256
        %v2272 = vmul.f32 %v1109, %v2256
        %v2273 = vadd.f32 %v2240, %v2257
        %v2274 = vadd.f32 %v2241, %v2258
        %v2275 = vadd.f32 %v2242, %v2259
        %v2276 = vadd.f32 %v2243, %v2260
        %v2277 = vadd.f32 %v2244, %v2261
        %v2278 = vadd.f32 %v2245, %v2262
        %v2279 = vadd.f32 %v2246, %v2263
        %v2280 = vadd.f32 %v2247, %v2264
        %v2281 = vadd.f32 %v2248, %v2265
        %v2282 = vadd.f32 %v2249, %v2266
        %v2283 = vadd.f32 %v2250, %v2267
        %v2284 = vadd.f32 %v2251, %v2268
        %v2285 = vadd.f32 %v2252, %v2269
        %v2286 = vadd.f32 %v2253, %v2270
        %v2287 = vadd.f32 %v2254, %v2271
        %v2288 = vadd.f32 %v2255, %v2272
        %v2289 = vmul.f32 %v2273, 0.5
        %v2290 = vmul.f32 %v2274, 0.5
        %v2291 = vmul.f32 %v2275, 0.5
        %v2292 = vmul.f32 %v2276, 0.5
        %v2293 = vmul.f32 %v2277, 0.5
        %v2294 = vmul.f32 %v2278, 0.5
        %v2295 = vmul.f32 %v2279, 0.5
        %v2296 = vmul.f32 %v2280, 0.5
        %v2297 = vmul.f32 %v2281, 0.5
        %v2298 = vmul.f32 %v2282, 0.5
        %v2299 = vmul.f32 %v2283, 0.5
        %v2300 = vmul.f32 %v2284, 0.5
        %v2301 = vmul.f32 %v2285, 0.5
        %v2302 = vmul.f32 %v2286, 0.5
        %v2303 = vmul.f32 %v2287, 0.5
        %v2304 = vmul.f32 %v2288, 0.5
        %v2305 = vmul.f32 %v2273, 0.70710677
        %v2306 = vmul.f32 %v2274, 0.70710677
        %v2307 = vmul.f32 %v2275, 0.70710677
        %v2308 = vmul.f32 %v2276, 0.70710677
        %v2309 = vmul.f32 %v2277, 0.70710677
        %v2310 = vmul.f32 %v2278, 0.70710677
        %v2311 = vmul.f32 %v2279, 0.70710677
        %v2312 = vmul.f32 %v2280, 0.70710677
        %v2313 = vmul.f32 %v2281, 0.70710677
        %v2314 = vmul.f32 %v2282, 0.70710677
        %v2315 = vmul.f32 %v2283, 0.70710677
        %v2316 = vmul.f32 %v2284, 0.70710677
        %v2317 = vmul.f32 %v2285, 0.70710677
        %v2318 = vmul.f32 %v2286, 0.70710677
        %v2319 = vmul.f32 %v2287, 0.70710677
        %v2320 = vmul.f32 %v2288, 0.70710677
        %v2321 = vmul.f32 %v2305, %v2305
        %v2322 = vmin.f32 16.0, %v2321
        %v2323 = vmul.f32 %v2322, 2.1237322e-06
        %v2324 = vadd.f32 %v2323, 0.00028619796
        %v2325 = vmul.f32 %v2322, %v2324
        %v2326 = vadd.f32 %v2325, 0.0036580483
        %v2327 = vmul.f32 %v2322, %v2326
        %v2328 = vadd.f32 %v2327, 0.05243302
        %v2329 = vmul.f32 %v2322, %v2328
        %v2330 = vadd.f32 %v2329, 0.18741608
        %v2331 = vmul.f32 %v2322, %v2330
        %v2332 = vadd.f32 %v2331, 1.1283791
        %v2333 = vmul.f32 %v2305, %v2332
        %v2334 = vmul.f32 %v2322, 3.8918573e-05
        %v2335 = vadd.f32 %v2334, 0.001143296
        %v2336 = vmul.f32 %v2322, %v2335
        %v2337 = vadd.f32 %v2336, 0.014752088
        %v2338 = vmul.f32 %v2322, %v2337
        %v2339 = vadd.f32 %v2338, 0.112945676
        %v2340 = vmul.f32 %v2322, %v2339
        %v2341 = vadd.f32 %v2340, 0.4994258
        %v2342 = vmul.f32 %v2322, %v2341
        %v2343 = vadd.f32 %v2342, 1.0
        %v2344 = vrcp.pop %v2343
        %v2345 = vmul.f32 %v2343, %v2344
        %v2346 = vsub.f32 1.0, %v2345
        %v2347 = vmul.f32 %v2344, %v2346
        %v2348 = vadd.f32 %v2344, %v2347
        %vm2349 = vweird.f32 %v2343
        %vm2350 = vweird.f32 %v2344
        %vm2351 = vmor %vm2349, %vm2350
        %v2352 = vsel %vm2351, %v2344, %v2348
        %v2353 = vand.u32 2147483647, %v2343
        %vm2354 = vcmp.eq.f32.partialorder %v2353, 8.507059e+37
        %v2355 = vand.u32 %v2343, 2147483648
        %v2356 = vor.u32 1.1754944e-38, %v2355
        %v2357 = vsel %vm2354, %v2356, %v2352
        %v2358 = vmul.f32 %v2333, %v2357
        %v2359 = vmin.f32 %v2358, 1.0
        %v2360 = vmax.f32 %v2359, -1.0
        %v2361 = vmul.f32 %v2306, %v2306
        %v2362 = vmin.f32 16.0, %v2361
        %v2363 = vmul.f32 %v2362, 2.1237322e-06
        %v2364 = vadd.f32 %v2363, 0.00028619796
        %v2365 = vmul.f32 %v2362, %v2364
        %v2366 = vadd.f32 %v2365, 0.0036580483
        %v2367 = vmul.f32 %v2362, %v2366
        %v2368 = vadd.f32 %v2367, 0.05243302
        %v2369 = vmul.f32 %v2362, %v2368
        %v2370 = vadd.f32 %v2369, 0.18741608
        %v2371 = vmul.f32 %v2362, %v2370
        %v2372 = vadd.f32 %v2371, 1.1283791
        %v2373 = vmul.f32 %v2306, %v2372
        %v2374 = vmul.f32 %v2362, 3.8918573e-05
        %v2375 = vadd.f32 %v2374, 0.001143296
        %v2376 = vmul.f32 %v2362, %v2375
        %v2377 = vadd.f32 %v2376, 0.014752088
        %v2378 = vmul.f32 %v2362, %v2377
        %v2379 = vadd.f32 %v2378, 0.112945676
        %v2380 = vmul.f32 %v2362, %v2379
        %v2381 = vadd.f32 %v2380, 0.4994258
        %v2382 = vmul.f32 %v2362, %v2381
        %v2383 = vadd.f32 %v2382, 1.0
        %v2384 = vrcp.pop %v2383
        %v2385 = vmul.f32 %v2383, %v2384
        %v2386 = vsub.f32 1.0, %v2385
        %v2387 = vmul.f32 %v2384, %v2386
        %v2388 = vadd.f32 %v2384, %v2387
        %vm2389 = vweird.f32 %v2383
        %vm2390 = vweird.f32 %v2384
        %vm2391 = vmor %vm2389, %vm2390
        %v2392 = vsel %vm2391, %v2384, %v2388
        %v2393 = vand.u32 2147483647, %v2383
        %vm2394 = vcmp.eq.f32.partialorder %v2393, 8.507059e+37
        %v2395 = vand.u32 %v2383, 2147483648
        %v2396 = vor.u32 1.1754944e-38, %v2395
        %v2397 = vsel %vm2394, %v2396, %v2392
        %v2398 = vmul.f32 %v2373, %v2397
        %v2399 = vmin.f32 %v2398, 1.0
        %v2400 = vmax.f32 %v2399, -1.0
        %v2401 = vmul.f32 %v2307, %v2307
        %v2402 = vmin.f32 16.0, %v2401
        %v2403 = vmul.f32 %v2402, 2.1237322e-06
        %v2404 = vadd.f32 %v2403, 0.00028619796
        %v2405 = vmul.f32 %v2402, %v2404
        %v2406 = vadd.f32 %v2405, 0.0036580483
        %v2407 = vmul.f32 %v2402, %v2406
        %v2408 = vadd.f32 %v2407, 0.05243302
        %v2409 = vmul.f32 %v2402, %v2408
        %v2410 = vadd.f32 %v2409, 0.18741608
        %v2411 = vmul.f32 %v2402, %v2410
        %v2412 = vadd.f32 %v2411, 1.1283791
        %v2413 = vmul.f32 %v2307, %v2412
        %v2414 = vmul.f32 %v2402, 3.8918573e-05
        %v2415 = vadd.f32 %v2414, 0.001143296
        %v2416 = vmul.f32 %v2402, %v2415
        %v2417 = vadd.f32 %v2416, 0.014752088
        %v2418 = vmul.f32 %v2402, %v2417
        %v2419 = vadd.f32 %v2418, 0.112945676
        %v2420 = vmul.f32 %v2402, %v2419
        %v2421 = vadd.f32 %v2420, 0.4994258
        %v2422 = vmul.f32 %v2402, %v2421
        %v2423 = vadd.f32 %v2422, 1.0
        %v2424 = vrcp.pop %v2423
        %v2425 = vmul.f32 %v2423, %v2424
        %v2426 = vsub.f32 1.0, %v2425
        %v2427 = vmul.f32 %v2424, %v2426
        %v2428 = vadd.f32 %v2424, %v2427
        %vm2429 = vweird.f32 %v2423
        %vm2430 = vweird.f32 %v2424
        %vm2431 = vmor %vm2429, %vm2430
        %v2432 = vsel %vm2431, %v2424, %v2428
        %v2433 = vand.u32 2147483647, %v2423
        %vm2434 = vcmp.eq.f32.partialorder %v2433, 8.507059e+37
        %v2435 = vand.u32 %v2423, 2147483648
        %v2436 = vor.u32 1.1754944e-38, %v2435
        %v2437 = vsel %vm2434, %v2436, %v2432
        %v2438 = vmul.f32 %v2413, %v2437
        %v2439 = vmin.f32 %v2438, 1.0
        %v2440 = vmax.f32 %v2439, -1.0
        %v2441 = vmul.f32 %v2308, %v2308
        %v2442 = vmin.f32 16.0, %v2441
        %v2443 = vmul.f32 %v2442, 2.1237322e-06
        %v2444 = vadd.f32 %v2443, 0.00028619796
        %v2445 = vmul.f32 %v2442, %v2444
        %v2446 = vadd.f32 %v2445, 0.0036580483
        %v2447 = vmul.f32 %v2442, %v2446
        %v2448 = vadd.f32 %v2447, 0.05243302
        %v2449 = vmul.f32 %v2442, %v2448
        %v2450 = vadd.f32 %v2449, 0.18741608
        %v2451 = vmul.f32 %v2442, %v2450
        %v2452 = vadd.f32 %v2451, 1.1283791
        %v2453 = vmul.f32 %v2308, %v2452
        %v2454 = vmul.f32 %v2442, 3.8918573e-05
        %v2455 = vadd.f32 %v2454, 0.001143296
        %v2456 = vmul.f32 %v2442, %v2455
        %v2457 = vadd.f32 %v2456, 0.014752088
        %v2458 = vmul.f32 %v2442, %v2457
        %v2459 = vadd.f32 %v2458, 0.112945676
        %v2460 = vmul.f32 %v2442, %v2459
        %v2461 = vadd.f32 %v2460, 0.4994258
        %v2462 = vmul.f32 %v2442, %v2461
        %v2463 = vadd.f32 %v2462, 1.0
        %v2464 = vrcp.pop %v2463
        %v2465 = vmul.f32 %v2463, %v2464
        %v2466 = vsub.f32 1.0, %v2465
        %v2467 = vmul.f32 %v2464, %v2466
        %v2468 = vadd.f32 %v2464, %v2467
        %vm2469 = vweird.f32 %v2463
        %vm2470 = vweird.f32 %v2464
        %vm2471 = vmor %vm2469, %vm2470
        %v2472 = vsel %vm2471, %v2464, %v2468
        %v2473 = vand.u32 2147483647, %v2463
        %vm2474 = vcmp.eq.f32.partialorder %v2473, 8.507059e+37
        %v2475 = vand.u32 %v2463, 2147483648
        %v2476 = vor.u32 1.1754944e-38, %v2475
        %v2477 = vsel %vm2474, %v2476, %v2472
        %v2478 = vmul.f32 %v2453, %v2477
        %v2479 = vmin.f32 %v2478, 1.0
        %v2480 = vmax.f32 %v2479, -1.0
        %v2481 = vmul.f32 %v2309, %v2309
        %v2482 = vmin.f32 16.0, %v2481
        %v2483 = vmul.f32 %v2482, 2.1237322e-06
        %v2484 = vadd.f32 %v2483, 0.00028619796
        %v2485 = vmul.f32 %v2482, %v2484
        %v2486 = vadd.f32 %v2485, 0.0036580483
        %v2487 = vmul.f32 %v2482, %v2486
        %v2488 = vadd.f32 %v2487, 0.05243302
        %v2489 = vmul.f32 %v2482, %v2488
        %v2490 = vadd.f32 %v2489, 0.18741608
        %v2491 = vmul.f32 %v2482, %v2490
        %v2492 = vadd.f32 %v2491, 1.1283791
        %v2493 = vmul.f32 %v2309, %v2492
        %v2494 = vmul.f32 %v2482, 3.8918573e-05
        %v2495 = vadd.f32 %v2494, 0.001143296
        %v2496 = vmul.f32 %v2482, %v2495
        %v2497 = vadd.f32 %v2496, 0.014752088
        %v2498 = vmul.f32 %v2482, %v2497
        %v2499 = vadd.f32 %v2498, 0.112945676
        %v2500 = vmul.f32 %v2482, %v2499
        %v2501 = vadd.f32 %v2500, 0.4994258
        %v2502 = vmul.f32 %v2482, %v2501
        %v2503 = vadd.f32 %v2502, 1.0
        %v2504 = vrcp.pop %v2503
        %v2505 = vmul.f32 %v2503, %v2504
        %v2506 = vsub.f32 1.0, %v2505
        %v2507 = vmul.f32 %v2504, %v2506
        %v2508 = vadd.f32 %v2504, %v2507
        %vm2509 = vweird.f32 %v2503
        %vm2510 = vweird.f32 %v2504
        %vm2511 = vmor %vm2509, %vm2510
        %v2512 = vsel %vm2511, %v2504, %v2508
        %v2513 = vand.u32 2147483647, %v2503
        %vm2514 = vcmp.eq.f32.partialorder %v2513, 8.507059e+37
        %v2515 = vand.u32 %v2503, 2147483648
        %v2516 = vor.u32 1.1754944e-38, %v2515
        %v2517 = vsel %vm2514, %v2516, %v2512
        %v2518 = vmul.f32 %v2493, %v2517
        %v2519 = vmin.f32 %v2518, 1.0
        %v2520 = vmax.f32 %v2519, -1.0
        %v2521 = vmul.f32 %v2310, %v2310
        %v2522 = vmin.f32 16.0, %v2521
        %v2523 = vmul.f32 %v2522, 2.1237322e-06
        %v2524 = vadd.f32 %v2523, 0.00028619796
        %v2525 = vmul.f32 %v2522, %v2524
        %v2526 = vadd.f32 %v2525, 0.0036580483
        %v2527 = vmul.f32 %v2522, %v2526
        %v2528 = vadd.f32 %v2527, 0.05243302
        %v2529 = vmul.f32 %v2522, %v2528
        %v2530 = vadd.f32 %v2529, 0.18741608
        %v2531 = vmul.f32 %v2522, %v2530
        %v2532 = vadd.f32 %v2531, 1.1283791
        %v2533 = vmul.f32 %v2310, %v2532
        %v2534 = vmul.f32 %v2522, 3.8918573e-05
        %v2535 = vadd.f32 %v2534, 0.001143296
        %v2536 = vmul.f32 %v2522, %v2535
        %v2537 = vadd.f32 %v2536, 0.014752088
        %v2538 = vmul.f32 %v2522, %v2537
        %v2539 = vadd.f32 %v2538, 0.112945676
        %v2540 = vmul.f32 %v2522, %v2539
        %v2541 = vadd.f32 %v2540, 0.4994258
        %v2542 = vmul.f32 %v2522, %v2541
        %v2543 = vadd.f32 %v2542, 1.0
        %v2544 = vrcp.pop %v2543
        %v2545 = vmul.f32 %v2543, %v2544
        %v2546 = vsub.f32 1.0, %v2545
        %v2547 = vmul.f32 %v2544, %v2546
        %v2548 = vadd.f32 %v2544, %v2547
        %vm2549 = vweird.f32 %v2543
        %vm2550 = vweird.f32 %v2544
        %vm2551 = vmor %vm2549, %vm2550
        %v2552 = vsel %vm2551, %v2544, %v2548
        %v2553 = vand.u32 2147483647, %v2543
        %vm2554 = vcmp.eq.f32.partialorder %v2553, 8.507059e+37
        %v2555 = vand.u32 %v2543, 2147483648
        %v2556 = vor.u32 1.1754944e-38, %v2555
        %v2557 = vsel %vm2554, %v2556, %v2552
        %v2558 = vmul.f32 %v2533, %v2557
        %v2559 = vmin.f32 %v2558, 1.0
        %v2560 = vmax.f32 %v2559, -1.0
        %v2561 = vmul.f32 %v2311, %v2311
        %v2562 = vmin.f32 16.0, %v2561
        %v2563 = vmul.f32 %v2562, 2.1237322e-06
        %v2564 = vadd.f32 %v2563, 0.00028619796
        %v2565 = vmul.f32 %v2562, %v2564
        %v2566 = vadd.f32 %v2565, 0.0036580483
        %v2567 = vmul.f32 %v2562, %v2566
        %v2568 = vadd.f32 %v2567, 0.05243302
        %v2569 = vmul.f32 %v2562, %v2568
        %v2570 = vadd.f32 %v2569, 0.18741608
        %v2571 = vmul.f32 %v2562, %v2570
        %v2572 = vadd.f32 %v2571, 1.1283791
        %v2573 = vmul.f32 %v2311, %v2572
        %v2574 = vmul.f32 %v2562, 3.8918573e-05
        %v2575 = vadd.f32 %v2574, 0.001143296
        %v2576 = vmul.f32 %v2562, %v2575
        %v2577 = vadd.f32 %v2576, 0.014752088
        %v2578 = vmul.f32 %v2562, %v2577
        %v2579 = vadd.f32 %v2578, 0.112945676
        %v2580 = vmul.f32 %v2562, %v2579
        %v2581 = vadd.f32 %v2580, 0.4994258
        %v2582 = vmul.f32 %v2562, %v2581
        %v2583 = vadd.f32 %v2582, 1.0
        %v2584 = vrcp.pop %v2583
        %v2585 = vmul.f32 %v2583, %v2584
        %v2586 = vsub.f32 1.0, %v2585
        %v2587 = vmul.f32 %v2584, %v2586
        %v2588 = vadd.f32 %v2584, %v2587
        %vm2589 = vweird.f32 %v2583
        %vm2590 = vweird.f32 %v2584
        %vm2591 = vmor %vm2589, %vm2590
        %v2592 = vsel %vm2591, %v2584, %v2588
        %v2593 = vand.u32 2147483647, %v2583
        %vm2594 = vcmp.eq.f32.partialorder %v2593, 8.507059e+37
        %v2595 = vand.u32 %v2583, 2147483648
        %v2596 = vor.u32 1.1754944e-38, %v2595
        %v2597 = vsel %vm2594, %v2596, %v2592
        %v2598 = vmul.f32 %v2573, %v2597
        %v2599 = vmin.f32 %v2598, 1.0
        %v2600 = vmax.f32 %v2599, -1.0
        %v2601 = vmul.f32 %v2312, %v2312
        %v2602 = vmin.f32 16.0, %v2601
        %v2603 = vmul.f32 %v2602, 2.1237322e-06
        %v2604 = vadd.f32 %v2603, 0.00028619796
        %v2605 = vmul.f32 %v2602, %v2604
        %v2606 = vadd.f32 %v2605, 0.0036580483
        %v2607 = vmul.f32 %v2602, %v2606
        %v2608 = vadd.f32 %v2607, 0.05243302
        %v2609 = vmul.f32 %v2602, %v2608
        %v2610 = vadd.f32 %v2609, 0.18741608
        %v2611 = vmul.f32 %v2602, %v2610
        %v2612 = vadd.f32 %v2611, 1.1283791
        %v2613 = vmul.f32 %v2312, %v2612
        %v2614 = vmul.f32 %v2602, 3.8918573e-05
        %v2615 = vadd.f32 %v2614, 0.001143296
        %v2616 = vmul.f32 %v2602, %v2615
        %v2617 = vadd.f32 %v2616, 0.014752088
        %v2618 = vmul.f32 %v2602, %v2617
        %v2619 = vadd.f32 %v2618, 0.112945676
        %v2620 = vmul.f32 %v2602, %v2619
        %v2621 = vadd.f32 %v2620, 0.4994258
        %v2622 = vmul.f32 %v2602, %v2621
        %v2623 = vadd.f32 %v2622, 1.0
        %v2624 = vrcp.pop %v2623
        %v2625 = vmul.f32 %v2623, %v2624
        %v2626 = vsub.f32 1.0, %v2625
        %v2627 = vmul.f32 %v2624, %v2626
        %v2628 = vadd.f32 %v2624, %v2627
        %vm2629 = vweird.f32 %v2623
        %vm2630 = vweird.f32 %v2624
        %vm2631 = vmor %vm2629, %vm2630
        %v2632 = vsel %vm2631, %v2624, %v2628
        %v2633 = vand.u32 2147483647, %v2623
        %vm2634 = vcmp.eq.f32.partialorder %v2633, 8.507059e+37
        %v2635 = vand.u32 %v2623, 2147483648
        %v2636 = vor.u32 1.1754944e-38, %v2635
        %v2637 = vsel %vm2634, %v2636, %v2632
        %v2638 = vmul.f32 %v2613, %v2637
        %v2639 = vmin.f32 %v2638, 1.0
        %v2640 = vmax.f32 %v2639, -1.0
        %v2641 = vmul.f32 %v2313, %v2313
        %v2642 = vmin.f32 16.0, %v2641
        %v2643 = vmul.f32 %v2642, 2.1237322e-06
        %v2644 = vadd.f32 %v2643, 0.00028619796
        %v2645 = vmul.f32 %v2642, %v2644
        %v2646 = vadd.f32 %v2645, 0.0036580483
        %v2647 = vmul.f32 %v2642, %v2646
        %v2648 = vadd.f32 %v2647, 0.05243302
        %v2649 = vmul.f32 %v2642, %v2648
        %v2650 = vadd.f32 %v2649, 0.18741608
        %v2651 = vmul.f32 %v2642, %v2650
        %v2652 = vadd.f32 %v2651, 1.1283791
        %v2653 = vmul.f32 %v2313, %v2652
        %v2654 = vmul.f32 %v2642, 3.8918573e-05
        %v2655 = vadd.f32 %v2654, 0.001143296
        %v2656 = vmul.f32 %v2642, %v2655
        %v2657 = vadd.f32 %v2656, 0.014752088
        %v2658 = vmul.f32 %v2642, %v2657
        %v2659 = vadd.f32 %v2658, 0.112945676
        %v2660 = vmul.f32 %v2642, %v2659
        %v2661 = vadd.f32 %v2660, 0.4994258
        %v2662 = vmul.f32 %v2642, %v2661
        %v2663 = vadd.f32 %v2662, 1.0
        %v2664 = vrcp.pop %v2663
        %v2665 = vmul.f32 %v2663, %v2664
        %v2666 = vsub.f32 1.0, %v2665
        %v2667 = vmul.f32 %v2664, %v2666
        %v2668 = vadd.f32 %v2664, %v2667
        %vm2669 = vweird.f32 %v2663
        %vm2670 = vweird.f32 %v2664
        %vm2671 = vmor %vm2669, %vm2670
        %v2672 = vsel %vm2671, %v2664, %v2668
        %v2673 = vand.u32 2147483647, %v2663
        %vm2674 = vcmp.eq.f32.partialorder %v2673, 8.507059e+37
        %v2675 = vand.u32 %v2663, 2147483648
        %v2676 = vor.u32 1.1754944e-38, %v2675
        %v2677 = vsel %vm2674, %v2676, %v2672
        %v2678 = vmul.f32 %v2653, %v2677
        %v2679 = vmin.f32 %v2678, 1.0
        %v2680 = vmax.f32 %v2679, -1.0
        %v2681 = vmul.f32 %v2314, %v2314
        %v2682 = vmin.f32 16.0, %v2681
        %v2683 = vmul.f32 %v2682, 2.1237322e-06
        %v2684 = vadd.f32 %v2683, 0.00028619796
        %v2685 = vmul.f32 %v2682, %v2684
        %v2686 = vadd.f32 %v2685, 0.0036580483
        %v2687 = vmul.f32 %v2682, %v2686
        %v2688 = vadd.f32 %v2687, 0.05243302
        %v2689 = vmul.f32 %v2682, %v2688
        %v2690 = vadd.f32 %v2689, 0.18741608
        %v2691 = vmul.f32 %v2682, %v2690
        %v2692 = vadd.f32 %v2691, 1.1283791
        %v2693 = vmul.f32 %v2314, %v2692
        %v2694 = vmul.f32 %v2682, 3.8918573e-05
        %v2695 = vadd.f32 %v2694, 0.001143296
        %v2696 = vmul.f32 %v2682, %v2695
        %v2697 = vadd.f32 %v2696, 0.014752088
        %v2698 = vmul.f32 %v2682, %v2697
        %v2699 = vadd.f32 %v2698, 0.112945676
        %v2700 = vmul.f32 %v2682, %v2699
        %v2701 = vadd.f32 %v2700, 0.4994258
        %v2702 = vmul.f32 %v2682, %v2701
        %v2703 = vadd.f32 %v2702, 1.0
        %v2704 = vrcp.pop %v2703
        %v2705 = vmul.f32 %v2703, %v2704
        %v2706 = vsub.f32 1.0, %v2705
        %v2707 = vmul.f32 %v2704, %v2706
        %v2708 = vadd.f32 %v2704, %v2707
        %vm2709 = vweird.f32 %v2703
        %vm2710 = vweird.f32 %v2704
        %vm2711 = vmor %vm2709, %vm2710
        %v2712 = vsel %vm2711, %v2704, %v2708
        %v2713 = vand.u32 2147483647, %v2703
        %vm2714 = vcmp.eq.f32.partialorder %v2713, 8.507059e+37
        %v2715 = vand.u32 %v2703, 2147483648
        %v2716 = vor.u32 1.1754944e-38, %v2715
        %v2717 = vsel %vm2714, %v2716, %v2712
        %v2718 = vmul.f32 %v2693, %v2717
        %v2719 = vmin.f32 %v2718, 1.0
        %v2720 = vmax.f32 %v2719, -1.0
        %v2721 = vmul.f32 %v2315, %v2315
        %v2722 = vmin.f32 16.0, %v2721
        %v2723 = vmul.f32 %v2722, 2.1237322e-06
        %v2724 = vadd.f32 %v2723, 0.00028619796
        %v2725 = vmul.f32 %v2722, %v2724
        %v2726 = vadd.f32 %v2725, 0.0036580483
        %v2727 = vmul.f32 %v2722, %v2726
        %v2728 = vadd.f32 %v2727, 0.05243302
        %v2729 = vmul.f32 %v2722, %v2728
        %v2730 = vadd.f32 %v2729, 0.18741608
        %v2731 = vmul.f32 %v2722, %v2730
        %v2732 = vadd.f32 %v2731, 1.1283791
        %v2733 = vmul.f32 %v2315, %v2732
        %v2734 = vmul.f32 %v2722, 3.8918573e-05
        %v2735 = vadd.f32 %v2734, 0.001143296
        %v2736 = vmul.f32 %v2722, %v2735
        %v2737 = vadd.f32 %v2736, 0.014752088
        %v2738 = vmul.f32 %v2722, %v2737
        %v2739 = vadd.f32 %v2738, 0.112945676
        %v2740 = vmul.f32 %v2722, %v2739
        %v2741 = vadd.f32 %v2740, 0.4994258
        %v2742 = vmul.f32 %v2722, %v2741
        %v2743 = vadd.f32 %v2742, 1.0
        %v2744 = vrcp.pop %v2743
        %v2745 = vmul.f32 %v2743, %v2744
        %v2746 = vsub.f32 1.0, %v2745
        %v2747 = vmul.f32 %v2744, %v2746
        %v2748 = vadd.f32 %v2744, %v2747
        %vm2749 = vweird.f32 %v2743
        %vm2750 = vweird.f32 %v2744
        %vm2751 = vmor %vm2749, %vm2750
        %v2752 = vsel %vm2751, %v2744, %v2748
        %v2753 = vand.u32 2147483647, %v2743
        %vm2754 = vcmp.eq.f32.partialorder %v2753, 8.507059e+37
        %v2755 = vand.u32 %v2743, 2147483648
        %v2756 = vor.u32 1.1754944e-38, %v2755
        %v2757 = vsel %vm2754, %v2756, %v2752
        %v2758 = vmul.f32 %v2733, %v2757
        %v2759 = vmin.f32 %v2758, 1.0
        %v2760 = vmax.f32 %v2759, -1.0
        %v2761 = vmul.f32 %v2316, %v2316
        %v2762 = vmin.f32 16.0, %v2761
        %v2763 = vmul.f32 %v2762, 2.1237322e-06
        %v2764 = vadd.f32 %v2763, 0.00028619796
        %v2765 = vmul.f32 %v2762, %v2764
        %v2766 = vadd.f32 %v2765, 0.0036580483
        %v2767 = vmul.f32 %v2762, %v2766
        %v2768 = vadd.f32 %v2767, 0.05243302
        %v2769 = vmul.f32 %v2762, %v2768
        %v2770 = vadd.f32 %v2769, 0.18741608
        %v2771 = vmul.f32 %v2762, %v2770
        %v2772 = vadd.f32 %v2771, 1.1283791
        %v2773 = vmul.f32 %v2316, %v2772
        %v2774 = vmul.f32 %v2762, 3.8918573e-05
        %v2775 = vadd.f32 %v2774, 0.001143296
        %v2776 = vmul.f32 %v2762, %v2775
        %v2777 = vadd.f32 %v2776, 0.014752088
        %v2778 = vmul.f32 %v2762, %v2777
        %v2779 = vadd.f32 %v2778, 0.112945676
        %v2780 = vmul.f32 %v2762, %v2779
        %v2781 = vadd.f32 %v2780, 0.4994258
        %v2782 = vmul.f32 %v2762, %v2781
        %v2783 = vadd.f32 %v2782, 1.0
        %v2784 = vrcp.pop %v2783
        %v2785 = vmul.f32 %v2783, %v2784
        %v2786 = vsub.f32 1.0, %v2785
        %v2787 = vmul.f32 %v2784, %v2786
        %v2788 = vadd.f32 %v2784, %v2787
        %vm2789 = vweird.f32 %v2783
        %vm2790 = vweird.f32 %v2784
        %vm2791 = vmor %vm2789, %vm2790
        %v2792 = vsel %vm2791, %v2784, %v2788
        %v2793 = vand.u32 2147483647, %v2783
        %vm2794 = vcmp.eq.f32.partialorder %v2793, 8.507059e+37
        %v2795 = vand.u32 %v2783, 2147483648
        %v2796 = vor.u32 1.1754944e-38, %v2795
        %v2797 = vsel %vm2794, %v2796, %v2792
        %v2798 = vmul.f32 %v2773, %v2797
        %v2799 = vmin.f32 %v2798, 1.0
        %v2800 = vmax.f32 %v2799, -1.0
        %v2801 = vmul.f32 %v2317, %v2317
        %v2802 = vmin.f32 16.0, %v2801
        %v2803 = vmul.f32 %v2802, 2.1237322e-06
        %v2804 = vadd.f32 %v2803, 0.00028619796
        %v2805 = vmul.f32 %v2802, %v2804
        %v2806 = vadd.f32 %v2805, 0.0036580483
        %v2807 = vmul.f32 %v2802, %v2806
        %v2808 = vadd.f32 %v2807, 0.05243302
        %v2809 = vmul.f32 %v2802, %v2808
        %v2810 = vadd.f32 %v2809, 0.18741608
        %v2811 = vmul.f32 %v2802, %v2810
        %v2812 = vadd.f32 %v2811, 1.1283791
        %v2813 = vmul.f32 %v2317, %v2812
        %v2814 = vmul.f32 %v2802, 3.8918573e-05
        %v2815 = vadd.f32 %v2814, 0.001143296
        %v2816 = vmul.f32 %v2802, %v2815
        %v2817 = vadd.f32 %v2816, 0.014752088
        %v2818 = vmul.f32 %v2802, %v2817
        %v2819 = vadd.f32 %v2818, 0.112945676
        %v2820 = vmul.f32 %v2802, %v2819
        %v2821 = vadd.f32 %v2820, 0.4994258
        %v2822 = vmul.f32 %v2802, %v2821
        %v2823 = vadd.f32 %v2822, 1.0
        %v2824 = vrcp.pop %v2823
        %v2825 = vmul.f32 %v2823, %v2824
        %v2826 = vsub.f32 1.0, %v2825
        %v2827 = vmul.f32 %v2824, %v2826
        %v2828 = vadd.f32 %v2824, %v2827
        %vm2829 = vweird.f32 %v2823
        %vm2830 = vweird.f32 %v2824
        %vm2831 = vmor %vm2829, %vm2830
        %v2832 = vsel %vm2831, %v2824, %v2828
        %v2833 = vand.u32 2147483647, %v2823
        %vm2834 = vcmp.eq.f32.partialorder %v2833, 8.507059e+37
        %v2835 = vand.u32 %v2823, 2147483648
        %v2836 = vor.u32 1.1754944e-38, %v2835
        %v2837 = vsel %vm2834, %v2836, %v2832
        %v2838 = vmul.f32 %v2813, %v2837
        %v2839 = vmin.f32 %v2838, 1.0
        %v2840 = vmax.f32 %v2839, -1.0
        %v2841 = vmul.f32 %v2318, %v2318
        %v2842 = vmin.f32 16.0, %v2841
        %v2843 = vmul.f32 %v2842, 2.1237322e-06
        %v2844 = vadd.f32 %v2843, 0.00028619796
        %v2845 = vmul.f32 %v2842, %v2844
        %v2846 = vadd.f32 %v2845, 0.0036580483
        %v2847 = vmul.f32 %v2842, %v2846
        %v2848 = vadd.f32 %v2847, 0.05243302
        %v2849 = vmul.f32 %v2842, %v2848
        %v2850 = vadd.f32 %v2849, 0.18741608
        %v2851 = vmul.f32 %v2842, %v2850
        %v2852 = vadd.f32 %v2851, 1.1283791
        %v2853 = vmul.f32 %v2318, %v2852
        %v2854 = vmul.f32 %v2842, 3.8918573e-05
        %v2855 = vadd.f32 %v2854, 0.001143296
        %v2856 = vmul.f32 %v2842, %v2855
        %v2857 = vadd.f32 %v2856, 0.014752088
        %v2858 = vmul.f32 %v2842, %v2857
        %v2859 = vadd.f32 %v2858, 0.112945676
        %v2860 = vmul.f32 %v2842, %v2859
        %v2861 = vadd.f32 %v2860, 0.4994258
        %v2862 = vmul.f32 %v2842, %v2861
        %v2863 = vadd.f32 %v2862, 1.0
        %v2864 = vrcp.pop %v2863
        %v2865 = vmul.f32 %v2863, %v2864
        %v2866 = vsub.f32 1.0, %v2865
        %v2867 = vmul.f32 %v2864, %v2866
        %v2868 = vadd.f32 %v2864, %v2867
        %vm2869 = vweird.f32 %v2863
        %vm2870 = vweird.f32 %v2864
        %vm2871 = vmor %vm2869, %vm2870
        %v2872 = vsel %vm2871, %v2864, %v2868
        %v2873 = vand.u32 2147483647, %v2863
        %vm2874 = vcmp.eq.f32.partialorder %v2873, 8.507059e+37
        %v2875 = vand.u32 %v2863, 2147483648
        %v2876 = vor.u32 1.1754944e-38, %v2875
        %v2877 = vsel %vm2874, %v2876, %v2872
        %v2878 = vmul.f32 %v2853, %v2877
        %v2879 = vmin.f32 %v2878, 1.0
        %v2880 = vmax.f32 %v2879, -1.0
        %v2881 = vmul.f32 %v2319, %v2319
        %v2882 = vmin.f32 16.0, %v2881
        %v2883 = vmul.f32 %v2882, 2.1237322e-06
        %v2884 = vadd.f32 %v2883, 0.00028619796
        %v2885 = vmul.f32 %v2882, %v2884
        %v2886 = vadd.f32 %v2885, 0.0036580483
        %v2887 = vmul.f32 %v2882, %v2886
        %v2888 = vadd.f32 %v2887, 0.05243302
        %v2889 = vmul.f32 %v2882, %v2888
        %v2890 = vadd.f32 %v2889, 0.18741608
        %v2891 = vmul.f32 %v2882, %v2890
        %v2892 = vadd.f32 %v2891, 1.1283791
        %v2893 = vmul.f32 %v2319, %v2892
        %v2894 = vmul.f32 %v2882, 3.8918573e-05
        %v2895 = vadd.f32 %v2894, 0.001143296
        %v2896 = vmul.f32 %v2882, %v2895
        %v2897 = vadd.f32 %v2896, 0.014752088
        %v2898 = vmul.f32 %v2882, %v2897
        %v2899 = vadd.f32 %v2898, 0.112945676
        %v2900 = vmul.f32 %v2882, %v2899
        %v2901 = vadd.f32 %v2900, 0.4994258
        %v2902 = vmul.f32 %v2882, %v2901
        %v2903 = vadd.f32 %v2902, 1.0
        %v2904 = vrcp.pop %v2903
        %v2905 = vmul.f32 %v2903, %v2904
        %v2906 = vsub.f32 1.0, %v2905
        %v2907 = vmul.f32 %v2904, %v2906
        %v2908 = vadd.f32 %v2904, %v2907
        %vm2909 = vweird.f32 %v2903
        %vm2910 = vweird.f32 %v2904
        %vm2911 = vmor %vm2909, %vm2910
        %v2912 = vsel %vm2911, %v2904, %v2908
        %v2913 = vand.u32 2147483647, %v2903
        %vm2914 = vcmp.eq.f32.partialorder %v2913, 8.507059e+37
        %v2915 = vand.u32 %v2903, 2147483648
        %v2916 = vor.u32 1.1754944e-38, %v2915
        %v2917 = vsel %vm2914, %v2916, %v2912
        %v2918 = vmul.f32 %v2893, %v2917
        %v2919 = vmin.f32 %v2918, 1.0
        %v2920 = vmax.f32 %v2919, -1.0
        %v2921 = vmul.f32 %v2320, %v2320
        %v2922 = vmin.f32 16.0, %v2921
        %v2923 = vmul.f32 %v2922, 2.1237322e-06
        %v2924 = vadd.f32 %v2923, 0.00028619796
        %v2925 = vmul.f32 %v2922, %v2924
        %v2926 = vadd.f32 %v2925, 0.0036580483
        %v2927 = vmul.f32 %v2922, %v2926
        %v2928 = vadd.f32 %v2927, 0.05243302
        %v2929 = vmul.f32 %v2922, %v2928
        %v2930 = vadd.f32 %v2929, 0.18741608
        %v2931 = vmul.f32 %v2922, %v2930
        %v2932 = vadd.f32 %v2931, 1.1283791
        %v2933 = vmul.f32 %v2320, %v2932
        %v2934 = vmul.f32 %v2922, 3.8918573e-05
        %v2935 = vadd.f32 %v2934, 0.001143296
        %v2936 = vmul.f32 %v2922, %v2935
        %v2937 = vadd.f32 %v2936, 0.014752088
        %v2938 = vmul.f32 %v2922, %v2937
        %v2939 = vadd.f32 %v2938, 0.112945676
        %v2940 = vmul.f32 %v2922, %v2939
        %v2941 = vadd.f32 %v2940, 0.4994258
        %v2942 = vmul.f32 %v2922, %v2941
        %v2943 = vadd.f32 %v2942, 1.0
        %v2944 = vrcp.pop %v2943
        %v2945 = vmul.f32 %v2943, %v2944
        %v2946 = vsub.f32 1.0, %v2945
        %v2947 = vmul.f32 %v2944, %v2946
        %v2948 = vadd.f32 %v2944, %v2947
        %vm2949 = vweird.f32 %v2943
        %vm2950 = vweird.f32 %v2944
        %vm2951 = vmor %vm2949, %vm2950
        %v2952 = vsel %vm2951, %v2944, %v2948
        %v2953 = vand.u32 2147483647, %v2943
        %vm2954 = vcmp.eq.f32.partialorder %v2953, 8.507059e+37
        %v2955 = vand.u32 %v2943, 2147483648
        %v2956 = vor.u32 1.1754944e-38, %v2955
        %v2957 = vsel %vm2954, %v2956, %v2952
        %v2958 = vmul.f32 %v2933, %v2957
        %v2959 = vmin.f32 %v2958, 1.0
        %v2960 = vmax.f32 %v2959, -1.0
        %v2961 = vadd.f32 %v2360, 1.0
        %v2962 = vadd.f32 %v2400, 1.0
        %v2963 = vadd.f32 %v2440, 1.0
        %v2964 = vadd.f32 %v2480, 1.0
        %v2965 = vadd.f32 %v2520, 1.0
        %v2966 = vadd.f32 %v2560, 1.0
        %v2967 = vadd.f32 %v2600, 1.0
        %v2968 = vadd.f32 %v2640, 1.0
        %v2969 = vadd.f32 %v2680, 1.0
        %v2970 = vadd.f32 %v2720, 1.0
        %v2971 = vadd.f32 %v2760, 1.0
        %v2972 = vadd.f32 %v2800, 1.0
        %v2973 = vadd.f32 %v2840, 1.0
        %v2974 = vadd.f32 %v2880, 1.0
        %v2975 = vadd.f32 %v2920, 1.0
        %v2976 = vadd.f32 %v2960, 1.0
        %v2977 = vmul.f32 %v2289, %v2961
        %v2978 = vmul.f32 %v2290, %v2962
        %v2979 = vmul.f32 %v2291, %v2963
        %v2980 = vmul.f32 %v2292, %v2964
        %v2981 = vmul.f32 %v2293, %v2965
        %v2982 = vmul.f32 %v2294, %v2966
        %v2983 = vmul.f32 %v2295, %v2967
        %v2984 = vmul.f32 %v2296, %v2968
        %v2985 = vmul.f32 %v2297, %v2969
        %v2986 = vmul.f32 %v2298, %v2970
        %v2987 = vmul.f32 %v2299, %v2971
        %v2988 = vmul.f32 %v2300, %v2972
        %v2989 = vmul.f32 %v2301, %v2973
        %v2990 = vmul.f32 %v2302, %v2974
        %v2991 = vmul.f32 %v2303, %v2975
        %v2992 = vmul.f32 %v2304, %v2976
        %v2993 = vpack.c.bf16 %v2978, %v2977
        %v2994 = vpack.c.bf16 %v2980, %v2979
        %v2995 = vpack.c.bf16 %v2982, %v2981
        %v2996 = vpack.c.bf16 %v2984, %v2983
        %v2997 = vpack.c.bf16 %v2986, %v2985
        %v2998 = vpack.c.bf16 %v2988, %v2987
        %v2999 = vpack.c.bf16 %v2990, %v2989
        %v3000 = vpack.c.bf16 %v2992, %v2991
        %s3001 = scalar_lea.vmem [#allocation8], 64
        %v3002 = vld [vmem:[%s3001] sm:$0xf]
        %v3003 = vld [vmem:[%s3001 + $0x4] sm:$0xf]
        %v3004 = vld [vmem:[%s3001 + $0x8] sm:$0xf]
        %v3005 = vld [vmem:[%s3001 + $0xc] sm:$0xf]
        %v3006 = vld [vmem:[%s3001 + $0x10] sm:$0xf]
        %v3007 = vld [vmem:[%s3001 + $0x14] sm:$0xf]
        %v3008 = vld [vmem:[%s3001 + $0x18] sm:$0xf]
        %v3009 = vld [vmem:[%s3001 + $0x1c] sm:$0xf]
        %v3010 = vld [vmem:[%s3001 + $0x20] sm:$0xf]
        %v3011 = vld [vmem:[%s3001 + $0x24] sm:$0xf]
        %v3012 = vld [vmem:[%s3001 + $0x28] sm:$0xf]
        %v3013 = vld [vmem:[%s3001 + $0x2c] sm:$0xf]
        %v3014 = vld [vmem:[%s3001 + $0x30] sm:$0xf]
        %v3015 = vld [vmem:[%s3001 + $0x34] sm:$0xf]
        %v3016 = vld [vmem:[%s3001 + $0x38] sm:$0xf]
        %v3017 = vld [vmem:[%s3001 + $0x3c] sm:$0xf]
        %v3034 = vunpack.c.l.b16 %v3002
        %v3035 = vunpack.c.l.b16 %v3003
        %v3036 = vunpack.c.l.b16 %v3004
        %v3037 = vunpack.c.l.b16 %v3005
        %v3038 = vunpack.c.l.b16 %v3006
        %v3039 = vunpack.c.l.b16 %v3007
        %v3040 = vunpack.c.l.b16 %v3008
        %v3041 = vunpack.c.l.b16 %v3009
        %v3042 = vunpack.c.l.b16 %v3010
        %v3043 = vunpack.c.l.b16 %v3011
        %v3044 = vunpack.c.l.b16 %v3012
        %v3045 = vunpack.c.l.b16 %v3013
        %v3046 = vunpack.c.l.b16 %v3014
        %v3047 = vunpack.c.l.b16 %v3015
        %v3048 = vunpack.c.l.b16 %v3016
        %v3049 = vunpack.c.l.b16 %v3017
        %v3050 = vpack.c.b16 %v3035, %v3034
        %v3051 = vpack.c.b16 %v3037, %v3036
        %v3052 = vpack.c.b16 %v3039, %v3038
        %v3053 = vpack.c.b16 %v3041, %v3040
        %v3054 = vpack.c.b16 %v3043, %v3042
        %v3055 = vpack.c.b16 %v3045, %v3044
        %v3056 = vpack.c.b16 %v3047, %v3046
        %v3057 = vpack.c.b16 %v3049, %v3048
        %3066 = vmatpush.bf16.msra.mxu0 %v3057
        %3067 = vmatpush.bf16.msra.mxu0 %v3056
        %3068 = vmatpush.bf16.msra.mxu0 %v3055
        %3069 = vmatpush.bf16.msra.mxu0 %v3054
        %3070 = vmatpush.bf16.msra.mxu0 %v3053
        %3071 = vmatpush.bf16.msra.mxu0 %v3052
        %3072 = vmatpush.bf16.msra.mxu0 %v3051
        %3073 = vmatpush.bf16.msra.mxu0 %v3050
        %3074 = vmatmul.bf16.gmra.mxu0 %v2993
        %v3075 = vpop.f32.mrf.mxu0
        %v3076 = vadd.f32 0.0, %v3075
        %v3077 = vpop.f32.mrf.mxu0
        %v3078 = vadd.f32 0.0, %v3077
        %3079 = vmatmul.bf16.gmra.mxu0 %v2994
        %v3080 = vpop.f32.mrf.mxu0
        %v3081 = vadd.f32 0.0, %v3080
        %v3082 = vpop.f32.mrf.mxu0
        %v3083 = vadd.f32 0.0, %v3082
        %3084 = vmatmul.bf16.gmra.mxu0 %v2995
        %v3085 = vpop.f32.mrf.mxu0
        %v3086 = vadd.f32 0.0, %v3085
        %v3087 = vpop.f32.mrf.mxu0
        %v3088 = vadd.f32 0.0, %v3087
        %3089 = vmatmul.bf16.gmra.mxu0 %v2996
        %v3090 = vpop.f32.mrf.mxu0
        %v3091 = vadd.f32 0.0, %v3090
        %v3092 = vpop.f32.mrf.mxu0
        %v3093 = vadd.f32 0.0, %v3092
        %3094 = vmatmul.bf16.gmra.mxu0 %v2997
        %v3095 = vpop.f32.mrf.mxu0
        %v3096 = vadd.f32 0.0, %v3095
        %v3097 = vpop.f32.mrf.mxu0
        %v3098 = vadd.f32 0.0, %v3097
        %3099 = vmatmul.bf16.gmra.mxu0 %v2998
        %v3100 = vpop.f32.mrf.mxu0
        %v3101 = vadd.f32 0.0, %v3100
        %v3102 = vpop.f32.mrf.mxu0
        %v3103 = vadd.f32 0.0, %v3102
        %3104 = vmatmul.bf16.gmra.mxu0 %v2999
        %v3105 = vpop.f32.mrf.mxu0
        %v3106 = vadd.f32 0.0, %v3105
        %v3107 = vpop.f32.mrf.mxu0
        %v3108 = vadd.f32 0.0, %v3107
        %3109 = vmatmul.bf16.gmra.mxu0 %v3000
        %v3110 = vpop.f32.mrf.mxu0
        %v3111 = vadd.f32 0.0, %v3110
        %v3112 = vpop.f32.mrf.mxu0
        %v3113 = vadd.f32 0.0, %v3112
        %3114 = vdwg.mxu0
        %v3115 = vadd.f32 %v1968, %v3076
        %v3116 = vadd.f32 %v1969, %v3078
        %v3117 = vadd.f32 %v1970, %v3081
        %v3118 = vadd.f32 %v1971, %v3083
        %v3119 = vadd.f32 %v1972, %v3086
        %v3120 = vadd.f32 %v1973, %v3088
        %v3121 = vadd.f32 %v1974, %v3091
        %v3122 = vadd.f32 %v1975, %v3093
        %v3123 = vadd.f32 %v1976, %v3096
        %v3124 = vadd.f32 %v1977, %v3098
        %v3125 = vadd.f32 %v1978, %v3101
        %v3126 = vadd.f32 %v1979, %v3103
        %v3127 = vadd.f32 %v1980, %v3106
        %v3128 = vadd.f32 %v1981, %v3108
        %v3129 = vadd.f32 %v1982, %v3111
        %v3130 = vadd.f32 %v1983, %v3113
        %s3131 = scalar_lea.vmem %s4, 32
        %v3132 = vld [vmem:[%s3131] sm:$0xff]
        %v3133 = vld [vmem:[%s3131 + $0x8] sm:$0x1]
        %s3134 = scalar_lea.vmem %s5, 2
        %v3135 = vld [vmem:[%s3134] sm:$0x1]
        %v3136 = vperm.slane %v3132, 4
        %v3137 = vmul.f32 %v698, %v3136
        %v3138 = vmul.f32 %v699, %v3136
        %v3139 = vmul.f32 %v700, %v3136
        %v3140 = vmul.f32 %v701, %v3136
        %v3141 = vmul.f32 %v702, %v3136
        %v3142 = vmul.f32 %v703, %v3136
        %v3143 = vmul.f32 %v704, %v3136
        %v3144 = vmul.f32 %v705, %v3136
        %v3145 = vmul.f32 %v706, %v3136
        %v3146 = vmul.f32 %v707, %v3136
        %v3147 = vmul.f32 %v708, %v3136
        %v3148 = vmul.f32 %v709, %v3136
        %v3149 = vmul.f32 %v710, %v3136
        %v3150 = vmul.f32 %v711, %v3136
        %v3151 = vmul.f32 %v712, %v3136
        %v3152 = vmul.f32 %v713, %v3136
        %v3154 = vperm.slane %v3135, 0
        %v3156 = vadd.f32 %v3137, %v3154
        %v3157 = vadd.f32 %v3138, %v3154
        %v3158 = vadd.f32 %v3139, %v3154
        %v3159 = vadd.f32 %v3140, %v3154
        %v3160 = vadd.f32 %v3141, %v3154
        %v3161 = vadd.f32 %v3142, %v3154
        %v3162 = vadd.f32 %v3143, %v3154
        %v3163 = vadd.f32 %v3144, %v3154
        %v3164 = vadd.f32 %v3145, %v3154
        %v3165 = vadd.f32 %v3146, %v3154
        %v3166 = vadd.f32 %v3147, %v3154
        %v3167 = vadd.f32 %v3148, %v3154
        %v3168 = vadd.f32 %v3149, %v3154
        %v3169 = vadd.f32 %v3150, %v3154
        %v3170 = vadd.f32 %v3151, %v3154
        %v3171 = vadd.f32 %v3152, %v3154
        %v3172 = vperm.slane %v3132, 0
        %v3173 = vmul.f32 %v750, %v3172
        %v3174 = vmul.f32 %v751, %v3172
        %v3175 = vmul.f32 %v752, %v3172
        %v3176 = vmul.f32 %v753, %v3172
        %v3177 = vmul.f32 %v754, %v3172
        %v3178 = vmul.f32 %v755, %v3172
        %v3179 = vmul.f32 %v756, %v3172
        %v3180 = vmul.f32 %v757, %v3172
        %v3181 = vmul.f32 %v758, %v3172
        %v3182 = vmul.f32 %v759, %v3172
        %v3183 = vmul.f32 %v760, %v3172
        %v3184 = vmul.f32 %v761, %v3172
        %v3185 = vmul.f32 %v762, %v3172
        %v3186 = vmul.f32 %v763, %v3172
        %v3187 = vmul.f32 %v764, %v3172
        %v3188 = vmul.f32 %v765, %v3172
        %v3189 = vadd.f32 %v3156, %v3173
        %v3190 = vadd.f32 %v3157, %v3174
        %v3191 = vadd.f32 %v3158, %v3175
        %v3192 = vadd.f32 %v3159, %v3176
        %v3193 = vadd.f32 %v3160, %v3177
        %v3194 = vadd.f32 %v3161, %v3178
        %v3195 = vadd.f32 %v3162, %v3179
        %v3196 = vadd.f32 %v3163, %v3180
        %v3197 = vadd.f32 %v3164, %v3181
        %v3198 = vadd.f32 %v3165, %v3182
        %v3199 = vadd.f32 %v3166, %v3183
        %v3200 = vadd.f32 %v3167, %v3184
        %v3201 = vadd.f32 %v3168, %v3185
        %v3202 = vadd.f32 %v3169, %v3186
        %v3203 = vadd.f32 %v3170, %v3187
        %v3204 = vadd.f32 %v3171, %v3188
        %v3205 = vperm.slane %v3132, 1
        %v3206 = vmul.f32 %v799, %v3205
        %v3207 = vmul.f32 %v800, %v3205
        %v3208 = vmul.f32 %v801, %v3205
        %v3209 = vmul.f32 %v802, %v3205
        %v3210 = vmul.f32 %v803, %v3205
        %v3211 = vmul.f32 %v804, %v3205
        %v3212 = vmul.f32 %v805, %v3205
        %v3213 = vmul.f32 %v806, %v3205
        %v3214 = vmul.f32 %v807, %v3205
        %v3215 = vmul.f32 %v808, %v3205
        %v3216 = vmul.f32 %v809, %v3205
        %v3217 = vmul.f32 %v810, %v3205
        %v3218 = vmul.f32 %v811, %v3205
        %v3219 = vmul.f32 %v812, %v3205
        %v3220 = vmul.f32 %v813, %v3205
        %v3221 = vmul.f32 %v814, %v3205
        %v3222 = vadd.f32 %v3189, %v3206
        %v3223 = vadd.f32 %v3190, %v3207
        %v3224 = vadd.f32 %v3191, %v3208
        %v3225 = vadd.f32 %v3192, %v3209
        %v3226 = vadd.f32 %v3193, %v3210
        %v3227 = vadd.f32 %v3194, %v3211
        %v3228 = vadd.f32 %v3195, %v3212
        %v3229 = vadd.f32 %v3196, %v3213
        %v3230 = vadd.f32 %v3197, %v3214
        %v3231 = vadd.f32 %v3198, %v3215
        %v3232 = vadd.f32 %v3199, %v3216
        %v3233 = vadd.f32 %v3200, %v3217
        %v3234 = vadd.f32 %v3201, %v3218
        %v3235 = vadd.f32 %v3202, %v3219
        %v3236 = vadd.f32 %v3203, %v3220
        %v3237 = vadd.f32 %v3204, %v3221
        %v3238 = vperm.slane %v3132, 2
        %v3239 = vmul.f32 %v848, %v3238
        %v3240 = vmul.f32 %v849, %v3238
        %v3241 = vmul.f32 %v850, %v3238
        %v3242 = vmul.f32 %v851, %v3238
        %v3243 = vmul.f32 %v852, %v3238
        %v3244 = vmul.f32 %v853, %v3238
        %v3245 = vmul.f32 %v854, %v3238
        %v3246 = vmul.f32 %v855, %v3238
        %v3247 = vmul.f32 %v856, %v3238
        %v3248 = vmul.f32 %v857, %v3238
        %v3249 = vmul.f32 %v858, %v3238
        %v3250 = vmul.f32 %v859, %v3238
        %v3251 = vmul.f32 %v860, %v3238
        %v3252 = vmul.f32 %v861, %v3238
        %v3253 = vmul.f32 %v862, %v3238
        %v3254 = vmul.f32 %v863, %v3238
        %v3255 = vadd.f32 %v3222, %v3239
        %v3256 = vadd.f32 %v3223, %v3240
        %v3257 = vadd.f32 %v3224, %v3241
        %v3258 = vadd.f32 %v3225, %v3242
        %v3259 = vadd.f32 %v3226, %v3243
        %v3260 = vadd.f32 %v3227, %v3244
        %v3261 = vadd.f32 %v3228, %v3245
        %v3262 = vadd.f32 %v3229, %v3246
        %v3263 = vadd.f32 %v3230, %v3247
        %v3264 = vadd.f32 %v3231, %v3248
        %v3265 = vadd.f32 %v3232, %v3249
        %v3266 = vadd.f32 %v3233, %v3250
        %v3267 = vadd.f32 %v3234, %v3251
        %v3268 = vadd.f32 %v3235, %v3252
        %v3269 = vadd.f32 %v3236, %v3253
        %v3270 = vadd.f32 %v3237, %v3254
        %v3271 = vperm.slane %v3132, 3
        %v3272 = vmul.f32 %v897, %v3271
        %v3273 = vmul.f32 %v898, %v3271
        %v3274 = vmul.f32 %v899, %v3271
        %v3275 = vmul.f32 %v900, %v3271
        %v3276 = vmul.f32 %v901, %v3271
        %v3277 = vmul.f32 %v902, %v3271
        %v3278 = vmul.f32 %v903, %v3271
        %v3279 = vmul.f32 %v904, %v3271
        %v3280 = vmul.f32 %v905, %v3271
        %v3281 = vmul.f32 %v906, %v3271
        %v3282 = vmul.f32 %v907, %v3271
        %v3283 = vmul.f32 %v908, %v3271
        %v3284 = vmul.f32 %v909, %v3271
        %v3285 = vmul.f32 %v910, %v3271
        %v3286 = vmul.f32 %v911, %v3271
        %v3287 = vmul.f32 %v912, %v3271
        %v3288 = vadd.f32 %v3255, %v3272
        %v3289 = vadd.f32 %v3256, %v3273
        %v3290 = vadd.f32 %v3257, %v3274
        %v3291 = vadd.f32 %v3258, %v3275
        %v3292 = vadd.f32 %v3259, %v3276
        %v3293 = vadd.f32 %v3260, %v3277
        %v3294 = vadd.f32 %v3261, %v3278
        %v3295 = vadd.f32 %v3262, %v3279
        %v3296 = vadd.f32 %v3263, %v3280
        %v3297 = vadd.f32 %v3264, %v3281
        %v3298 = vadd.f32 %v3265, %v3282
        %v3299 = vadd.f32 %v3266, %v3283
        %v3300 = vadd.f32 %v3267, %v3284
        %v3301 = vadd.f32 %v3268, %v3285
        %v3302 = vadd.f32 %v3269, %v3286
        %v3303 = vadd.f32 %v3270, %v3287
        %v3304 = vperm.slane %v3132, 5
        %v3305 = vmul.f32 %v946, %v3304
        %v3306 = vmul.f32 %v947, %v3304
        %v3307 = vmul.f32 %v948, %v3304
        %v3308 = vmul.f32 %v949, %v3304
        %v3309 = vmul.f32 %v950, %v3304
        %v3310 = vmul.f32 %v951, %v3304
        %v3311 = vmul.f32 %v952, %v3304
        %v3312 = vmul.f32 %v953, %v3304
        %v3313 = vmul.f32 %v954, %v3304
        %v3314 = vmul.f32 %v955, %v3304
        %v3315 = vmul.f32 %v956, %v3304
        %v3316 = vmul.f32 %v957, %v3304
        %v3317 = vmul.f32 %v958, %v3304
        %v3318 = vmul.f32 %v959, %v3304
        %v3319 = vmul.f32 %v960, %v3304
        %v3320 = vmul.f32 %v961, %v3304
        %v3321 = vadd.f32 %v3288, %v3305
        %v3322 = vadd.f32 %v3289, %v3306
        %v3323 = vadd.f32 %v3290, %v3307
        %v3324 = vadd.f32 %v3291, %v3308
        %v3325 = vadd.f32 %v3292, %v3309
        %v3326 = vadd.f32 %v3293, %v3310
        %v3327 = vadd.f32 %v3294, %v3311
        %v3328 = vadd.f32 %v3295, %v3312
        %v3329 = vadd.f32 %v3296, %v3313
        %v3330 = vadd.f32 %v3297, %v3314
        %v3331 = vadd.f32 %v3298, %v3315
        %v3332 = vadd.f32 %v3299, %v3316
        %v3333 = vadd.f32 %v3300, %v3317
        %v3334 = vadd.f32 %v3301, %v3318
        %v3335 = vadd.f32 %v3302, %v3319
        %v3336 = vadd.f32 %v3303, %v3320
        %v3337 = vperm.slane %v3132, 6
        %v3338 = vmul.f32 %v996, %v3337
        %v3339 = vmul.f32 %v997, %v3337
        %v3340 = vmul.f32 %v998, %v3337
        %v3341 = vmul.f32 %v999, %v3337
        %v3342 = vmul.f32 %v1000, %v3337
        %v3343 = vmul.f32 %v1001, %v3337
        %v3344 = vmul.f32 %v1002, %v3337
        %v3345 = vmul.f32 %v1003, %v3337
        %v3346 = vmul.f32 %v1004, %v3337
        %v3347 = vmul.f32 %v1005, %v3337
        %v3348 = vmul.f32 %v1006, %v3337
        %v3349 = vmul.f32 %v1007, %v3337
        %v3350 = vmul.f32 %v1008, %v3337
        %v3351 = vmul.f32 %v1009, %v3337
        %v3352 = vmul.f32 %v1010, %v3337
        %v3353 = vmul.f32 %v1011, %v3337
        %v3354 = vadd.f32 %v3321, %v3338
        %v3355 = vadd.f32 %v3322, %v3339
        %v3356 = vadd.f32 %v3323, %v3340
        %v3357 = vadd.f32 %v3324, %v3341
        %v3358 = vadd.f32 %v3325, %v3342
        %v3359 = vadd.f32 %v3326, %v3343
        %v3360 = vadd.f32 %v3327, %v3344
        %v3361 = vadd.f32 %v3328, %v3345
        %v3362 = vadd.f32 %v3329, %v3346
        %v3363 = vadd.f32 %v3330, %v3347
        %v3364 = vadd.f32 %v3331, %v3348
        %v3365 = vadd.f32 %v3332, %v3349
        %v3366 = vadd.f32 %v3333, %v3350
        %v3367 = vadd.f32 %v3334, %v3351
        %v3368 = vadd.f32 %v3335, %v3352
        %v3369 = vadd.f32 %v3336, %v3353
        %v3370 = vperm.slane %v3132, 7
        %v3371 = vmul.f32 %v1045, %v3370
        %v3372 = vmul.f32 %v1046, %v3370
        %v3373 = vmul.f32 %v1047, %v3370
        %v3374 = vmul.f32 %v1048, %v3370
        %v3375 = vmul.f32 %v1049, %v3370
        %v3376 = vmul.f32 %v1050, %v3370
        %v3377 = vmul.f32 %v1051, %v3370
        %v3378 = vmul.f32 %v1052, %v3370
        %v3379 = vmul.f32 %v1053, %v3370
        %v3380 = vmul.f32 %v1054, %v3370
        %v3381 = vmul.f32 %v1055, %v3370
        %v3382 = vmul.f32 %v1056, %v3370
        %v3383 = vmul.f32 %v1057, %v3370
        %v3384 = vmul.f32 %v1058, %v3370
        %v3385 = vmul.f32 %v1059, %v3370
        %v3386 = vmul.f32 %v1060, %v3370
        %v3387 = vadd.f32 %v3354, %v3371
        %v3388 = vadd.f32 %v3355, %v3372
        %v3389 = vadd.f32 %v3356, %v3373
        %v3390 = vadd.f32 %v3357, %v3374
        %v3391 = vadd.f32 %v3358, %v3375
        %v3392 = vadd.f32 %v3359, %v3376
        %v3393 = vadd.f32 %v3360, %v3377
        %v3394 = vadd.f32 %v3361, %v3378
        %v3395 = vadd.f32 %v3362, %v3379
        %v3396 = vadd.f32 %v3363, %v3380
        %v3397 = vadd.f32 %v3364, %v3381
        %v3398 = vadd.f32 %v3365, %v3382
        %v3399 = vadd.f32 %v3366, %v3383
        %v3400 = vadd.f32 %v3367, %v3384
        %v3401 = vadd.f32 %v3368, %v3385
        %v3402 = vadd.f32 %v3369, %v3386
        %v3403 = vperm.slane %v3133, 0
        %v3404 = vmul.f32 %v1094, %v3403
        %v3405 = vmul.f32 %v1095, %v3403
        %v3406 = vmul.f32 %v1096, %v3403
        %v3407 = vmul.f32 %v1097, %v3403
        %v3408 = vmul.f32 %v1098, %v3403
        %v3409 = vmul.f32 %v1099, %v3403
        %v3410 = vmul.f32 %v1100, %v3403
        %v3411 = vmul.f32 %v1101, %v3403
        %v3412 = vmul.f32 %v1102, %v3403
        %v3413 = vmul.f32 %v1103, %v3403
        %v3414 = vmul.f32 %v1104, %v3403
        %v3415 = vmul.f32 %v1105, %v3403
        %v3416 = vmul.f32 %v1106, %v3403
        %v3417 = vmul.f32 %v1107, %v3403
        %v3418 = vmul.f32 %v1108, %v3403
        %v3419 = vmul.f32 %v1109, %v3403
        %v3420 = vadd.f32 %v3387, %v3404
        %v3421 = vadd.f32 %v3388, %v3405
        %v3422 = vadd.f32 %v3389, %v3406
        %v3423 = vadd.f32 %v3390, %v3407
        %v3424 = vadd.f32 %v3391, %v3408
        %v3425 = vadd.f32 %v3392, %v3409
        %v3426 = vadd.f32 %v3393, %v3410
        %v3427 = vadd.f32 %v3394, %v3411
        %v3428 = vadd.f32 %v3395, %v3412
        %v3429 = vadd.f32 %v3396, %v3413
        %v3430 = vadd.f32 %v3397, %v3414
        %v3431 = vadd.f32 %v3398, %v3415
        %v3432 = vadd.f32 %v3399, %v3416
        %v3433 = vadd.f32 %v3400, %v3417
        %v3434 = vadd.f32 %v3401, %v3418
        %v3435 = vadd.f32 %v3402, %v3419
        %v3436 = vmul.f32 %v3420, 0.5
        %v3437 = vmul.f32 %v3421, 0.5
        %v3438 = vmul.f32 %v3422, 0.5
        %v3439 = vmul.f32 %v3423, 0.5
        %v3440 = vmul.f32 %v3424, 0.5
        %v3441 = vmul.f32 %v3425, 0.5
        %v3442 = vmul.f32 %v3426, 0.5
        %v3443 = vmul.f32 %v3427, 0.5
        %v3444 = vmul.f32 %v3428, 0.5
        %v3445 = vmul.f32 %v3429, 0.5
        %v3446 = vmul.f32 %v3430, 0.5
        %v3447 = vmul.f32 %v3431, 0.5
        %v3448 = vmul.f32 %v3432, 0.5
        %v3449 = vmul.f32 %v3433, 0.5
        %v3450 = vmul.f32 %v3434, 0.5
        %v3451 = vmul.f32 %v3435, 0.5
        %v3452 = vmul.f32 %v3420, 0.70710677
        %v3453 = vmul.f32 %v3421, 0.70710677
        %v3454 = vmul.f32 %v3422, 0.70710677
        %v3455 = vmul.f32 %v3423, 0.70710677
        %v3456 = vmul.f32 %v3424, 0.70710677
        %v3457 = vmul.f32 %v3425, 0.70710677
        %v3458 = vmul.f32 %v3426, 0.70710677
        %v3459 = vmul.f32 %v3427, 0.70710677
        %v3460 = vmul.f32 %v3428, 0.70710677
        %v3461 = vmul.f32 %v3429, 0.70710677
        %v3462 = vmul.f32 %v3430, 0.70710677
        %v3463 = vmul.f32 %v3431, 0.70710677
        %v3464 = vmul.f32 %v3432, 0.70710677
        %v3465 = vmul.f32 %v3433, 0.70710677
        %v3466 = vmul.f32 %v3434, 0.70710677
        %v3467 = vmul.f32 %v3435, 0.70710677
        %v3468 = vmul.f32 %v3452, %v3452
        %v3469 = vmin.f32 16.0, %v3468
        %v3470 = vmul.f32 %v3469, 2.1237322e-06
        %v3471 = vadd.f32 %v3470, 0.00028619796
        %v3472 = vmul.f32 %v3469, %v3471
        %v3473 = vadd.f32 %v3472, 0.0036580483
        %v3474 = vmul.f32 %v3469, %v3473
        %v3475 = vadd.f32 %v3474, 0.05243302
        %v3476 = vmul.f32 %v3469, %v3475
        %v3477 = vadd.f32 %v3476, 0.18741608
        %v3478 = vmul.f32 %v3469, %v3477
        %v3479 = vadd.f32 %v3478, 1.1283791
        %v3480 = vmul.f32 %v3452, %v3479
        %v3481 = vmul.f32 %v3469, 3.8918573e-05
        %v3482 = vadd.f32 %v3481, 0.001143296
        %v3483 = vmul.f32 %v3469, %v3482
        %v3484 = vadd.f32 %v3483, 0.014752088
        %v3485 = vmul.f32 %v3469, %v3484
        %v3486 = vadd.f32 %v3485, 0.112945676
        %v3487 = vmul.f32 %v3469, %v3486
        %v3488 = vadd.f32 %v3487, 0.4994258
        %v3489 = vmul.f32 %v3469, %v3488
        %v3490 = vadd.f32 %v3489, 1.0
        %v3491 = vrcp.pop %v3490
        %v3492 = vmul.f32 %v3490, %v3491
        %v3493 = vsub.f32 1.0, %v3492
        %v3494 = vmul.f32 %v3491, %v3493
        %v3495 = vadd.f32 %v3491, %v3494
        %vm3496 = vweird.f32 %v3490
        %vm3497 = vweird.f32 %v3491
        %vm3498 = vmor %vm3496, %vm3497
        %v3499 = vsel %vm3498, %v3491, %v3495
        %v3500 = vand.u32 2147483647, %v3490
        %vm3501 = vcmp.eq.f32.partialorder %v3500, 8.507059e+37
        %v3502 = vand.u32 %v3490, 2147483648
        %v3503 = vor.u32 1.1754944e-38, %v3502
        %v3504 = vsel %vm3501, %v3503, %v3499
        %v3505 = vmul.f32 %v3480, %v3504
        %v3506 = vmin.f32 %v3505, 1.0
        %v3507 = vmax.f32 %v3506, -1.0
        %v3508 = vmul.f32 %v3453, %v3453
        %v3509 = vmin.f32 16.0, %v3508
        %v3510 = vmul.f32 %v3509, 2.1237322e-06
        %v3511 = vadd.f32 %v3510, 0.00028619796
        %v3512 = vmul.f32 %v3509, %v3511
        %v3513 = vadd.f32 %v3512, 0.0036580483
        %v3514 = vmul.f32 %v3509, %v3513
        %v3515 = vadd.f32 %v3514, 0.05243302
        %v3516 = vmul.f32 %v3509, %v3515
        %v3517 = vadd.f32 %v3516, 0.18741608
        %v3518 = vmul.f32 %v3509, %v3517
        %v3519 = vadd.f32 %v3518, 1.1283791
        %v3520 = vmul.f32 %v3453, %v3519
        %v3521 = vmul.f32 %v3509, 3.8918573e-05
        %v3522 = vadd.f32 %v3521, 0.001143296
        %v3523 = vmul.f32 %v3509, %v3522
        %v3524 = vadd.f32 %v3523, 0.014752088
        %v3525 = vmul.f32 %v3509, %v3524
        %v3526 = vadd.f32 %v3525, 0.112945676
        %v3527 = vmul.f32 %v3509, %v3526
        %v3528 = vadd.f32 %v3527, 0.4994258
        %v3529 = vmul.f32 %v3509, %v3528
        %v3530 = vadd.f32 %v3529, 1.0
        %v3531 = vrcp.pop %v3530
        %v3532 = vmul.f32 %v3530, %v3531
        %v3533 = vsub.f32 1.0, %v3532
        %v3534 = vmul.f32 %v3531, %v3533
        %v3535 = vadd.f32 %v3531, %v3534
        %vm3536 = vweird.f32 %v3530
        %vm3537 = vweird.f32 %v3531
        %vm3538 = vmor %vm3536, %vm3537
        %v3539 = vsel %vm3538, %v3531, %v3535
        %v3540 = vand.u32 2147483647, %v3530
        %vm3541 = vcmp.eq.f32.partialorder %v3540, 8.507059e+37
        %v3542 = vand.u32 %v3530, 2147483648
        %v3543 = vor.u32 1.1754944e-38, %v3542
        %v3544 = vsel %vm3541, %v3543, %v3539
        %v3545 = vmul.f32 %v3520, %v3544
        %v3546 = vmin.f32 %v3545, 1.0
        %v3547 = vmax.f32 %v3546, -1.0
        %v3548 = vmul.f32 %v3454, %v3454
        %v3549 = vmin.f32 16.0, %v3548
        %v3550 = vmul.f32 %v3549, 2.1237322e-06
        %v3551 = vadd.f32 %v3550, 0.00028619796
        %v3552 = vmul.f32 %v3549, %v3551
        %v3553 = vadd.f32 %v3552, 0.0036580483
        %v3554 = vmul.f32 %v3549, %v3553
        %v3555 = vadd.f32 %v3554, 0.05243302
        %v3556 = vmul.f32 %v3549, %v3555
        %v3557 = vadd.f32 %v3556, 0.18741608
        %v3558 = vmul.f32 %v3549, %v3557
        %v3559 = vadd.f32 %v3558, 1.1283791
        %v3560 = vmul.f32 %v3454, %v3559
        %v3561 = vmul.f32 %v3549, 3.8918573e-05
        %v3562 = vadd.f32 %v3561, 0.001143296
        %v3563 = vmul.f32 %v3549, %v3562
        %v3564 = vadd.f32 %v3563, 0.014752088
        %v3565 = vmul.f32 %v3549, %v3564
        %v3566 = vadd.f32 %v3565, 0.112945676
        %v3567 = vmul.f32 %v3549, %v3566
        %v3568 = vadd.f32 %v3567, 0.4994258
        %v3569 = vmul.f32 %v3549, %v3568
        %v3570 = vadd.f32 %v3569, 1.0
        %v3571 = vrcp.pop %v3570
        %v3572 = vmul.f32 %v3570, %v3571
        %v3573 = vsub.f32 1.0, %v3572
        %v3574 = vmul.f32 %v3571, %v3573
        %v3575 = vadd.f32 %v3571, %v3574
        %vm3576 = vweird.f32 %v3570
        %vm3577 = vweird.f32 %v3571
        %vm3578 = vmor %vm3576, %vm3577
        %v3579 = vsel %vm3578, %v3571, %v3575
        %v3580 = vand.u32 2147483647, %v3570
        %vm3581 = vcmp.eq.f32.partialorder %v3580, 8.507059e+37
        %v3582 = vand.u32 %v3570, 2147483648
        %v3583 = vor.u32 1.1754944e-38, %v3582
        %v3584 = vsel %vm3581, %v3583, %v3579
        %v3585 = vmul.f32 %v3560, %v3584
        %v3586 = vmin.f32 %v3585, 1.0
        %v3587 = vmax.f32 %v3586, -1.0
        %v3588 = vmul.f32 %v3455, %v3455
        %v3589 = vmin.f32 16.0, %v3588
        %v3590 = vmul.f32 %v3589, 2.1237322e-06
        %v3591 = vadd.f32 %v3590, 0.00028619796
        %v3592 = vmul.f32 %v3589, %v3591
        %v3593 = vadd.f32 %v3592, 0.0036580483
        %v3594 = vmul.f32 %v3589, %v3593
        %v3595 = vadd.f32 %v3594, 0.05243302
        %v3596 = vmul.f32 %v3589, %v3595
        %v3597 = vadd.f32 %v3596, 0.18741608
        %v3598 = vmul.f32 %v3589, %v3597
        %v3599 = vadd.f32 %v3598, 1.1283791
        %v3600 = vmul.f32 %v3455, %v3599
        %v3601 = vmul.f32 %v3589, 3.8918573e-05
        %v3602 = vadd.f32 %v3601, 0.001143296
        %v3603 = vmul.f32 %v3589, %v3602
        %v3604 = vadd.f32 %v3603, 0.014752088
        %v3605 = vmul.f32 %v3589, %v3604
        %v3606 = vadd.f32 %v3605, 0.112945676
        %v3607 = vmul.f32 %v3589, %v3606
        %v3608 = vadd.f32 %v3607, 0.4994258
        %v3609 = vmul.f32 %v3589, %v3608
        %v3610 = vadd.f32 %v3609, 1.0
        %v3611 = vrcp.pop %v3610
        %v3612 = vmul.f32 %v3610, %v3611
        %v3613 = vsub.f32 1.0, %v3612
        %v3614 = vmul.f32 %v3611, %v3613
        %v3615 = vadd.f32 %v3611, %v3614
        %vm3616 = vweird.f32 %v3610
        %vm3617 = vweird.f32 %v3611
        %vm3618 = vmor %vm3616, %vm3617
        %v3619 = vsel %vm3618, %v3611, %v3615
        %v3620 = vand.u32 2147483647, %v3610
        %vm3621 = vcmp.eq.f32.partialorder %v3620, 8.507059e+37
        %v3622 = vand.u32 %v3610, 2147483648
        %v3623 = vor.u32 1.1754944e-38, %v3622
        %v3624 = vsel %vm3621, %v3623, %v3619
        %v3625 = vmul.f32 %v3600, %v3624
        %v3626 = vmin.f32 %v3625, 1.0
        %v3627 = vmax.f32 %v3626, -1.0
        %v3628 = vmul.f32 %v3456, %v3456
        %v3629 = vmin.f32 16.0, %v3628
        %v3630 = vmul.f32 %v3629, 2.1237322e-06
        %v3631 = vadd.f32 %v3630, 0.00028619796
        %v3632 = vmul.f32 %v3629, %v3631
        %v3633 = vadd.f32 %v3632, 0.0036580483
        %v3634 = vmul.f32 %v3629, %v3633
        %v3635 = vadd.f32 %v3634, 0.05243302
        %v3636 = vmul.f32 %v3629, %v3635
        %v3637 = vadd.f32 %v3636, 0.18741608
        %v3638 = vmul.f32 %v3629, %v3637
        %v3639 = vadd.f32 %v3638, 1.1283791
        %v3640 = vmul.f32 %v3456, %v3639
        %v3641 = vmul.f32 %v3629, 3.8918573e-05
        %v3642 = vadd.f32 %v3641, 0.001143296
        %v3643 = vmul.f32 %v3629, %v3642
        %v3644 = vadd.f32 %v3643, 0.014752088
        %v3645 = vmul.f32 %v3629, %v3644
        %v3646 = vadd.f32 %v3645, 0.112945676
        %v3647 = vmul.f32 %v3629, %v3646
        %v3648 = vadd.f32 %v3647, 0.4994258
        %v3649 = vmul.f32 %v3629, %v3648
        %v3650 = vadd.f32 %v3649, 1.0
        %v3651 = vrcp.pop %v3650
        %v3652 = vmul.f32 %v3650, %v3651
        %v3653 = vsub.f32 1.0, %v3652
        %v3654 = vmul.f32 %v3651, %v3653
        %v3655 = vadd.f32 %v3651, %v3654
        %vm3656 = vweird.f32 %v3650
        %vm3657 = vweird.f32 %v3651
        %vm3658 = vmor %vm3656, %vm3657
        %v3659 = vsel %vm3658, %v3651, %v3655
        %v3660 = vand.u32 2147483647, %v3650
        %vm3661 = vcmp.eq.f32.partialorder %v3660, 8.507059e+37
        %v3662 = vand.u32 %v3650, 2147483648
        %v3663 = vor.u32 1.1754944e-38, %v3662
        %v3664 = vsel %vm3661, %v3663, %v3659
        %v3665 = vmul.f32 %v3640, %v3664
        %v3666 = vmin.f32 %v3665, 1.0
        %v3667 = vmax.f32 %v3666, -1.0
        %v3668 = vmul.f32 %v3457, %v3457
        %v3669 = vmin.f32 16.0, %v3668
        %v3670 = vmul.f32 %v3669, 2.1237322e-06
        %v3671 = vadd.f32 %v3670, 0.00028619796
        %v3672 = vmul.f32 %v3669, %v3671
        %v3673 = vadd.f32 %v3672, 0.0036580483
        %v3674 = vmul.f32 %v3669, %v3673
        %v3675 = vadd.f32 %v3674, 0.05243302
        %v3676 = vmul.f32 %v3669, %v3675
        %v3677 = vadd.f32 %v3676, 0.18741608
        %v3678 = vmul.f32 %v3669, %v3677
        %v3679 = vadd.f32 %v3678, 1.1283791
        %v3680 = vmul.f32 %v3457, %v3679
        %v3681 = vmul.f32 %v3669, 3.8918573e-05
        %v3682 = vadd.f32 %v3681, 0.001143296
        %v3683 = vmul.f32 %v3669, %v3682
        %v3684 = vadd.f32 %v3683, 0.014752088
        %v3685 = vmul.f32 %v3669, %v3684
        %v3686 = vadd.f32 %v3685, 0.112945676
        %v3687 = vmul.f32 %v3669, %v3686
        %v3688 = vadd.f32 %v3687, 0.4994258
        %v3689 = vmul.f32 %v3669, %v3688
        %v3690 = vadd.f32 %v3689, 1.0
        %v3691 = vrcp.pop %v3690
        %v3692 = vmul.f32 %v3690, %v3691
        %v3693 = vsub.f32 1.0, %v3692
        %v3694 = vmul.f32 %v3691, %v3693
        %v3695 = vadd.f32 %v3691, %v3694
        %vm3696 = vweird.f32 %v3690
        %vm3697 = vweird.f32 %v3691
        %vm3698 = vmor %vm3696, %vm3697
        %v3699 = vsel %vm3698, %v3691, %v3695
        %v3700 = vand.u32 2147483647, %v3690
        %vm3701 = vcmp.eq.f32.partialorder %v3700, 8.507059e+37
        %v3702 = vand.u32 %v3690, 2147483648
        %v3703 = vor.u32 1.1754944e-38, %v3702
        %v3704 = vsel %vm3701, %v3703, %v3699
        %v3705 = vmul.f32 %v3680, %v3704
        %v3706 = vmin.f32 %v3705, 1.0
        %v3707 = vmax.f32 %v3706, -1.0
        %v3708 = vmul.f32 %v3458, %v3458
        %v3709 = vmin.f32 16.0, %v3708
        %v3710 = vmul.f32 %v3709, 2.1237322e-06
        %v3711 = vadd.f32 %v3710, 0.00028619796
        %v3712 = vmul.f32 %v3709, %v3711
        %v3713 = vadd.f32 %v3712, 0.0036580483
        %v3714 = vmul.f32 %v3709, %v3713
        %v3715 = vadd.f32 %v3714, 0.05243302
        %v3716 = vmul.f32 %v3709, %v3715
        %v3717 = vadd.f32 %v3716, 0.18741608
        %v3718 = vmul.f32 %v3709, %v3717
        %v3719 = vadd.f32 %v3718, 1.1283791
        %v3720 = vmul.f32 %v3458, %v3719
        %v3721 = vmul.f32 %v3709, 3.8918573e-05
        %v3722 = vadd.f32 %v3721, 0.001143296
        %v3723 = vmul.f32 %v3709, %v3722
        %v3724 = vadd.f32 %v3723, 0.014752088
        %v3725 = vmul.f32 %v3709, %v3724
        %v3726 = vadd.f32 %v3725, 0.112945676
        %v3727 = vmul.f32 %v3709, %v3726
        %v3728 = vadd.f32 %v3727, 0.4994258
        %v3729 = vmul.f32 %v3709, %v3728
        %v3730 = vadd.f32 %v3729, 1.0
        %v3731 = vrcp.pop %v3730
        %v3732 = vmul.f32 %v3730, %v3731
        %v3733 = vsub.f32 1.0, %v3732
        %v3734 = vmul.f32 %v3731, %v3733
        %v3735 = vadd.f32 %v3731, %v3734
        %vm3736 = vweird.f32 %v3730
        %vm3737 = vweird.f32 %v3731
        %vm3738 = vmor %vm3736, %vm3737
        %v3739 = vsel %vm3738, %v3731, %v3735
        %v3740 = vand.u32 2147483647, %v3730
        %vm3741 = vcmp.eq.f32.partialorder %v3740, 8.507059e+37
        %v3742 = vand.u32 %v3730, 2147483648
        %v3743 = vor.u32 1.1754944e-38, %v3742
        %v3744 = vsel %vm3741, %v3743, %v3739
        %v3745 = vmul.f32 %v3720, %v3744
        %v3746 = vmin.f32 %v3745, 1.0
        %v3747 = vmax.f32 %v3746, -1.0
        %v3748 = vmul.f32 %v3459, %v3459
        %v3749 = vmin.f32 16.0, %v3748
        %v3750 = vmul.f32 %v3749, 2.1237322e-06
        %v3751 = vadd.f32 %v3750, 0.00028619796
        %v3752 = vmul.f32 %v3749, %v3751
        %v3753 = vadd.f32 %v3752, 0.0036580483
        %v3754 = vmul.f32 %v3749, %v3753
        %v3755 = vadd.f32 %v3754, 0.05243302
        %v3756 = vmul.f32 %v3749, %v3755
        %v3757 = vadd.f32 %v3756, 0.18741608
        %v3758 = vmul.f32 %v3749, %v3757
        %v3759 = vadd.f32 %v3758, 1.1283791
        %v3760 = vmul.f32 %v3459, %v3759
        %v3761 = vmul.f32 %v3749, 3.8918573e-05
        %v3762 = vadd.f32 %v3761, 0.001143296
        %v3763 = vmul.f32 %v3749, %v3762
        %v3764 = vadd.f32 %v3763, 0.014752088
        %v3765 = vmul.f32 %v3749, %v3764
        %v3766 = vadd.f32 %v3765, 0.112945676
        %v3767 = vmul.f32 %v3749, %v3766
        %v3768 = vadd.f32 %v3767, 0.4994258
        %v3769 = vmul.f32 %v3749, %v3768
        %v3770 = vadd.f32 %v3769, 1.0
        %v3771 = vrcp.pop %v3770
        %v3772 = vmul.f32 %v3770, %v3771
        %v3773 = vsub.f32 1.0, %v3772
        %v3774 = vmul.f32 %v3771, %v3773
        %v3775 = vadd.f32 %v3771, %v3774
        %vm3776 = vweird.f32 %v3770
        %vm3777 = vweird.f32 %v3771
        %vm3778 = vmor %vm3776, %vm3777
        %v3779 = vsel %vm3778, %v3771, %v3775
        %v3780 = vand.u32 2147483647, %v3770
        %vm3781 = vcmp.eq.f32.partialorder %v3780, 8.507059e+37
        %v3782 = vand.u32 %v3770, 2147483648
        %v3783 = vor.u32 1.1754944e-38, %v3782
        %v3784 = vsel %vm3781, %v3783, %v3779
        %v3785 = vmul.f32 %v3760, %v3784
        %v3786 = vmin.f32 %v3785, 1.0
        %v3787 = vmax.f32 %v3786, -1.0
        %v3788 = vmul.f32 %v3460, %v3460
        %v3789 = vmin.f32 16.0, %v3788
        %v3790 = vmul.f32 %v3789, 2.1237322e-06
        %v3791 = vadd.f32 %v3790, 0.00028619796
        %v3792 = vmul.f32 %v3789, %v3791
        %v3793 = vadd.f32 %v3792, 0.0036580483
        %v3794 = vmul.f32 %v3789, %v3793
        %v3795 = vadd.f32 %v3794, 0.05243302
        %v3796 = vmul.f32 %v3789, %v3795
        %v3797 = vadd.f32 %v3796, 0.18741608
        %v3798 = vmul.f32 %v3789, %v3797
        %v3799 = vadd.f32 %v3798, 1.1283791
        %v3800 = vmul.f32 %v3460, %v3799
        %v3801 = vmul.f32 %v3789, 3.8918573e-05
        %v3802 = vadd.f32 %v3801, 0.001143296
        %v3803 = vmul.f32 %v3789, %v3802
        %v3804 = vadd.f32 %v3803, 0.014752088
        %v3805 = vmul.f32 %v3789, %v3804
        %v3806 = vadd.f32 %v3805, 0.112945676
        %v3807 = vmul.f32 %v3789, %v3806
        %v3808 = vadd.f32 %v3807, 0.4994258
        %v3809 = vmul.f32 %v3789, %v3808
        %v3810 = vadd.f32 %v3809, 1.0
        %v3811 = vrcp.pop %v3810
        %v3812 = vmul.f32 %v3810, %v3811
        %v3813 = vsub.f32 1.0, %v3812
        %v3814 = vmul.f32 %v3811, %v3813
        %v3815 = vadd.f32 %v3811, %v3814
        %vm3816 = vweird.f32 %v3810
        %vm3817 = vweird.f32 %v3811
        %vm3818 = vmor %vm3816, %vm3817
        %v3819 = vsel %vm3818, %v3811, %v3815
        %v3820 = vand.u32 2147483647, %v3810
        %vm3821 = vcmp.eq.f32.partialorder %v3820, 8.507059e+37
        %v3822 = vand.u32 %v3810, 2147483648
        %v3823 = vor.u32 1.1754944e-38, %v3822
        %v3824 = vsel %vm3821, %v3823, %v3819
        %v3825 = vmul.f32 %v3800, %v3824
        %v3826 = vmin.f32 %v3825, 1.0
        %v3827 = vmax.f32 %v3826, -1.0
        %v3828 = vmul.f32 %v3461, %v3461
        %v3829 = vmin.f32 16.0, %v3828
        %v3830 = vmul.f32 %v3829, 2.1237322e-06
        %v3831 = vadd.f32 %v3830, 0.00028619796
        %v3832 = vmul.f32 %v3829, %v3831
        %v3833 = vadd.f32 %v3832, 0.0036580483
        %v3834 = vmul.f32 %v3829, %v3833
        %v3835 = vadd.f32 %v3834, 0.05243302
        %v3836 = vmul.f32 %v3829, %v3835
        %v3837 = vadd.f32 %v3836, 0.18741608
        %v3838 = vmul.f32 %v3829, %v3837
        %v3839 = vadd.f32 %v3838, 1.1283791
        %v3840 = vmul.f32 %v3461, %v3839
        %v3841 = vmul.f32 %v3829, 3.8918573e-05
        %v3842 = vadd.f32 %v3841, 0.001143296
        %v3843 = vmul.f32 %v3829, %v3842
        %v3844 = vadd.f32 %v3843, 0.014752088
        %v3845 = vmul.f32 %v3829, %v3844
        %v3846 = vadd.f32 %v3845, 0.112945676
        %v3847 = vmul.f32 %v3829, %v3846
        %v3848 = vadd.f32 %v3847, 0.4994258
        %v3849 = vmul.f32 %v3829, %v3848
        %v3850 = vadd.f32 %v3849, 1.0
        %v3851 = vrcp.pop %v3850
        %v3852 = vmul.f32 %v3850, %v3851
        %v3853 = vsub.f32 1.0, %v3852
        %v3854 = vmul.f32 %v3851, %v3853
        %v3855 = vadd.f32 %v3851, %v3854
        %vm3856 = vweird.f32 %v3850
        %vm3857 = vweird.f32 %v3851
        %vm3858 = vmor %vm3856, %vm3857
        %v3859 = vsel %vm3858, %v3851, %v3855
        %v3860 = vand.u32 2147483647, %v3850
        %vm3861 = vcmp.eq.f32.partialorder %v3860, 8.507059e+37
        %v3862 = vand.u32 %v3850, 2147483648
        %v3863 = vor.u32 1.1754944e-38, %v3862
        %v3864 = vsel %vm3861, %v3863, %v3859
        %v3865 = vmul.f32 %v3840, %v3864
        %v3866 = vmin.f32 %v3865, 1.0
        %v3867 = vmax.f32 %v3866, -1.0
        %v3868 = vmul.f32 %v3462, %v3462
        %v3869 = vmin.f32 16.0, %v3868
        %v3870 = vmul.f32 %v3869, 2.1237322e-06
        %v3871 = vadd.f32 %v3870, 0.00028619796
        %v3872 = vmul.f32 %v3869, %v3871
        %v3873 = vadd.f32 %v3872, 0.0036580483
        %v3874 = vmul.f32 %v3869, %v3873
        %v3875 = vadd.f32 %v3874, 0.05243302
        %v3876 = vmul.f32 %v3869, %v3875
        %v3877 = vadd.f32 %v3876, 0.18741608
        %v3878 = vmul.f32 %v3869, %v3877
        %v3879 = vadd.f32 %v3878, 1.1283791
        %v3880 = vmul.f32 %v3462, %v3879
        %v3881 = vmul.f32 %v3869, 3.8918573e-05
        %v3882 = vadd.f32 %v3881, 0.001143296
        %v3883 = vmul.f32 %v3869, %v3882
        %v3884 = vadd.f32 %v3883, 0.014752088
        %v3885 = vmul.f32 %v3869, %v3884
        %v3886 = vadd.f32 %v3885, 0.112945676
        %v3887 = vmul.f32 %v3869, %v3886
        %v3888 = vadd.f32 %v3887, 0.4994258
        %v3889 = vmul.f32 %v3869, %v3888
        %v3890 = vadd.f32 %v3889, 1.0
        %v3891 = vrcp.pop %v3890
        %v3892 = vmul.f32 %v3890, %v3891
        %v3893 = vsub.f32 1.0, %v3892
        %v3894 = vmul.f32 %v3891, %v3893
        %v3895 = vadd.f32 %v3891, %v3894
        %vm3896 = vweird.f32 %v3890
        %vm3897 = vweird.f32 %v3891
        %vm3898 = vmor %vm3896, %vm3897
        %v3899 = vsel %vm3898, %v3891, %v3895
        %v3900 = vand.u32 2147483647, %v3890
        %vm3901 = vcmp.eq.f32.partialorder %v3900, 8.507059e+37
        %v3902 = vand.u32 %v3890, 2147483648
        %v3903 = vor.u32 1.1754944e-38, %v3902
        %v3904 = vsel %vm3901, %v3903, %v3899
        %v3905 = vmul.f32 %v3880, %v3904
        %v3906 = vmin.f32 %v3905, 1.0
        %v3907 = vmax.f32 %v3906, -1.0
        %v3908 = vmul.f32 %v3463, %v3463
        %v3909 = vmin.f32 16.0, %v3908
        %v3910 = vmul.f32 %v3909, 2.1237322e-06
        %v3911 = vadd.f32 %v3910, 0.00028619796
        %v3912 = vmul.f32 %v3909, %v3911
        %v3913 = vadd.f32 %v3912, 0.0036580483
        %v3914 = vmul.f32 %v3909, %v3913
        %v3915 = vadd.f32 %v3914, 0.05243302
        %v3916 = vmul.f32 %v3909, %v3915
        %v3917 = vadd.f32 %v3916, 0.18741608
        %v3918 = vmul.f32 %v3909, %v3917
        %v3919 = vadd.f32 %v3918, 1.1283791
        %v3920 = vmul.f32 %v3463, %v3919
        %v3921 = vmul.f32 %v3909, 3.8918573e-05
        %v3922 = vadd.f32 %v3921, 0.001143296
        %v3923 = vmul.f32 %v3909, %v3922
        %v3924 = vadd.f32 %v3923, 0.014752088
        %v3925 = vmul.f32 %v3909, %v3924
        %v3926 = vadd.f32 %v3925, 0.112945676
        %v3927 = vmul.f32 %v3909, %v3926
        %v3928 = vadd.f32 %v3927, 0.4994258
        %v3929 = vmul.f32 %v3909, %v3928
        %v3930 = vadd.f32 %v3929, 1.0
        %v3931 = vrcp.pop %v3930
        %v3932 = vmul.f32 %v3930, %v3931
        %v3933 = vsub.f32 1.0, %v3932
        %v3934 = vmul.f32 %v3931, %v3933
        %v3935 = vadd.f32 %v3931, %v3934
        %vm3936 = vweird.f32 %v3930
        %vm3937 = vweird.f32 %v3931
        %vm3938 = vmor %vm3936, %vm3937
        %v3939 = vsel %vm3938, %v3931, %v3935
        %v3940 = vand.u32 2147483647, %v3930
        %vm3941 = vcmp.eq.f32.partialorder %v3940, 8.507059e+37
        %v3942 = vand.u32 %v3930, 2147483648
        %v3943 = vor.u32 1.1754944e-38, %v3942
        %v3944 = vsel %vm3941, %v3943, %v3939
        %v3945 = vmul.f32 %v3920, %v3944
        %v3946 = vmin.f32 %v3945, 1.0
        %v3947 = vmax.f32 %v3946, -1.0
        %v3948 = vmul.f32 %v3464, %v3464
        %v3949 = vmin.f32 16.0, %v3948
        %v3950 = vmul.f32 %v3949, 2.1237322e-06
        %v3951 = vadd.f32 %v3950, 0.00028619796
        %v3952 = vmul.f32 %v3949, %v3951
        %v3953 = vadd.f32 %v3952, 0.0036580483
        %v3954 = vmul.f32 %v3949, %v3953
        %v3955 = vadd.f32 %v3954, 0.05243302
        %v3956 = vmul.f32 %v3949, %v3955
        %v3957 = vadd.f32 %v3956, 0.18741608
        %v3958 = vmul.f32 %v3949, %v3957
        %v3959 = vadd.f32 %v3958, 1.1283791
        %v3960 = vmul.f32 %v3464, %v3959
        %v3961 = vmul.f32 %v3949, 3.8918573e-05
        %v3962 = vadd.f32 %v3961, 0.001143296
        %v3963 = vmul.f32 %v3949, %v3962
        %v3964 = vadd.f32 %v3963, 0.014752088
        %v3965 = vmul.f32 %v3949, %v3964
        %v3966 = vadd.f32 %v3965, 0.112945676
        %v3967 = vmul.f32 %v3949, %v3966
        %v3968 = vadd.f32 %v3967, 0.4994258
        %v3969 = vmul.f32 %v3949, %v3968
        %v3970 = vadd.f32 %v3969, 1.0
        %v3971 = vrcp.pop %v3970
        %v3972 = vmul.f32 %v3970, %v3971
        %v3973 = vsub.f32 1.0, %v3972
        %v3974 = vmul.f32 %v3971, %v3973
        %v3975 = vadd.f32 %v3971, %v3974
        %vm3976 = vweird.f32 %v3970
        %vm3977 = vweird.f32 %v3971
        %vm3978 = vmor %vm3976, %vm3977
        %v3979 = vsel %vm3978, %v3971, %v3975
        %v3980 = vand.u32 2147483647, %v3970
        %vm3981 = vcmp.eq.f32.partialorder %v3980, 8.507059e+37
        %v3982 = vand.u32 %v3970, 2147483648
        %v3983 = vor.u32 1.1754944e-38, %v3982
        %v3984 = vsel %vm3981, %v3983, %v3979
        %v3985 = vmul.f32 %v3960, %v3984
        %v3986 = vmin.f32 %v3985, 1.0
        %v3987 = vmax.f32 %v3986, -1.0
        %v3988 = vmul.f32 %v3465, %v3465
        %v3989 = vmin.f32 16.0, %v3988
        %v3990 = vmul.f32 %v3989, 2.1237322e-06
        %v3991 = vadd.f32 %v3990, 0.00028619796
        %v3992 = vmul.f32 %v3989, %v3991
        %v3993 = vadd.f32 %v3992, 0.0036580483
        %v3994 = vmul.f32 %v3989, %v3993
        %v3995 = vadd.f32 %v3994, 0.05243302
        %v3996 = vmul.f32 %v3989, %v3995
        %v3997 = vadd.f32 %v3996, 0.18741608
        %v3998 = vmul.f32 %v3989, %v3997
        %v3999 = vadd.f32 %v3998, 1.1283791
        %v4000 = vmul.f32 %v3465, %v3999
        %v4001 = vmul.f32 %v3989, 3.8918573e-05
        %v4002 = vadd.f32 %v4001, 0.001143296
        %v4003 = vmul.f32 %v3989, %v4002
        %v4004 = vadd.f32 %v4003, 0.014752088
        %v4005 = vmul.f32 %v3989, %v4004
        %v4006 = vadd.f32 %v4005, 0.112945676
        %v4007 = vmul.f32 %v3989, %v4006
        %v4008 = vadd.f32 %v4007, 0.4994258
        %v4009 = vmul.f32 %v3989, %v4008
        %v4010 = vadd.f32 %v4009, 1.0
        %v4011 = vrcp.pop %v4010
        %v4012 = vmul.f32 %v4010, %v4011
        %v4013 = vsub.f32 1.0, %v4012
        %v4014 = vmul.f32 %v4011, %v4013
        %v4015 = vadd.f32 %v4011, %v4014
        %vm4016 = vweird.f32 %v4010
        %vm4017 = vweird.f32 %v4011
        %vm4018 = vmor %vm4016, %vm4017
        %v4019 = vsel %vm4018, %v4011, %v4015
        %v4020 = vand.u32 2147483647, %v4010
        %vm4021 = vcmp.eq.f32.partialorder %v4020, 8.507059e+37
        %v4022 = vand.u32 %v4010, 2147483648
        %v4023 = vor.u32 1.1754944e-38, %v4022
        %v4024 = vsel %vm4021, %v4023, %v4019
        %v4025 = vmul.f32 %v4000, %v4024
        %v4026 = vmin.f32 %v4025, 1.0
        %v4027 = vmax.f32 %v4026, -1.0
        %v4028 = vmul.f32 %v3466, %v3466
        %v4029 = vmin.f32 16.0, %v4028
        %v4030 = vmul.f32 %v4029, 2.1237322e-06
        %v4031 = vadd.f32 %v4030, 0.00028619796
        %v4032 = vmul.f32 %v4029, %v4031
        %v4033 = vadd.f32 %v4032, 0.0036580483
        %v4034 = vmul.f32 %v4029, %v4033
        %v4035 = vadd.f32 %v4034, 0.05243302
        %v4036 = vmul.f32 %v4029, %v4035
        %v4037 = vadd.f32 %v4036, 0.18741608
        %v4038 = vmul.f32 %v4029, %v4037
        %v4039 = vadd.f32 %v4038, 1.1283791
        %v4040 = vmul.f32 %v3466, %v4039
        %v4041 = vmul.f32 %v4029, 3.8918573e-05
        %v4042 = vadd.f32 %v4041, 0.001143296
        %v4043 = vmul.f32 %v4029, %v4042
        %v4044 = vadd.f32 %v4043, 0.014752088
        %v4045 = vmul.f32 %v4029, %v4044
        %v4046 = vadd.f32 %v4045, 0.112945676
        %v4047 = vmul.f32 %v4029, %v4046
        %v4048 = vadd.f32 %v4047, 0.4994258
        %v4049 = vmul.f32 %v4029, %v4048
        %v4050 = vadd.f32 %v4049, 1.0
        %v4051 = vrcp.pop %v4050
        %v4052 = vmul.f32 %v4050, %v4051
        %v4053 = vsub.f32 1.0, %v4052
        %v4054 = vmul.f32 %v4051, %v4053
        %v4055 = vadd.f32 %v4051, %v4054
        %vm4056 = vweird.f32 %v4050
        %vm4057 = vweird.f32 %v4051
        %vm4058 = vmor %vm4056, %vm4057
        %v4059 = vsel %vm4058, %v4051, %v4055
        %v4060 = vand.u32 2147483647, %v4050
        %vm4061 = vcmp.eq.f32.partialorder %v4060, 8.507059e+37
        %v4062 = vand.u32 %v4050, 2147483648
        %v4063 = vor.u32 1.1754944e-38, %v4062
        %v4064 = vsel %vm4061, %v4063, %v4059
        %v4065 = vmul.f32 %v4040, %v4064
        %v4066 = vmin.f32 %v4065, 1.0
        %v4067 = vmax.f32 %v4066, -1.0
        %v4068 = vmul.f32 %v3467, %v3467
        %v4069 = vmin.f32 16.0, %v4068
        %v4070 = vmul.f32 %v4069, 2.1237322e-06
        %v4071 = vadd.f32 %v4070, 0.00028619796
        %v4072 = vmul.f32 %v4069, %v4071
        %v4073 = vadd.f32 %v4072, 0.0036580483
        %v4074 = vmul.f32 %v4069, %v4073
        %v4075 = vadd.f32 %v4074, 0.05243302
        %v4076 = vmul.f32 %v4069, %v4075
        %v4077 = vadd.f32 %v4076, 0.18741608
        %v4078 = vmul.f32 %v4069, %v4077
        %v4079 = vadd.f32 %v4078, 1.1283791
        %v4080 = vmul.f32 %v3467, %v4079
        %v4081 = vmul.f32 %v4069, 3.8918573e-05
        %v4082 = vadd.f32 %v4081, 0.001143296
        %v4083 = vmul.f32 %v4069, %v4082
        %v4084 = vadd.f32 %v4083, 0.014752088
        %v4085 = vmul.f32 %v4069, %v4084
        %v4086 = vadd.f32 %v4085, 0.112945676
        %v4087 = vmul.f32 %v4069, %v4086
        %v4088 = vadd.f32 %v4087, 0.4994258
        %v4089 = vmul.f32 %v4069, %v4088
        %v4090 = vadd.f32 %v4089, 1.0
        %v4091 = vrcp.pop %v4090
        %v4092 = vmul.f32 %v4090, %v4091
        %v4093 = vsub.f32 1.0, %v4092
        %v4094 = vmul.f32 %v4091, %v4093
        %v4095 = vadd.f32 %v4091, %v4094
        %vm4096 = vweird.f32 %v4090
        %vm4097 = vweird.f32 %v4091
        %vm4098 = vmor %vm4096, %vm4097
        %v4099 = vsel %vm4098, %v4091, %v4095
        %v4100 = vand.u32 2147483647, %v4090
        %vm4101 = vcmp.eq.f32.partialorder %v4100, 8.507059e+37
        %v4102 = vand.u32 %v4090, 2147483648
        %v4103 = vor.u32 1.1754944e-38, %v4102
        %v4104 = vsel %vm4101, %v4103, %v4099
        %v4105 = vmul.f32 %v4080, %v4104
        %v4106 = vmin.f32 %v4105, 1.0
        %v4107 = vmax.f32 %v4106, -1.0
        %v4108 = vadd.f32 %v3507, 1.0
        %v4109 = vadd.f32 %v3547, 1.0
        %v4110 = vadd.f32 %v3587, 1.0
        %v4111 = vadd.f32 %v3627, 1.0
        %v4112 = vadd.f32 %v3667, 1.0
        %v4113 = vadd.f32 %v3707, 1.0
        %v4114 = vadd.f32 %v3747, 1.0
        %v4115 = vadd.f32 %v3787, 1.0
        %v4116 = vadd.f32 %v3827, 1.0
        %v4117 = vadd.f32 %v3867, 1.0
        %v4118 = vadd.f32 %v3907, 1.0
        %v4119 = vadd.f32 %v3947, 1.0
        %v4120 = vadd.f32 %v3987, 1.0
        %v4121 = vadd.f32 %v4027, 1.0
        %v4122 = vadd.f32 %v4067, 1.0
        %v4123 = vadd.f32 %v4107, 1.0
        %v4124 = vmul.f32 %v3436, %v4108
        %v4125 = vmul.f32 %v3437, %v4109
        %v4126 = vmul.f32 %v3438, %v4110
        %v4127 = vmul.f32 %v3439, %v4111
        %v4128 = vmul.f32 %v3440, %v4112
        %v4129 = vmul.f32 %v3441, %v4113
        %v4130 = vmul.f32 %v3442, %v4114
        %v4131 = vmul.f32 %v3443, %v4115
        %v4132 = vmul.f32 %v3444, %v4116
        %v4133 = vmul.f32 %v3445, %v4117
        %v4134 = vmul.f32 %v3446, %v4118
        %v4135 = vmul.f32 %v3447, %v4119
        %v4136 = vmul.f32 %v3448, %v4120
        %v4137 = vmul.f32 %v3449, %v4121
        %v4138 = vmul.f32 %v3450, %v4122
        %v4139 = vmul.f32 %v3451, %v4123
        %v4140 = vpack.c.bf16 %v4125, %v4124
        %v4141 = vpack.c.bf16 %v4127, %v4126
        %v4142 = vpack.c.bf16 %v4129, %v4128
        %v4143 = vpack.c.bf16 %v4131, %v4130
        %v4144 = vpack.c.bf16 %v4133, %v4132
        %v4145 = vpack.c.bf16 %v4135, %v4134
        %v4146 = vpack.c.bf16 %v4137, %v4136
        %v4147 = vpack.c.bf16 %v4139, %v4138
        %s4148 = scalar_lea.vmem [#allocation8], 128
        %v4149 = vld [vmem:[%s4148] sm:$0xf]
        %v4150 = vld [vmem:[%s4148 + $0x4] sm:$0xf]
        %v4151 = vld [vmem:[%s4148 + $0x8] sm:$0xf]
        %v4152 = vld [vmem:[%s4148 + $0xc] sm:$0xf]
        %v4153 = vld [vmem:[%s4148 + $0x10] sm:$0xf]
        %v4154 = vld [vmem:[%s4148 + $0x14] sm:$0xf]
        %v4155 = vld [vmem:[%s4148 + $0x18] sm:$0xf]
        %v4156 = vld [vmem:[%s4148 + $0x1c] sm:$0xf]
        %v4157 = vld [vmem:[%s4148 + $0x20] sm:$0xf]
        %v4158 = vld [vmem:[%s4148 + $0x24] sm:$0xf]
        %v4159 = vld [vmem:[%s4148 + $0x28] sm:$0xf]
        %v4160 = vld [vmem:[%s4148 + $0x2c] sm:$0xf]
        %v4161 = vld [vmem:[%s4148 + $0x30] sm:$0xf]
        %v4162 = vld [vmem:[%s4148 + $0x34] sm:$0xf]
        %v4163 = vld [vmem:[%s4148 + $0x38] sm:$0xf]
        %v4164 = vld [vmem:[%s4148 + $0x3c] sm:$0xf]
        %v4181 = vunpack.c.l.b16 %v4149
        %v4182 = vunpack.c.l.b16 %v4150
        %v4183 = vunpack.c.l.b16 %v4151
        %v4184 = vunpack.c.l.b16 %v4152
        %v4185 = vunpack.c.l.b16 %v4153
        %v4186 = vunpack.c.l.b16 %v4154
        %v4187 = vunpack.c.l.b16 %v4155
        %v4188 = vunpack.c.l.b16 %v4156
        %v4189 = vunpack.c.l.b16 %v4157
        %v4190 = vunpack.c.l.b16 %v4158
        %v4191 = vunpack.c.l.b16 %v4159
        %v4192 = vunpack.c.l.b16 %v4160
        %v4193 = vunpack.c.l.b16 %v4161
        %v4194 = vunpack.c.l.b16 %v4162
        %v4195 = vunpack.c.l.b16 %v4163
        %v4196 = vunpack.c.l.b16 %v4164
        %v4197 = vpack.c.b16 %v4182, %v4181
        %v4198 = vpack.c.b16 %v4184, %v4183
        %v4199 = vpack.c.b16 %v4186, %v4185
        %v4200 = vpack.c.b16 %v4188, %v4187
        %v4201 = vpack.c.b16 %v4190, %v4189
        %v4202 = vpack.c.b16 %v4192, %v4191
        %v4203 = vpack.c.b16 %v4194, %v4193
        %v4204 = vpack.c.b16 %v4196, %v4195
        %4213 = vmatpush.bf16.msra.mxu0 %v4204
        %4214 = vmatpush.bf16.msra.mxu0 %v4203
        %4215 = vmatpush.bf16.msra.mxu0 %v4202
        %4216 = vmatpush.bf16.msra.mxu0 %v4201
        %4217 = vmatpush.bf16.msra.mxu0 %v4200
        %4218 = vmatpush.bf16.msra.mxu0 %v4199
        %4219 = vmatpush.bf16.msra.mxu0 %v4198
        %4220 = vmatpush.bf16.msra.mxu0 %v4197
        %4221 = vmatmul.bf16.gmra.mxu0 %v4140
        %v4222 = vpop.f32.mrf.mxu0
        %v4223 = vadd.f32 0.0, %v4222
        %v4224 = vpop.f32.mrf.mxu0
        %v4225 = vadd.f32 0.0, %v4224
        %4226 = vmatmul.bf16.gmra.mxu0 %v4141
        %v4227 = vpop.f32.mrf.mxu0
        %v4228 = vadd.f32 0.0, %v4227
        %v4229 = vpop.f32.mrf.mxu0
        %v4230 = vadd.f32 0.0, %v4229
        %4231 = vmatmul.bf16.gmra.mxu0 %v4142
        %v4232 = vpop.f32.mrf.mxu0
        %v4233 = vadd.f32 0.0, %v4232
        %v4234 = vpop.f32.mrf.mxu0
        %v4235 = vadd.f32 0.0, %v4234
        %4236 = vmatmul.bf16.gmra.mxu0 %v4143
        %v4237 = vpop.f32.mrf.mxu0
        %v4238 = vadd.f32 0.0, %v4237
        %v4239 = vpop.f32.mrf.mxu0
        %v4240 = vadd.f32 0.0, %v4239
        %4241 = vmatmul.bf16.gmra.mxu0 %v4144
        %v4242 = vpop.f32.mrf.mxu0
        %v4243 = vadd.f32 0.0, %v4242
        %v4244 = vpop.f32.mrf.mxu0
        %v4245 = vadd.f32 0.0, %v4244
        %4246 = vmatmul.bf16.gmra.mxu0 %v4145
        %v4247 = vpop.f32.mrf.mxu0
        %v4248 = vadd.f32 0.0, %v4247
        %v4249 = vpop.f32.mrf.mxu0
        %v4250 = vadd.f32 0.0, %v4249
        %4251 = vmatmul.bf16.gmra.mxu0 %v4146
        %v4252 = vpop.f32.mrf.mxu0
        %v4253 = vadd.f32 0.0, %v4252
        %v4254 = vpop.f32.mrf.mxu0
        %v4255 = vadd.f32 0.0, %v4254
        %4256 = vmatmul.bf16.gmra.mxu0 %v4147
        %v4257 = vpop.f32.mrf.mxu0
        %v4258 = vadd.f32 0.0, %v4257
        %v4259 = vpop.f32.mrf.mxu0
        %v4260 = vadd.f32 0.0, %v4259
        %4261 = vdwg.mxu0
        %v4262 = vadd.f32 %v3115, %v4223
        %v4263 = vadd.f32 %v3116, %v4225
        %v4264 = vadd.f32 %v3117, %v4228
        %v4265 = vadd.f32 %v3118, %v4230
        %v4266 = vadd.f32 %v3119, %v4233
        %v4267 = vadd.f32 %v3120, %v4235
        %v4268 = vadd.f32 %v3121, %v4238
        %v4269 = vadd.f32 %v3122, %v4240
        %v4270 = vadd.f32 %v3123, %v4243
        %v4271 = vadd.f32 %v3124, %v4245
        %v4272 = vadd.f32 %v3125, %v4248
        %v4273 = vadd.f32 %v3126, %v4250
        %v4274 = vadd.f32 %v3127, %v4253
        %v4275 = vadd.f32 %v3128, %v4255
        %v4276 = vadd.f32 %v3129, %v4258
        %v4277 = vadd.f32 %v3130, %v4260
        %s4278 = scalar_lea.vmem %s4, 48
        %v4279 = vld [vmem:[%s4278] sm:$0xff]
        %v4280 = vld [vmem:[%s4278 + $0x8] sm:$0x1]
        %s4281 = scalar_lea.vmem %s5, 3
        %v4282 = vld [vmem:[%s4281] sm:$0x1]
        %v4283 = vperm.slane %v4279, 4
        %v4284 = vmul.f32 %v698, %v4283
        %v4285 = vmul.f32 %v699, %v4283
        %v4286 = vmul.f32 %v700, %v4283
        %v4287 = vmul.f32 %v701, %v4283
        %v4288 = vmul.f32 %v702, %v4283
        %v4289 = vmul.f32 %v703, %v4283
        %v4290 = vmul.f32 %v704, %v4283
        %v4291 = vmul.f32 %v705, %v4283
        %v4292 = vmul.f32 %v706, %v4283
        %v4293 = vmul.f32 %v707, %v4283
        %v4294 = vmul.f32 %v708, %v4283
        %v4295 = vmul.f32 %v709, %v4283
        %v4296 = vmul.f32 %v710, %v4283
        %v4297 = vmul.f32 %v711, %v4283
        %v4298 = vmul.f32 %v712, %v4283
        %v4299 = vmul.f32 %v713, %v4283
        %v4301 = vperm.slane %v4282, 0
        %v4303 = vadd.f32 %v4284, %v4301
        %v4304 = vadd.f32 %v4285, %v4301
        %v4305 = vadd.f32 %v4286, %v4301
        %v4306 = vadd.f32 %v4287, %v4301
        %v4307 = vadd.f32 %v4288, %v4301
        %v4308 = vadd.f32 %v4289, %v4301
        %v4309 = vadd.f32 %v4290, %v4301
        %v4310 = vadd.f32 %v4291, %v4301
        %v4311 = vadd.f32 %v4292, %v4301
        %v4312 = vadd.f32 %v4293, %v4301
        %v4313 = vadd.f32 %v4294, %v4301
        %v4314 = vadd.f32 %v4295, %v4301
        %v4315 = vadd.f32 %v4296, %v4301
        %v4316 = vadd.f32 %v4297, %v4301
        %v4317 = vadd.f32 %v4298, %v4301
        %v4318 = vadd.f32 %v4299, %v4301
        %v4319 = vperm.slane %v4279, 0
        %v4320 = vmul.f32 %v750, %v4319
        %v4321 = vmul.f32 %v751, %v4319
        %v4322 = vmul.f32 %v752, %v4319
        %v4323 = vmul.f32 %v753, %v4319
        %v4324 = vmul.f32 %v754, %v4319
        %v4325 = vmul.f32 %v755, %v4319
        %v4326 = vmul.f32 %v756, %v4319
        %v4327 = vmul.f32 %v757, %v4319
        %v4328 = vmul.f32 %v758, %v4319
        %v4329 = vmul.f32 %v759, %v4319
        %v4330 = vmul.f32 %v760, %v4319
        %v4331 = vmul.f32 %v761, %v4319
        %v4332 = vmul.f32 %v762, %v4319
        %v4333 = vmul.f32 %v763, %v4319
        %v4334 = vmul.f32 %v764, %v4319
        %v4335 = vmul.f32 %v765, %v4319
        %v4336 = vadd.f32 %v4303, %v4320
        %v4337 = vadd.f32 %v4304, %v4321
        %v4338 = vadd.f32 %v4305, %v4322
        %v4339 = vadd.f32 %v4306, %v4323
        %v4340 = vadd.f32 %v4307, %v4324
        %v4341 = vadd.f32 %v4308, %v4325
        %v4342 = vadd.f32 %v4309, %v4326
        %v4343 = vadd.f32 %v4310, %v4327
        %v4344 = vadd.f32 %v4311, %v4328
        %v4345 = vadd.f32 %v4312, %v4329
        %v4346 = vadd.f32 %v4313, %v4330
        %v4347 = vadd.f32 %v4314, %v4331
        %v4348 = vadd.f32 %v4315, %v4332
        %v4349 = vadd.f32 %v4316, %v4333
        %v4350 = vadd.f32 %v4317, %v4334
        %v4351 = vadd.f32 %v4318, %v4335
        %v4352 = vperm.slane %v4279, 1
        %v4353 = vmul.f32 %v799, %v4352
        %v4354 = vmul.f32 %v800, %v4352
        %v4355 = vmul.f32 %v801, %v4352
        %v4356 = vmul.f32 %v802, %v4352
        %v4357 = vmul.f32 %v803, %v4352
        %v4358 = vmul.f32 %v804, %v4352
        %v4359 = vmul.f32 %v805, %v4352
        %v4360 = vmul.f32 %v806, %v4352
        %v4361 = vmul.f32 %v807, %v4352
        %v4362 = vmul.f32 %v808, %v4352
        %v4363 = vmul.f32 %v809, %v4352
        %v4364 = vmul.f32 %v810, %v4352
        %v4365 = vmul.f32 %v811, %v4352
        %v4366 = vmul.f32 %v812, %v4352
        %v4367 = vmul.f32 %v813, %v4352
        %v4368 = vmul.f32 %v814, %v4352
        %v4369 = vadd.f32 %v4336, %v4353
        %v4370 = vadd.f32 %v4337, %v4354
        %v4371 = vadd.f32 %v4338, %v4355
        %v4372 = vadd.f32 %v4339, %v4356
        %v4373 = vadd.f32 %v4340, %v4357
        %v4374 = vadd.f32 %v4341, %v4358
        %v4375 = vadd.f32 %v4342, %v4359
        %v4376 = vadd.f32 %v4343, %v4360
        %v4377 = vadd.f32 %v4344, %v4361
        %v4378 = vadd.f32 %v4345, %v4362
        %v4379 = vadd.f32 %v4346, %v4363
        %v4380 = vadd.f32 %v4347, %v4364
        %v4381 = vadd.f32 %v4348, %v4365
        %v4382 = vadd.f32 %v4349, %v4366
        %v4383 = vadd.f32 %v4350, %v4367
        %v4384 = vadd.f32 %v4351, %v4368
        %v4385 = vperm.slane %v4279, 2
        %v4386 = vmul.f32 %v848, %v4385
        %v4387 = vmul.f32 %v849, %v4385
        %v4388 = vmul.f32 %v850, %v4385
        %v4389 = vmul.f32 %v851, %v4385
        %v4390 = vmul.f32 %v852, %v4385
        %v4391 = vmul.f32 %v853, %v4385
        %v4392 = vmul.f32 %v854, %v4385
        %v4393 = vmul.f32 %v855, %v4385
        %v4394 = vmul.f32 %v856, %v4385
        %v4395 = vmul.f32 %v857, %v4385
        %v4396 = vmul.f32 %v858, %v4385
        %v4397 = vmul.f32 %v859, %v4385
        %v4398 = vmul.f32 %v860, %v4385
        %v4399 = vmul.f32 %v861, %v4385
        %v4400 = vmul.f32 %v862, %v4385
        %v4401 = vmul.f32 %v863, %v4385
        %v4402 = vadd.f32 %v4369, %v4386
        %v4403 = vadd.f32 %v4370, %v4387
        %v4404 = vadd.f32 %v4371, %v4388
        %v4405 = vadd.f32 %v4372, %v4389
        %v4406 = vadd.f32 %v4373, %v4390
        %v4407 = vadd.f32 %v4374, %v4391
        %v4408 = vadd.f32 %v4375, %v4392
        %v4409 = vadd.f32 %v4376, %v4393
        %v4410 = vadd.f32 %v4377, %v4394
        %v4411 = vadd.f32 %v4378, %v4395
        %v4412 = vadd.f32 %v4379, %v4396
        %v4413 = vadd.f32 %v4380, %v4397
        %v4414 = vadd.f32 %v4381, %v4398
        %v4415 = vadd.f32 %v4382, %v4399
        %v4416 = vadd.f32 %v4383, %v4400
        %v4417 = vadd.f32 %v4384, %v4401
        %v4418 = vperm.slane %v4279, 3
        %v4419 = vmul.f32 %v897, %v4418
        %v4420 = vmul.f32 %v898, %v4418
        %v4421 = vmul.f32 %v899, %v4418
        %v4422 = vmul.f32 %v900, %v4418
        %v4423 = vmul.f32 %v901, %v4418
        %v4424 = vmul.f32 %v902, %v4418
        %v4425 = vmul.f32 %v903, %v4418
        %v4426 = vmul.f32 %v904, %v4418
        %v4427 = vmul.f32 %v905, %v4418
        %v4428 = vmul.f32 %v906, %v4418
        %v4429 = vmul.f32 %v907, %v4418
        %v4430 = vmul.f32 %v908, %v4418
        %v4431 = vmul.f32 %v909, %v4418
        %v4432 = vmul.f32 %v910, %v4418
        %v4433 = vmul.f32 %v911, %v4418
        %v4434 = vmul.f32 %v912, %v4418
        %v4435 = vadd.f32 %v4402, %v4419
        %v4436 = vadd.f32 %v4403, %v4420
        %v4437 = vadd.f32 %v4404, %v4421
        %v4438 = vadd.f32 %v4405, %v4422
        %v4439 = vadd.f32 %v4406, %v4423
        %v4440 = vadd.f32 %v4407, %v4424
        %v4441 = vadd.f32 %v4408, %v4425
        %v4442 = vadd.f32 %v4409, %v4426
        %v4443 = vadd.f32 %v4410, %v4427
        %v4444 = vadd.f32 %v4411, %v4428
        %v4445 = vadd.f32 %v4412, %v4429
        %v4446 = vadd.f32 %v4413, %v4430
        %v4447 = vadd.f32 %v4414, %v4431
        %v4448 = vadd.f32 %v4415, %v4432
        %v4449 = vadd.f32 %v4416, %v4433
        %v4450 = vadd.f32 %v4417, %v4434
        %v4451 = vperm.slane %v4279, 5
        %v4452 = vmul.f32 %v946, %v4451
        %v4453 = vmul.f32 %v947, %v4451
        %v4454 = vmul.f32 %v948, %v4451
        %v4455 = vmul.f32 %v949, %v4451
        %v4456 = vmul.f32 %v950, %v4451
        %v4457 = vmul.f32 %v951, %v4451
        %v4458 = vmul.f32 %v952, %v4451
        %v4459 = vmul.f32 %v953, %v4451
        %v4460 = vmul.f32 %v954, %v4451
        %v4461 = vmul.f32 %v955, %v4451
        %v4462 = vmul.f32 %v956, %v4451
        %v4463 = vmul.f32 %v957, %v4451
        %v4464 = vmul.f32 %v958, %v4451
        %v4465 = vmul.f32 %v959, %v4451
        %v4466 = vmul.f32 %v960, %v4451
        %v4467 = vmul.f32 %v961, %v4451
        %v4468 = vadd.f32 %v4435, %v4452
        %v4469 = vadd.f32 %v4436, %v4453
        %v4470 = vadd.f32 %v4437, %v4454
        %v4471 = vadd.f32 %v4438, %v4455
        %v4472 = vadd.f32 %v4439, %v4456
        %v4473 = vadd.f32 %v4440, %v4457
        %v4474 = vadd.f32 %v4441, %v4458
        %v4475 = vadd.f32 %v4442, %v4459
        %v4476 = vadd.f32 %v4443, %v4460
        %v4477 = vadd.f32 %v4444, %v4461
        %v4478 = vadd.f32 %v4445, %v4462
        %v4479 = vadd.f32 %v4446, %v4463
        %v4480 = vadd.f32 %v4447, %v4464
        %v4481 = vadd.f32 %v4448, %v4465
        %v4482 = vadd.f32 %v4449, %v4466
        %v4483 = vadd.f32 %v4450, %v4467
        %v4484 = vperm.slane %v4279, 6
        %v4485 = vmul.f32 %v996, %v4484
        %v4486 = vmul.f32 %v997, %v4484
        %v4487 = vmul.f32 %v998, %v4484
        %v4488 = vmul.f32 %v999, %v4484
        %v4489 = vmul.f32 %v1000, %v4484
        %v4490 = vmul.f32 %v1001, %v4484
        %v4491 = vmul.f32 %v1002, %v4484
        %v4492 = vmul.f32 %v1003, %v4484
        %v4493 = vmul.f32 %v1004, %v4484
        %v4494 = vmul.f32 %v1005, %v4484
        %v4495 = vmul.f32 %v1006, %v4484
        %v4496 = vmul.f32 %v1007, %v4484
        %v4497 = vmul.f32 %v1008, %v4484
        %v4498 = vmul.f32 %v1009, %v4484
        %v4499 = vmul.f32 %v1010, %v4484
        %v4500 = vmul.f32 %v1011, %v4484
        %v4501 = vadd.f32 %v4468, %v4485
        %v4502 = vadd.f32 %v4469, %v4486
        %v4503 = vadd.f32 %v4470, %v4487
        %v4504 = vadd.f32 %v4471, %v4488
        %v4505 = vadd.f32 %v4472, %v4489
        %v4506 = vadd.f32 %v4473, %v4490
        %v4507 = vadd.f32 %v4474, %v4491
        %v4508 = vadd.f32 %v4475, %v4492
        %v4509 = vadd.f32 %v4476, %v4493
        %v4510 = vadd.f32 %v4477, %v4494
        %v4511 = vadd.f32 %v4478, %v4495
        %v4512 = vadd.f32 %v4479, %v4496
        %v4513 = vadd.f32 %v4480, %v4497
        %v4514 = vadd.f32 %v4481, %v4498
        %v4515 = vadd.f32 %v4482, %v4499
        %v4516 = vadd.f32 %v4483, %v4500
        %v4517 = vperm.slane %v4279, 7
        %v4518 = vmul.f32 %v1045, %v4517
        %v4519 = vmul.f32 %v1046, %v4517
        %v4520 = vmul.f32 %v1047, %v4517
        %v4521 = vmul.f32 %v1048, %v4517
        %v4522 = vmul.f32 %v1049, %v4517
        %v4523 = vmul.f32 %v1050, %v4517
        %v4524 = vmul.f32 %v1051, %v4517
        %v4525 = vmul.f32 %v1052, %v4517
        %v4526 = vmul.f32 %v1053, %v4517
        %v4527 = vmul.f32 %v1054, %v4517
        %v4528 = vmul.f32 %v1055, %v4517
        %v4529 = vmul.f32 %v1056, %v4517
        %v4530 = vmul.f32 %v1057, %v4517
        %v4531 = vmul.f32 %v1058, %v4517
        %v4532 = vmul.f32 %v1059, %v4517
        %v4533 = vmul.f32 %v1060, %v4517
        %v4534 = vadd.f32 %v4501, %v4518
        %v4535 = vadd.f32 %v4502, %v4519
        %v4536 = vadd.f32 %v4503, %v4520
        %v4537 = vadd.f32 %v4504, %v4521
        %v4538 = vadd.f32 %v4505, %v4522
        %v4539 = vadd.f32 %v4506, %v4523
        %v4540 = vadd.f32 %v4507, %v4524
        %v4541 = vadd.f32 %v4508, %v4525
        %v4542 = vadd.f32 %v4509, %v4526
        %v4543 = vadd.f32 %v4510, %v4527
        %v4544 = vadd.f32 %v4511, %v4528
        %v4545 = vadd.f32 %v4512, %v4529
        %v4546 = vadd.f32 %v4513, %v4530
        %v4547 = vadd.f32 %v4514, %v4531
        %v4548 = vadd.f32 %v4515, %v4532
        %v4549 = vadd.f32 %v4516, %v4533
        %v4550 = vperm.slane %v4280, 0
        %v4551 = vmul.f32 %v1094, %v4550
        %v4552 = vmul.f32 %v1095, %v4550
        %v4553 = vmul.f32 %v1096, %v4550
        %v4554 = vmul.f32 %v1097, %v4550
        %v4555 = vmul.f32 %v1098, %v4550
        %v4556 = vmul.f32 %v1099, %v4550
        %v4557 = vmul.f32 %v1100, %v4550
        %v4558 = vmul.f32 %v1101, %v4550
        %v4559 = vmul.f32 %v1102, %v4550
        %v4560 = vmul.f32 %v1103, %v4550
        %v4561 = vmul.f32 %v1104, %v4550
        %v4562 = vmul.f32 %v1105, %v4550
        %v4563 = vmul.f32 %v1106, %v4550
        %v4564 = vmul.f32 %v1107, %v4550
        %v4565 = vmul.f32 %v1108, %v4550
        %v4566 = vmul.f32 %v1109, %v4550
        %v4567 = vadd.f32 %v4534, %v4551
        %v4568 = vadd.f32 %v4535, %v4552
        %v4569 = vadd.f32 %v4536, %v4553
        %v4570 = vadd.f32 %v4537, %v4554
        %v4571 = vadd.f32 %v4538, %v4555
        %v4572 = vadd.f32 %v4539, %v4556
        %v4573 = vadd.f32 %v4540, %v4557
        %v4574 = vadd.f32 %v4541, %v4558
        %v4575 = vadd.f32 %v4542, %v4559
        %v4576 = vadd.f32 %v4543, %v4560
        %v4577 = vadd.f32 %v4544, %v4561
        %v4578 = vadd.f32 %v4545, %v4562
        %v4579 = vadd.f32 %v4546, %v4563
        %v4580 = vadd.f32 %v4547, %v4564
        %v4581 = vadd.f32 %v4548, %v4565
        %v4582 = vadd.f32 %v4549, %v4566
        %v4583 = vmul.f32 %v4567, 0.5
        %v4584 = vmul.f32 %v4568, 0.5
        %v4585 = vmul.f32 %v4569, 0.5
        %v4586 = vmul.f32 %v4570, 0.5
        %v4587 = vmul.f32 %v4571, 0.5
        %v4588 = vmul.f32 %v4572, 0.5
        %v4589 = vmul.f32 %v4573, 0.5
        %v4590 = vmul.f32 %v4574, 0.5
        %v4591 = vmul.f32 %v4575, 0.5
        %v4592 = vmul.f32 %v4576, 0.5
        %v4593 = vmul.f32 %v4577, 0.5
        %v4594 = vmul.f32 %v4578, 0.5
        %v4595 = vmul.f32 %v4579, 0.5
        %v4596 = vmul.f32 %v4580, 0.5
        %v4597 = vmul.f32 %v4581, 0.5
        %v4598 = vmul.f32 %v4582, 0.5
        %v4599 = vmul.f32 %v4567, 0.70710677
        %v4600 = vmul.f32 %v4568, 0.70710677
        %v4601 = vmul.f32 %v4569, 0.70710677
        %v4602 = vmul.f32 %v4570, 0.70710677
        %v4603 = vmul.f32 %v4571, 0.70710677
        %v4604 = vmul.f32 %v4572, 0.70710677
        %v4605 = vmul.f32 %v4573, 0.70710677
        %v4606 = vmul.f32 %v4574, 0.70710677
        %v4607 = vmul.f32 %v4575, 0.70710677
        %v4608 = vmul.f32 %v4576, 0.70710677
        %v4609 = vmul.f32 %v4577, 0.70710677
        %v4610 = vmul.f32 %v4578, 0.70710677
        %v4611 = vmul.f32 %v4579, 0.70710677
        %v4612 = vmul.f32 %v4580, 0.70710677
        %v4613 = vmul.f32 %v4581, 0.70710677
        %v4614 = vmul.f32 %v4582, 0.70710677
        %v4615 = vmul.f32 %v4599, %v4599
        %v4616 = vmin.f32 16.0, %v4615
        %v4617 = vmul.f32 %v4616, 2.1237322e-06
        %v4618 = vadd.f32 %v4617, 0.00028619796
        %v4619 = vmul.f32 %v4616, %v4618
        %v4620 = vadd.f32 %v4619, 0.0036580483
        %v4621 = vmul.f32 %v4616, %v4620
        %v4622 = vadd.f32 %v4621, 0.05243302
        %v4623 = vmul.f32 %v4616, %v4622
        %v4624 = vadd.f32 %v4623, 0.18741608
        %v4625 = vmul.f32 %v4616, %v4624
        %v4626 = vadd.f32 %v4625, 1.1283791
        %v4627 = vmul.f32 %v4599, %v4626
        %v4628 = vmul.f32 %v4616, 3.8918573e-05
        %v4629 = vadd.f32 %v4628, 0.001143296
        %v4630 = vmul.f32 %v4616, %v4629
        %v4631 = vadd.f32 %v4630, 0.014752088
        %v4632 = vmul.f32 %v4616, %v4631
        %v4633 = vadd.f32 %v4632, 0.112945676
        %v4634 = vmul.f32 %v4616, %v4633
        %v4635 = vadd.f32 %v4634, 0.4994258
        %v4636 = vmul.f32 %v4616, %v4635
        %v4637 = vadd.f32 %v4636, 1.0
        %v4638 = vrcp.pop %v4637
        %v4639 = vmul.f32 %v4637, %v4638
        %v4640 = vsub.f32 1.0, %v4639
        %v4641 = vmul.f32 %v4638, %v4640
        %v4642 = vadd.f32 %v4638, %v4641
        %vm4643 = vweird.f32 %v4637
        %vm4644 = vweird.f32 %v4638
        %vm4645 = vmor %vm4643, %vm4644
        %v4646 = vsel %vm4645, %v4638, %v4642
        %v4647 = vand.u32 2147483647, %v4637
        %vm4648 = vcmp.eq.f32.partialorder %v4647, 8.507059e+37
        %v4649 = vand.u32 %v4637, 2147483648
        %v4650 = vor.u32 1.1754944e-38, %v4649
        %v4651 = vsel %vm4648, %v4650, %v4646
        %v4652 = vmul.f32 %v4627, %v4651
        %v4653 = vmin.f32 %v4652, 1.0
        %v4654 = vmax.f32 %v4653, -1.0
        %v4655 = vmul.f32 %v4600, %v4600
        %v4656 = vmin.f32 16.0, %v4655
        %v4657 = vmul.f32 %v4656, 2.1237322e-06
        %v4658 = vadd.f32 %v4657, 0.00028619796
        %v4659 = vmul.f32 %v4656, %v4658
        %v4660 = vadd.f32 %v4659, 0.0036580483
        %v4661 = vmul.f32 %v4656, %v4660
        %v4662 = vadd.f32 %v4661, 0.05243302
        %v4663 = vmul.f32 %v4656, %v4662
        %v4664 = vadd.f32 %v4663, 0.18741608
        %v4665 = vmul.f32 %v4656, %v4664
        %v4666 = vadd.f32 %v4665, 1.1283791
        %v4667 = vmul.f32 %v4600, %v4666
        %v4668 = vmul.f32 %v4656, 3.8918573e-05
        %v4669 = vadd.f32 %v4668, 0.001143296
        %v4670 = vmul.f32 %v4656, %v4669
        %v4671 = vadd.f32 %v4670, 0.014752088
        %v4672 = vmul.f32 %v4656, %v4671
        %v4673 = vadd.f32 %v4672, 0.112945676
        %v4674 = vmul.f32 %v4656, %v4673
        %v4675 = vadd.f32 %v4674, 0.4994258
        %v4676 = vmul.f32 %v4656, %v4675
        %v4677 = vadd.f32 %v4676, 1.0
        %v4678 = vrcp.pop %v4677
        %v4679 = vmul.f32 %v4677, %v4678
        %v4680 = vsub.f32 1.0, %v4679
        %v4681 = vmul.f32 %v4678, %v4680
        %v4682 = vadd.f32 %v4678, %v4681
        %vm4683 = vweird.f32 %v4677
        %vm4684 = vweird.f32 %v4678
        %vm4685 = vmor %vm4683, %vm4684
        %v4686 = vsel %vm4685, %v4678, %v4682
        %v4687 = vand.u32 2147483647, %v4677
        %vm4688 = vcmp.eq.f32.partialorder %v4687, 8.507059e+37
        %v4689 = vand.u32 %v4677, 2147483648
        %v4690 = vor.u32 1.1754944e-38, %v4689
        %v4691 = vsel %vm4688, %v4690, %v4686
        %v4692 = vmul.f32 %v4667, %v4691
        %v4693 = vmin.f32 %v4692, 1.0
        %v4694 = vmax.f32 %v4693, -1.0
        %v4695 = vmul.f32 %v4601, %v4601
        %v4696 = vmin.f32 16.0, %v4695
        %v4697 = vmul.f32 %v4696, 2.1237322e-06
        %v4698 = vadd.f32 %v4697, 0.00028619796
        %v4699 = vmul.f32 %v4696, %v4698
        %v4700 = vadd.f32 %v4699, 0.0036580483
        %v4701 = vmul.f32 %v4696, %v4700
        %v4702 = vadd.f32 %v4701, 0.05243302
        %v4703 = vmul.f32 %v4696, %v4702
        %v4704 = vadd.f32 %v4703, 0.18741608
        %v4705 = vmul.f32 %v4696, %v4704
        %v4706 = vadd.f32 %v4705, 1.1283791
        %v4707 = vmul.f32 %v4601, %v4706
        %v4708 = vmul.f32 %v4696, 3.8918573e-05
        %v4709 = vadd.f32 %v4708, 0.001143296
        %v4710 = vmul.f32 %v4696, %v4709
        %v4711 = vadd.f32 %v4710, 0.014752088
        %v4712 = vmul.f32 %v4696, %v4711
        %v4713 = vadd.f32 %v4712, 0.112945676
        %v4714 = vmul.f32 %v4696, %v4713
        %v4715 = vadd.f32 %v4714, 0.4994258
        %v4716 = vmul.f32 %v4696, %v4715
        %v4717 = vadd.f32 %v4716, 1.0
        %v4718 = vrcp.pop %v4717
        %v4719 = vmul.f32 %v4717, %v4718
        %v4720 = vsub.f32 1.0, %v4719
        %v4721 = vmul.f32 %v4718, %v4720
        %v4722 = vadd.f32 %v4718, %v4721
        %vm4723 = vweird.f32 %v4717
        %vm4724 = vweird.f32 %v4718
        %vm4725 = vmor %vm4723, %vm4724
        %v4726 = vsel %vm4725, %v4718, %v4722
        %v4727 = vand.u32 2147483647, %v4717
        %vm4728 = vcmp.eq.f32.partialorder %v4727, 8.507059e+37
        %v4729 = vand.u32 %v4717, 2147483648
        %v4730 = vor.u32 1.1754944e-38, %v4729
        %v4731 = vsel %vm4728, %v4730, %v4726
        %v4732 = vmul.f32 %v4707, %v4731
        %v4733 = vmin.f32 %v4732, 1.0
        %v4734 = vmax.f32 %v4733, -1.0
        %v4735 = vmul.f32 %v4602, %v4602
        %v4736 = vmin.f32 16.0, %v4735
        %v4737 = vmul.f32 %v4736, 2.1237322e-06
        %v4738 = vadd.f32 %v4737, 0.00028619796
        %v4739 = vmul.f32 %v4736, %v4738
        %v4740 = vadd.f32 %v4739, 0.0036580483
        %v4741 = vmul.f32 %v4736, %v4740
        %v4742 = vadd.f32 %v4741, 0.05243302
        %v4743 = vmul.f32 %v4736, %v4742
        %v4744 = vadd.f32 %v4743, 0.18741608
        %v4745 = vmul.f32 %v4736, %v4744
        %v4746 = vadd.f32 %v4745, 1.1283791
        %v4747 = vmul.f32 %v4602, %v4746
        %v4748 = vmul.f32 %v4736, 3.8918573e-05
        %v4749 = vadd.f32 %v4748, 0.001143296
        %v4750 = vmul.f32 %v4736, %v4749
        %v4751 = vadd.f32 %v4750, 0.014752088
        %v4752 = vmul.f32 %v4736, %v4751
        %v4753 = vadd.f32 %v4752, 0.112945676
        %v4754 = vmul.f32 %v4736, %v4753
        %v4755 = vadd.f32 %v4754, 0.4994258
        %v4756 = vmul.f32 %v4736, %v4755
        %v4757 = vadd.f32 %v4756, 1.0
        %v4758 = vrcp.pop %v4757
        %v4759 = vmul.f32 %v4757, %v4758
        %v4760 = vsub.f32 1.0, %v4759
        %v4761 = vmul.f32 %v4758, %v4760
        %v4762 = vadd.f32 %v4758, %v4761
        %vm4763 = vweird.f32 %v4757
        %vm4764 = vweird.f32 %v4758
        %vm4765 = vmor %vm4763, %vm4764
        %v4766 = vsel %vm4765, %v4758, %v4762
        %v4767 = vand.u32 2147483647, %v4757
        %vm4768 = vcmp.eq.f32.partialorder %v4767, 8.507059e+37
        %v4769 = vand.u32 %v4757, 2147483648
        %v4770 = vor.u32 1.1754944e-38, %v4769
        %v4771 = vsel %vm4768, %v4770, %v4766
        %v4772 = vmul.f32 %v4747, %v4771
        %v4773 = vmin.f32 %v4772, 1.0
        %v4774 = vmax.f32 %v4773, -1.0
        %v4775 = vmul.f32 %v4603, %v4603
        %v4776 = vmin.f32 16.0, %v4775
        %v4777 = vmul.f32 %v4776, 2.1237322e-06
        %v4778 = vadd.f32 %v4777, 0.00028619796
        %v4779 = vmul.f32 %v4776, %v4778
        %v4780 = vadd.f32 %v4779, 0.0036580483
        %v4781 = vmul.f32 %v4776, %v4780
        %v4782 = vadd.f32 %v4781, 0.05243302
        %v4783 = vmul.f32 %v4776, %v4782
        %v4784 = vadd.f32 %v4783, 0.18741608
        %v4785 = vmul.f32 %v4776, %v4784
        %v4786 = vadd.f32 %v4785, 1.1283791
        %v4787 = vmul.f32 %v4603, %v4786
        %v4788 = vmul.f32 %v4776, 3.8918573e-05
        %v4789 = vadd.f32 %v4788, 0.001143296
        %v4790 = vmul.f32 %v4776, %v4789
        %v4791 = vadd.f32 %v4790, 0.014752088
        %v4792 = vmul.f32 %v4776, %v4791
        %v4793 = vadd.f32 %v4792, 0.112945676
        %v4794 = vmul.f32 %v4776, %v4793
        %v4795 = vadd.f32 %v4794, 0.4994258
        %v4796 = vmul.f32 %v4776, %v4795
        %v4797 = vadd.f32 %v4796, 1.0
        %v4798 = vrcp.pop %v4797
        %v4799 = vmul.f32 %v4797, %v4798
        %v4800 = vsub.f32 1.0, %v4799
        %v4801 = vmul.f32 %v4798, %v4800
        %v4802 = vadd.f32 %v4798, %v4801
        %vm4803 = vweird.f32 %v4797
        %vm4804 = vweird.f32 %v4798
        %vm4805 = vmor %vm4803, %vm4804
        %v4806 = vsel %vm4805, %v4798, %v4802
        %v4807 = vand.u32 2147483647, %v4797
        %vm4808 = vcmp.eq.f32.partialorder %v4807, 8.507059e+37
        %v4809 = vand.u32 %v4797, 2147483648
        %v4810 = vor.u32 1.1754944e-38, %v4809
        %v4811 = vsel %vm4808, %v4810, %v4806
        %v4812 = vmul.f32 %v4787, %v4811
        %v4813 = vmin.f32 %v4812, 1.0
        %v4814 = vmax.f32 %v4813, -1.0
        %v4815 = vmul.f32 %v4604, %v4604
        %v4816 = vmin.f32 16.0, %v4815
        %v4817 = vmul.f32 %v4816, 2.1237322e-06
        %v4818 = vadd.f32 %v4817, 0.00028619796
        %v4819 = vmul.f32 %v4816, %v4818
        %v4820 = vadd.f32 %v4819, 0.0036580483
        %v4821 = vmul.f32 %v4816, %v4820
        %v4822 = vadd.f32 %v4821, 0.05243302
        %v4823 = vmul.f32 %v4816, %v4822
        %v4824 = vadd.f32 %v4823, 0.18741608
        %v4825 = vmul.f32 %v4816, %v4824
        %v4826 = vadd.f32 %v4825, 1.1283791
        %v4827 = vmul.f32 %v4604, %v4826
        %v4828 = vmul.f32 %v4816, 3.8918573e-05
        %v4829 = vadd.f32 %v4828, 0.001143296
        %v4830 = vmul.f32 %v4816, %v4829
        %v4831 = vadd.f32 %v4830, 0.014752088
        %v4832 = vmul.f32 %v4816, %v4831
        %v4833 = vadd.f32 %v4832, 0.112945676
        %v4834 = vmul.f32 %v4816, %v4833
        %v4835 = vadd.f32 %v4834, 0.4994258
        %v4836 = vmul.f32 %v4816, %v4835
        %v4837 = vadd.f32 %v4836, 1.0
        %v4838 = vrcp.pop %v4837
        %v4839 = vmul.f32 %v4837, %v4838
        %v4840 = vsub.f32 1.0, %v4839
        %v4841 = vmul.f32 %v4838, %v4840
        %v4842 = vadd.f32 %v4838, %v4841
        %vm4843 = vweird.f32 %v4837
        %vm4844 = vweird.f32 %v4838
        %vm4845 = vmor %vm4843, %vm4844
        %v4846 = vsel %vm4845, %v4838, %v4842
        %v4847 = vand.u32 2147483647, %v4837
        %vm4848 = vcmp.eq.f32.partialorder %v4847, 8.507059e+37
        %v4849 = vand.u32 %v4837, 2147483648
        %v4850 = vor.u32 1.1754944e-38, %v4849
        %v4851 = vsel %vm4848, %v4850, %v4846
        %v4852 = vmul.f32 %v4827, %v4851
        %v4853 = vmin.f32 %v4852, 1.0
        %v4854 = vmax.f32 %v4853, -1.0
        %v4855 = vmul.f32 %v4605, %v4605
        %v4856 = vmin.f32 16.0, %v4855
        %v4857 = vmul.f32 %v4856, 2.1237322e-06
        %v4858 = vadd.f32 %v4857, 0.00028619796
        %v4859 = vmul.f32 %v4856, %v4858
        %v4860 = vadd.f32 %v4859, 0.0036580483
        %v4861 = vmul.f32 %v4856, %v4860
        %v4862 = vadd.f32 %v4861, 0.05243302
        %v4863 = vmul.f32 %v4856, %v4862
        %v4864 = vadd.f32 %v4863, 0.18741608
        %v4865 = vmul.f32 %v4856, %v4864
        %v4866 = vadd.f32 %v4865, 1.1283791
        %v4867 = vmul.f32 %v4605, %v4866
        %v4868 = vmul.f32 %v4856, 3.8918573e-05
        %v4869 = vadd.f32 %v4868, 0.001143296
        %v4870 = vmul.f32 %v4856, %v4869
        %v4871 = vadd.f32 %v4870, 0.014752088
        %v4872 = vmul.f32 %v4856, %v4871
        %v4873 = vadd.f32 %v4872, 0.112945676
        %v4874 = vmul.f32 %v4856, %v4873
        %v4875 = vadd.f32 %v4874, 0.4994258
        %v4876 = vmul.f32 %v4856, %v4875
        %v4877 = vadd.f32 %v4876, 1.0
        %v4878 = vrcp.pop %v4877
        %v4879 = vmul.f32 %v4877, %v4878
        %v4880 = vsub.f32 1.0, %v4879
        %v4881 = vmul.f32 %v4878, %v4880
        %v4882 = vadd.f32 %v4878, %v4881
        %vm4883 = vweird.f32 %v4877
        %vm4884 = vweird.f32 %v4878
        %vm4885 = vmor %vm4883, %vm4884
        %v4886 = vsel %vm4885, %v4878, %v4882
        %v4887 = vand.u32 2147483647, %v4877
        %vm4888 = vcmp.eq.f32.partialorder %v4887, 8.507059e+37
        %v4889 = vand.u32 %v4877, 2147483648
        %v4890 = vor.u32 1.1754944e-38, %v4889
        %v4891 = vsel %vm4888, %v4890, %v4886
        %v4892 = vmul.f32 %v4867, %v4891
        %v4893 = vmin.f32 %v4892, 1.0
        %v4894 = vmax.f32 %v4893, -1.0
        %v4895 = vmul.f32 %v4606, %v4606
        %v4896 = vmin.f32 16.0, %v4895
        %v4897 = vmul.f32 %v4896, 2.1237322e-06
        %v4898 = vadd.f32 %v4897, 0.00028619796
        %v4899 = vmul.f32 %v4896, %v4898
        %v4900 = vadd.f32 %v4899, 0.0036580483
        %v4901 = vmul.f32 %v4896, %v4900
        %v4902 = vadd.f32 %v4901, 0.05243302
        %v4903 = vmul.f32 %v4896, %v4902
        %v4904 = vadd.f32 %v4903, 0.18741608
        %v4905 = vmul.f32 %v4896, %v4904
        %v4906 = vadd.f32 %v4905, 1.1283791
        %v4907 = vmul.f32 %v4606, %v4906
        %v4908 = vmul.f32 %v4896, 3.8918573e-05
        %v4909 = vadd.f32 %v4908, 0.001143296
        %v4910 = vmul.f32 %v4896, %v4909
        %v4911 = vadd.f32 %v4910, 0.014752088
        %v4912 = vmul.f32 %v4896, %v4911
        %v4913 = vadd.f32 %v4912, 0.112945676
        %v4914 = vmul.f32 %v4896, %v4913
        %v4915 = vadd.f32 %v4914, 0.4994258
        %v4916 = vmul.f32 %v4896, %v4915
        %v4917 = vadd.f32 %v4916, 1.0
        %v4918 = vrcp.pop %v4917
        %v4919 = vmul.f32 %v4917, %v4918
        %v4920 = vsub.f32 1.0, %v4919
        %v4921 = vmul.f32 %v4918, %v4920
        %v4922 = vadd.f32 %v4918, %v4921
        %vm4923 = vweird.f32 %v4917
        %vm4924 = vweird.f32 %v4918
        %vm4925 = vmor %vm4923, %vm4924
        %v4926 = vsel %vm4925, %v4918, %v4922
        %v4927 = vand.u32 2147483647, %v4917
        %vm4928 = vcmp.eq.f32.partialorder %v4927, 8.507059e+37
        %v4929 = vand.u32 %v4917, 2147483648
        %v4930 = vor.u32 1.1754944e-38, %v4929
        %v4931 = vsel %vm4928, %v4930, %v4926
        %v4932 = vmul.f32 %v4907, %v4931
        %v4933 = vmin.f32 %v4932, 1.0
        %v4934 = vmax.f32 %v4933, -1.0
        %v4935 = vmul.f32 %v4607, %v4607
        %v4936 = vmin.f32 16.0, %v4935
        %v4937 = vmul.f32 %v4936, 2.1237322e-06
        %v4938 = vadd.f32 %v4937, 0.00028619796
        %v4939 = vmul.f32 %v4936, %v4938
        %v4940 = vadd.f32 %v4939, 0.0036580483
        %v4941 = vmul.f32 %v4936, %v4940
        %v4942 = vadd.f32 %v4941, 0.05243302
        %v4943 = vmul.f32 %v4936, %v4942
        %v4944 = vadd.f32 %v4943, 0.18741608
        %v4945 = vmul.f32 %v4936, %v4944
        %v4946 = vadd.f32 %v4945, 1.1283791
        %v4947 = vmul.f32 %v4607, %v4946
        %v4948 = vmul.f32 %v4936, 3.8918573e-05
        %v4949 = vadd.f32 %v4948, 0.001143296
        %v4950 = vmul.f32 %v4936, %v4949
        %v4951 = vadd.f32 %v4950, 0.014752088
        %v4952 = vmul.f32 %v4936, %v4951
        %v4953 = vadd.f32 %v4952, 0.112945676
        %v4954 = vmul.f32 %v4936, %v4953
        %v4955 = vadd.f32 %v4954, 0.4994258
        %v4956 = vmul.f32 %v4936, %v4955
        %v4957 = vadd.f32 %v4956, 1.0
        %v4958 = vrcp.pop %v4957
        %v4959 = vmul.f32 %v4957, %v4958
        %v4960 = vsub.f32 1.0, %v4959
        %v4961 = vmul.f32 %v4958, %v4960
        %v4962 = vadd.f32 %v4958, %v4961
        %vm4963 = vweird.f32 %v4957
        %vm4964 = vweird.f32 %v4958
        %vm4965 = vmor %vm4963, %vm4964
        %v4966 = vsel %vm4965, %v4958, %v4962
        %v4967 = vand.u32 2147483647, %v4957
        %vm4968 = vcmp.eq.f32.partialorder %v4967, 8.507059e+37
        %v4969 = vand.u32 %v4957, 2147483648
        %v4970 = vor.u32 1.1754944e-38, %v4969
        %v4971 = vsel %vm4968, %v4970, %v4966
        %v4972 = vmul.f32 %v4947, %v4971
        %v4973 = vmin.f32 %v4972, 1.0
        %v4974 = vmax.f32 %v4973, -1.0
        %v4975 = vmul.f32 %v4608, %v4608
        %v4976 = vmin.f32 16.0, %v4975
        %v4977 = vmul.f32 %v4976, 2.1237322e-06
        %v4978 = vadd.f32 %v4977, 0.00028619796
        %v4979 = vmul.f32 %v4976, %v4978
        %v4980 = vadd.f32 %v4979, 0.0036580483
        %v4981 = vmul.f32 %v4976, %v4980
        %v4982 = vadd.f32 %v4981, 0.05243302
        %v4983 = vmul.f32 %v4976, %v4982
        %v4984 = vadd.f32 %v4983, 0.18741608
        %v4985 = vmul.f32 %v4976, %v4984
        %v4986 = vadd.f32 %v4985, 1.1283791
        %v4987 = vmul.f32 %v4608, %v4986
        %v4988 = vmul.f32 %v4976, 3.8918573e-05
        %v4989 = vadd.f32 %v4988, 0.001143296
        %v4990 = vmul.f32 %v4976, %v4989
        %v4991 = vadd.f32 %v4990, 0.014752088
        %v4992 = vmul.f32 %v4976, %v4991
        %v4993 = vadd.f32 %v4992, 0.112945676
        %v4994 = vmul.f32 %v4976, %v4993
        %v4995 = vadd.f32 %v4994, 0.4994258
        %v4996 = vmul.f32 %v4976, %v4995
        %v4997 = vadd.f32 %v4996, 1.0
        %v4998 = vrcp.pop %v4997
        %v4999 = vmul.f32 %v4997, %v4998
        %v5000 = vsub.f32 1.0, %v4999
        %v5001 = vmul.f32 %v4998, %v5000
        %v5002 = vadd.f32 %v4998, %v5001
        %vm5003 = vweird.f32 %v4997
        %vm5004 = vweird.f32 %v4998
        %vm5005 = vmor %vm5003, %vm5004
        %v5006 = vsel %vm5005, %v4998, %v5002
        %v5007 = vand.u32 2147483647, %v4997
        %vm5008 = vcmp.eq.f32.partialorder %v5007, 8.507059e+37
        %v5009 = vand.u32 %v4997, 2147483648
        %v5010 = vor.u32 1.1754944e-38, %v5009
        %v5011 = vsel %vm5008, %v5010, %v5006
        %v5012 = vmul.f32 %v4987, %v5011
        %v5013 = vmin.f32 %v5012, 1.0
        %v5014 = vmax.f32 %v5013, -1.0
        %v5015 = vmul.f32 %v4609, %v4609
        %v5016 = vmin.f32 16.0, %v5015
        %v5017 = vmul.f32 %v5016, 2.1237322e-06
        %v5018 = vadd.f32 %v5017, 0.00028619796
        %v5019 = vmul.f32 %v5016, %v5018
        %v5020 = vadd.f32 %v5019, 0.0036580483
        %v5021 = vmul.f32 %v5016, %v5020
        %v5022 = vadd.f32 %v5021, 0.05243302
        %v5023 = vmul.f32 %v5016, %v5022
        %v5024 = vadd.f32 %v5023, 0.18741608
        %v5025 = vmul.f32 %v5016, %v5024
        %v5026 = vadd.f32 %v5025, 1.1283791
        %v5027 = vmul.f32 %v4609, %v5026
        %v5028 = vmul.f32 %v5016, 3.8918573e-05
        %v5029 = vadd.f32 %v5028, 0.001143296
        %v5030 = vmul.f32 %v5016, %v5029
        %v5031 = vadd.f32 %v5030, 0.014752088
        %v5032 = vmul.f32 %v5016, %v5031
        %v5033 = vadd.f32 %v5032, 0.112945676
        %v5034 = vmul.f32 %v5016, %v5033
        %v5035 = vadd.f32 %v5034, 0.4994258
        %v5036 = vmul.f32 %v5016, %v5035
        %v5037 = vadd.f32 %v5036, 1.0
        %v5038 = vrcp.pop %v5037
        %v5039 = vmul.f32 %v5037, %v5038
        %v5040 = vsub.f32 1.0, %v5039
        %v5041 = vmul.f32 %v5038, %v5040
        %v5042 = vadd.f32 %v5038, %v5041
        %vm5043 = vweird.f32 %v5037
        %vm5044 = vweird.f32 %v5038
        %vm5045 = vmor %vm5043, %vm5044
        %v5046 = vsel %vm5045, %v5038, %v5042
        %v5047 = vand.u32 2147483647, %v5037
        %vm5048 = vcmp.eq.f32.partialorder %v5047, 8.507059e+37
        %v5049 = vand.u32 %v5037, 2147483648
        %v5050 = vor.u32 1.1754944e-38, %v5049
        %v5051 = vsel %vm5048, %v5050, %v5046
        %v5052 = vmul.f32 %v5027, %v5051
        %v5053 = vmin.f32 %v5052, 1.0
        %v5054 = vmax.f32 %v5053, -1.0
        %v5055 = vmul.f32 %v4610, %v4610
        %v5056 = vmin.f32 16.0, %v5055
        %v5057 = vmul.f32 %v5056, 2.1237322e-06
        %v5058 = vadd.f32 %v5057, 0.00028619796
        %v5059 = vmul.f32 %v5056, %v5058
        %v5060 = vadd.f32 %v5059, 0.0036580483
        %v5061 = vmul.f32 %v5056, %v5060
        %v5062 = vadd.f32 %v5061, 0.05243302
        %v5063 = vmul.f32 %v5056, %v5062
        %v5064 = vadd.f32 %v5063, 0.18741608
        %v5065 = vmul.f32 %v5056, %v5064
        %v5066 = vadd.f32 %v5065, 1.1283791
        %v5067 = vmul.f32 %v4610, %v5066
        %v5068 = vmul.f32 %v5056, 3.8918573e-05
        %v5069 = vadd.f32 %v5068, 0.001143296
        %v5070 = vmul.f32 %v5056, %v5069
        %v5071 = vadd.f32 %v5070, 0.014752088
        %v5072 = vmul.f32 %v5056, %v5071
        %v5073 = vadd.f32 %v5072, 0.112945676
        %v5074 = vmul.f32 %v5056, %v5073
        %v5075 = vadd.f32 %v5074, 0.4994258
        %v5076 = vmul.f32 %v5056, %v5075
        %v5077 = vadd.f32 %v5076, 1.0
        %v5078 = vrcp.pop %v5077
        %v5079 = vmul.f32 %v5077, %v5078
        %v5080 = vsub.f32 1.0, %v5079
        %v5081 = vmul.f32 %v5078, %v5080
        %v5082 = vadd.f32 %v5078, %v5081
        %vm5083 = vweird.f32 %v5077
        %vm5084 = vweird.f32 %v5078
        %vm5085 = vmor %vm5083, %vm5084
        %v5086 = vsel %vm5085, %v5078, %v5082
        %v5087 = vand.u32 2147483647, %v5077
        %vm5088 = vcmp.eq.f32.partialorder %v5087, 8.507059e+37
        %v5089 = vand.u32 %v5077, 2147483648
        %v5090 = vor.u32 1.1754944e-38, %v5089
        %v5091 = vsel %vm5088, %v5090, %v5086
        %v5092 = vmul.f32 %v5067, %v5091
        %v5093 = vmin.f32 %v5092, 1.0
        %v5094 = vmax.f32 %v5093, -1.0
        %v5095 = vmul.f32 %v4611, %v4611
        %v5096 = vmin.f32 16.0, %v5095
        %v5097 = vmul.f32 %v5096, 2.1237322e-06
        %v5098 = vadd.f32 %v5097, 0.00028619796
        %v5099 = vmul.f32 %v5096, %v5098
        %v5100 = vadd.f32 %v5099, 0.0036580483
        %v5101 = vmul.f32 %v5096, %v5100
        %v5102 = vadd.f32 %v5101, 0.05243302
        %v5103 = vmul.f32 %v5096, %v5102
        %v5104 = vadd.f32 %v5103, 0.18741608
        %v5105 = vmul.f32 %v5096, %v5104
        %v5106 = vadd.f32 %v5105, 1.1283791
        %v5107 = vmul.f32 %v4611, %v5106
        %v5108 = vmul.f32 %v5096, 3.8918573e-05
        %v5109 = vadd.f32 %v5108, 0.001143296
        %v5110 = vmul.f32 %v5096, %v5109
        %v5111 = vadd.f32 %v5110, 0.014752088
        %v5112 = vmul.f32 %v5096, %v5111
        %v5113 = vadd.f32 %v5112, 0.112945676
        %v5114 = vmul.f32 %v5096, %v5113
        %v5115 = vadd.f32 %v5114, 0.4994258
        %v5116 = vmul.f32 %v5096, %v5115
        %v5117 = vadd.f32 %v5116, 1.0
        %v5118 = vrcp.pop %v5117
        %v5119 = vmul.f32 %v5117, %v5118
        %v5120 = vsub.f32 1.0, %v5119
        %v5121 = vmul.f32 %v5118, %v5120
        %v5122 = vadd.f32 %v5118, %v5121
        %vm5123 = vweird.f32 %v5117
        %vm5124 = vweird.f32 %v5118
        %vm5125 = vmor %vm5123, %vm5124
        %v5126 = vsel %vm5125, %v5118, %v5122
        %v5127 = vand.u32 2147483647, %v5117
        %vm5128 = vcmp.eq.f32.partialorder %v5127, 8.507059e+37
        %v5129 = vand.u32 %v5117, 2147483648
        %v5130 = vor.u32 1.1754944e-38, %v5129
        %v5131 = vsel %vm5128, %v5130, %v5126
        %v5132 = vmul.f32 %v5107, %v5131
        %v5133 = vmin.f32 %v5132, 1.0
        %v5134 = vmax.f32 %v5133, -1.0
        %v5135 = vmul.f32 %v4612, %v4612
        %v5136 = vmin.f32 16.0, %v5135
        %v5137 = vmul.f32 %v5136, 2.1237322e-06
        %v5138 = vadd.f32 %v5137, 0.00028619796
        %v5139 = vmul.f32 %v5136, %v5138
        %v5140 = vadd.f32 %v5139, 0.0036580483
        %v5141 = vmul.f32 %v5136, %v5140
        %v5142 = vadd.f32 %v5141, 0.05243302
        %v5143 = vmul.f32 %v5136, %v5142
        %v5144 = vadd.f32 %v5143, 0.18741608
        %v5145 = vmul.f32 %v5136, %v5144
        %v5146 = vadd.f32 %v5145, 1.1283791
        %v5147 = vmul.f32 %v4612, %v5146
        %v5148 = vmul.f32 %v5136, 3.8918573e-05
        %v5149 = vadd.f32 %v5148, 0.001143296
        %v5150 = vmul.f32 %v5136, %v5149
        %v5151 = vadd.f32 %v5150, 0.014752088
        %v5152 = vmul.f32 %v5136, %v5151
        %v5153 = vadd.f32 %v5152, 0.112945676
        %v5154 = vmul.f32 %v5136, %v5153
        %v5155 = vadd.f32 %v5154, 0.4994258
        %v5156 = vmul.f32 %v5136, %v5155
        %v5157 = vadd.f32 %v5156, 1.0
        %v5158 = vrcp.pop %v5157
        %v5159 = vmul.f32 %v5157, %v5158
        %v5160 = vsub.f32 1.0, %v5159
        %v5161 = vmul.f32 %v5158, %v5160
        %v5162 = vadd.f32 %v5158, %v5161
        %vm5163 = vweird.f32 %v5157
        %vm5164 = vweird.f32 %v5158
        %vm5165 = vmor %vm5163, %vm5164
        %v5166 = vsel %vm5165, %v5158, %v5162
        %v5167 = vand.u32 2147483647, %v5157
        %vm5168 = vcmp.eq.f32.partialorder %v5167, 8.507059e+37
        %v5169 = vand.u32 %v5157, 2147483648
        %v5170 = vor.u32 1.1754944e-38, %v5169
        %v5171 = vsel %vm5168, %v5170, %v5166
        %v5172 = vmul.f32 %v5147, %v5171
        %v5173 = vmin.f32 %v5172, 1.0
        %v5174 = vmax.f32 %v5173, -1.0
        %v5175 = vmul.f32 %v4613, %v4613
        %v5176 = vmin.f32 16.0, %v5175
        %v5177 = vmul.f32 %v5176, 2.1237322e-06
        %v5178 = vadd.f32 %v5177, 0.00028619796
        %v5179 = vmul.f32 %v5176, %v5178
        %v5180 = vadd.f32 %v5179, 0.0036580483
        %v5181 = vmul.f32 %v5176, %v5180
        %v5182 = vadd.f32 %v5181, 0.05243302
        %v5183 = vmul.f32 %v5176, %v5182
        %v5184 = vadd.f32 %v5183, 0.18741608
        %v5185 = vmul.f32 %v5176, %v5184
        %v5186 = vadd.f32 %v5185, 1.1283791
        %v5187 = vmul.f32 %v4613, %v5186
        %v5188 = vmul.f32 %v5176, 3.8918573e-05
        %v5189 = vadd.f32 %v5188, 0.001143296
        %v5190 = vmul.f32 %v5176, %v5189
        %v5191 = vadd.f32 %v5190, 0.014752088
        %v5192 = vmul.f32 %v5176, %v5191
        %v5193 = vadd.f32 %v5192, 0.112945676
        %v5194 = vmul.f32 %v5176, %v5193
        %v5195 = vadd.f32 %v5194, 0.4994258
        %v5196 = vmul.f32 %v5176, %v5195
        %v5197 = vadd.f32 %v5196, 1.0
        %v5198 = vrcp.pop %v5197
        %v5199 = vmul.f32 %v5197, %v5198
        %v5200 = vsub.f32 1.0, %v5199
        %v5201 = vmul.f32 %v5198, %v5200
        %v5202 = vadd.f32 %v5198, %v5201
        %vm5203 = vweird.f32 %v5197
        %vm5204 = vweird.f32 %v5198
        %vm5205 = vmor %vm5203, %vm5204
        %v5206 = vsel %vm5205, %v5198, %v5202
        %v5207 = vand.u32 2147483647, %v5197
        %vm5208 = vcmp.eq.f32.partialorder %v5207, 8.507059e+37
        %v5209 = vand.u32 %v5197, 2147483648
        %v5210 = vor.u32 1.1754944e-38, %v5209
        %v5211 = vsel %vm5208, %v5210, %v5206
        %v5212 = vmul.f32 %v5187, %v5211
        %v5213 = vmin.f32 %v5212, 1.0
        %v5214 = vmax.f32 %v5213, -1.0
        %v5215 = vmul.f32 %v4614, %v4614
        %v5216 = vmin.f32 16.0, %v5215
        %v5217 = vmul.f32 %v5216, 2.1237322e-06
        %v5218 = vadd.f32 %v5217, 0.00028619796
        %v5219 = vmul.f32 %v5216, %v5218
        %v5220 = vadd.f32 %v5219, 0.0036580483
        %v5221 = vmul.f32 %v5216, %v5220
        %v5222 = vadd.f32 %v5221, 0.05243302
        %v5223 = vmul.f32 %v5216, %v5222
        %v5224 = vadd.f32 %v5223, 0.18741608
        %v5225 = vmul.f32 %v5216, %v5224
        %v5226 = vadd.f32 %v5225, 1.1283791
        %v5227 = vmul.f32 %v4614, %v5226
        %v5228 = vmul.f32 %v5216, 3.8918573e-05
        %v5229 = vadd.f32 %v5228, 0.001143296
        %v5230 = vmul.f32 %v5216, %v5229
        %v5231 = vadd.f32 %v5230, 0.014752088
        %v5232 = vmul.f32 %v5216, %v5231
        %v5233 = vadd.f32 %v5232, 0.112945676
        %v5234 = vmul.f32 %v5216, %v5233
        %v5235 = vadd.f32 %v5234, 0.4994258
        %v5236 = vmul.f32 %v5216, %v5235
        %v5237 = vadd.f32 %v5236, 1.0
        %v5238 = vrcp.pop %v5237
        %v5239 = vmul.f32 %v5237, %v5238
        %v5240 = vsub.f32 1.0, %v5239
        %v5241 = vmul.f32 %v5238, %v5240
        %v5242 = vadd.f32 %v5238, %v5241
        %vm5243 = vweird.f32 %v5237
        %vm5244 = vweird.f32 %v5238
        %vm5245 = vmor %vm5243, %vm5244
        %v5246 = vsel %vm5245, %v5238, %v5242
        %v5247 = vand.u32 2147483647, %v5237
        %vm5248 = vcmp.eq.f32.partialorder %v5247, 8.507059e+37
        %v5249 = vand.u32 %v5237, 2147483648
        %v5250 = vor.u32 1.1754944e-38, %v5249
        %v5251 = vsel %vm5248, %v5250, %v5246
        %v5252 = vmul.f32 %v5227, %v5251
        %v5253 = vmin.f32 %v5252, 1.0
        %v5254 = vmax.f32 %v5253, -1.0
        %v5255 = vadd.f32 %v4654, 1.0
        %v5256 = vadd.f32 %v4694, 1.0
        %v5257 = vadd.f32 %v4734, 1.0
        %v5258 = vadd.f32 %v4774, 1.0
        %v5259 = vadd.f32 %v4814, 1.0
        %v5260 = vadd.f32 %v4854, 1.0
        %v5261 = vadd.f32 %v4894, 1.0
        %v5262 = vadd.f32 %v4934, 1.0
        %v5263 = vadd.f32 %v4974, 1.0
        %v5264 = vadd.f32 %v5014, 1.0
        %v5265 = vadd.f32 %v5054, 1.0
        %v5266 = vadd.f32 %v5094, 1.0
        %v5267 = vadd.f32 %v5134, 1.0
        %v5268 = vadd.f32 %v5174, 1.0
        %v5269 = vadd.f32 %v5214, 1.0
        %v5270 = vadd.f32 %v5254, 1.0
        %v5271 = vmul.f32 %v4583, %v5255
        %v5272 = vmul.f32 %v4584, %v5256
        %v5273 = vmul.f32 %v4585, %v5257
        %v5274 = vmul.f32 %v4586, %v5258
        %v5275 = vmul.f32 %v4587, %v5259
        %v5276 = vmul.f32 %v4588, %v5260
        %v5277 = vmul.f32 %v4589, %v5261
        %v5278 = vmul.f32 %v4590, %v5262
        %v5279 = vmul.f32 %v4591, %v5263
        %v5280 = vmul.f32 %v4592, %v5264
        %v5281 = vmul.f32 %v4593, %v5265
        %v5282 = vmul.f32 %v4594, %v5266
        %v5283 = vmul.f32 %v4595, %v5267
        %v5284 = vmul.f32 %v4596, %v5268
        %v5285 = vmul.f32 %v4597, %v5269
        %v5286 = vmul.f32 %v4598, %v5270
        %v5287 = vpack.c.bf16 %v5272, %v5271
        %v5288 = vpack.c.bf16 %v5274, %v5273
        %v5289 = vpack.c.bf16 %v5276, %v5275
        %v5290 = vpack.c.bf16 %v5278, %v5277
        %v5291 = vpack.c.bf16 %v5280, %v5279
        %v5292 = vpack.c.bf16 %v5282, %v5281
        %v5293 = vpack.c.bf16 %v5284, %v5283
        %v5294 = vpack.c.bf16 %v5286, %v5285
        %s5295 = scalar_lea.vmem [#allocation8], 192
        %v5296 = vld [vmem:[%s5295] sm:$0xf]
        %v5297 = vld [vmem:[%s5295 + $0x4] sm:$0xf]
        %v5298 = vld [vmem:[%s5295 + $0x8] sm:$0xf]
        %v5299 = vld [vmem:[%s5295 + $0xc] sm:$0xf]
        %v5300 = vld [vmem:[%s5295 + $0x10] sm:$0xf]
        %v5301 = vld [vmem:[%s5295 + $0x14] sm:$0xf]
        %v5302 = vld [vmem:[%s5295 + $0x18] sm:$0xf]
        %v5303 = vld [vmem:[%s5295 + $0x1c] sm:$0xf]
        %v5304 = vld [vmem:[%s5295 + $0x20] sm:$0xf]
        %v5305 = vld [vmem:[%s5295 + $0x24] sm:$0xf]
        %v5306 = vld [vmem:[%s5295 + $0x28] sm:$0xf]
        %v5307 = vld [vmem:[%s5295 + $0x2c] sm:$0xf]
        %v5308 = vld [vmem:[%s5295 + $0x30] sm:$0xf]
        %v5309 = vld [vmem:[%s5295 + $0x34] sm:$0xf]
        %v5310 = vld [vmem:[%s5295 + $0x38] sm:$0xf]
        %v5311 = vld [vmem:[%s5295 + $0x3c] sm:$0xf]
        %v5328 = vunpack.c.l.b16 %v5296
        %v5329 = vunpack.c.l.b16 %v5297
        %v5330 = vunpack.c.l.b16 %v5298
        %v5331 = vunpack.c.l.b16 %v5299
        %v5332 = vunpack.c.l.b16 %v5300
        %v5333 = vunpack.c.l.b16 %v5301
        %v5334 = vunpack.c.l.b16 %v5302
        %v5335 = vunpack.c.l.b16 %v5303
        %v5336 = vunpack.c.l.b16 %v5304
        %v5337 = vunpack.c.l.b16 %v5305
        %v5338 = vunpack.c.l.b16 %v5306
        %v5339 = vunpack.c.l.b16 %v5307
        %v5340 = vunpack.c.l.b16 %v5308
        %v5341 = vunpack.c.l.b16 %v5309
        %v5342 = vunpack.c.l.b16 %v5310
        %v5343 = vunpack.c.l.b16 %v5311
        %v5344 = vpack.c.b16 %v5329, %v5328
        %v5345 = vpack.c.b16 %v5331, %v5330
        %v5346 = vpack.c.b16 %v5333, %v5332
        %v5347 = vpack.c.b16 %v5335, %v5334
        %v5348 = vpack.c.b16 %v5337, %v5336
        %v5349 = vpack.c.b16 %v5339, %v5338
        %v5350 = vpack.c.b16 %v5341, %v5340
        %v5351 = vpack.c.b16 %v5343, %v5342
        %5360 = vmatpush.bf16.msra.mxu0 %v5351
        %5361 = vmatpush.bf16.msra.mxu0 %v5350
        %5362 = vmatpush.bf16.msra.mxu0 %v5349
        %5363 = vmatpush.bf16.msra.mxu0 %v5348
        %5364 = vmatpush.bf16.msra.mxu0 %v5347
        %5365 = vmatpush.bf16.msra.mxu0 %v5346
        %5366 = vmatpush.bf16.msra.mxu0 %v5345
        %5367 = vmatpush.bf16.msra.mxu0 %v5344
        %5368 = vmatmul.bf16.gmra.mxu0 %v5287
        %v5369 = vpop.f32.mrf.mxu0
        %v5370 = vadd.f32 0.0, %v5369
        %v5371 = vpop.f32.mrf.mxu0
        %v5372 = vadd.f32 0.0, %v5371
        %5373 = vmatmul.bf16.gmra.mxu0 %v5288
        %v5374 = vpop.f32.mrf.mxu0
        %v5375 = vadd.f32 0.0, %v5374
        %v5376 = vpop.f32.mrf.mxu0
        %v5377 = vadd.f32 0.0, %v5376
        %5378 = vmatmul.bf16.gmra.mxu0 %v5289
        %v5379 = vpop.f32.mrf.mxu0
        %v5380 = vadd.f32 0.0, %v5379
        %v5381 = vpop.f32.mrf.mxu0
        %v5382 = vadd.f32 0.0, %v5381
        %5383 = vmatmul.bf16.gmra.mxu0 %v5290
        %v5384 = vpop.f32.mrf.mxu0
        %v5385 = vadd.f32 0.0, %v5384
        %v5386 = vpop.f32.mrf.mxu0
        %v5387 = vadd.f32 0.0, %v5386
        %5388 = vmatmul.bf16.gmra.mxu0 %v5291
        %v5389 = vpop.f32.mrf.mxu0
        %v5390 = vadd.f32 0.0, %v5389
        %v5391 = vpop.f32.mrf.mxu0
        %v5392 = vadd.f32 0.0, %v5391
        %5393 = vmatmul.bf16.gmra.mxu0 %v5292
        %v5394 = vpop.f32.mrf.mxu0
        %v5395 = vadd.f32 0.0, %v5394
        %v5396 = vpop.f32.mrf.mxu0
        %v5397 = vadd.f32 0.0, %v5396
        %5398 = vmatmul.bf16.gmra.mxu0 %v5293
        %v5399 = vpop.f32.mrf.mxu0
        %v5400 = vadd.f32 0.0, %v5399
        %v5401 = vpop.f32.mrf.mxu0
        %v5402 = vadd.f32 0.0, %v5401
        %5403 = vmatmul.bf16.gmra.mxu0 %v5294
        %v5404 = vpop.f32.mrf.mxu0
        %v5405 = vadd.f32 0.0, %v5404
        %v5406 = vpop.f32.mrf.mxu0
        %v5407 = vadd.f32 0.0, %v5406
        %5408 = vdwg.mxu0
        %v5409 = vadd.f32 %v4262, %v5370
        %v5410 = vadd.f32 %v4263, %v5372
        %v5411 = vadd.f32 %v4264, %v5375
        %v5412 = vadd.f32 %v4265, %v5377
        %v5413 = vadd.f32 %v4266, %v5380
        %v5414 = vadd.f32 %v4267, %v5382
        %v5415 = vadd.f32 %v4268, %v5385
        %v5416 = vadd.f32 %v4269, %v5387
        %v5417 = vadd.f32 %v4270, %v5390
        %v5418 = vadd.f32 %v4271, %v5392
        %v5419 = vadd.f32 %v4272, %v5395
        %v5420 = vadd.f32 %v4273, %v5397
        %v5421 = vadd.f32 %v4274, %v5400
        %v5422 = vadd.f32 %v4275, %v5402
        %v5423 = vadd.f32 %v4276, %v5405
        %v5424 = vadd.f32 %v4277, %v5407
        %v5425 = vpack.c.bf16 %v5409, %v5409
        %v5426 = vpack.c.bf16 %v5410, %v5410
        %v5427 = vpack.c.bf16 %v5411, %v5411
        %v5428 = vpack.c.bf16 %v5412, %v5412
        %v5429 = vpack.c.bf16 %v5413, %v5413
        %v5430 = vpack.c.bf16 %v5414, %v5414
        %v5431 = vpack.c.bf16 %v5415, %v5415
        %v5432 = vpack.c.bf16 %v5416, %v5416
        %v5433 = vpack.c.bf16 %v5417, %v5417
        %v5434 = vpack.c.bf16 %v5418, %v5418
        %v5435 = vpack.c.bf16 %v5419, %v5419
        %v5436 = vpack.c.bf16 %v5420, %v5420
        %v5437 = vpack.c.bf16 %v5421, %v5421
        %v5438 = vpack.c.bf16 %v5422, %v5422
        %v5439 = vpack.c.bf16 %v5423, %v5423
        %v5440 = vpack.c.bf16 %v5424, %v5424
        %5441 = vst [vmem:[%s443] sm:$0xf] %v5425
        %5442 = vst [vmem:[%s443 + $0x4] sm:$0xf] %v5426
        %5443 = vst [vmem:[%s443 + $0x8] sm:$0xf] %v5427
        %5444 = vst [vmem:[%s443 + $0xc] sm:$0xf] %v5428
        %5445 = vst [vmem:[%s443 + $0x10] sm:$0xf] %v5429
        %5446 = vst [vmem:[%s443 + $0x14] sm:$0xf] %v5430
        %5447 = vst [vmem:[%s443 + $0x18] sm:$0xf] %v5431
        %5448 = vst [vmem:[%s443 + $0x1c] sm:$0xf] %v5432
        %5449 = vst [vmem:[%s443 + $0x20] sm:$0xf] %v5433
        %5450 = vst [vmem:[%s443 + $0x24] sm:$0xf] %v5434
        %5451 = vst [vmem:[%s443 + $0x28] sm:$0xf] %v5435
        %5452 = vst [vmem:[%s443 + $0x2c] sm:$0xf] %v5436
        %5453 = vst [vmem:[%s443 + $0x30] sm:$0xf] %v5437
        %5454 = vst [vmem:[%s443 + $0x34] sm:$0xf] %v5438
        %5455 = vst [vmem:[%s443 + $0x38] sm:$0xf] %v5439
        %5456 = vst [vmem:[%s443 + $0x3c] sm:$0xf] %v5440
        %v5457 = vadd.f32 %v5409, %v5410
        %v5458 = vadd.f32 %v5457, %v5411
        %v5459 = vadd.f32 %v5458, %v5412
        %v5460 = vadd.f32 %v5459, %v5413
        %v5461 = vadd.f32 %v5460, %v5414
        %v5462 = vadd.f32 %v5461, %v5415
        %v5463 = vadd.f32 %v5462, %v5416
        %v5464 = vadd.f32 %v5463, %v5417
        %v5465 = vadd.f32 %v5464, %v5418
        %v5466 = vadd.f32 %v5465, %v5419
        %v5467 = vadd.f32 %v5466, %v5420
        %v5468 = vadd.f32 %v5467, %v5421
        %v5469 = vadd.f32 %v5468, %v5422
        %v5470 = vadd.f32 %v5469, %v5423
        %v5471 = vadd.f32 %v5470, %v5424
        %v5472 = vrot.slane %v5471, 4
        %v5473 = vadd.f32 %v5471, %v5472
        %v5474 = vrot.slane %v5473, 2
        %v5475 = vadd.f32 %v5473, %v5474
        %v5476 = vrot.slane %v5475, 1
        %v5477 = vadd.f32 %v5475, %v5476
        %v5478 = vmul.f32 %v5409, %v5409
        %v5479 = vmul.f32 %v5410, %v5410
        %v5480 = vmul.f32 %v5411, %v5411
        %v5481 = vmul.f32 %v5412, %v5412
        %v5482 = vmul.f32 %v5413, %v5413
        %v5483 = vmul.f32 %v5414, %v5414
        %v5484 = vmul.f32 %v5415, %v5415
        %v5485 = vmul.f32 %v5416, %v5416
        %v5486 = vmul.f32 %v5417, %v5417
        %v5487 = vmul.f32 %v5418, %v5418
        %v5488 = vmul.f32 %v5419, %v5419
        %v5489 = vmul.f32 %v5420, %v5420
        %v5490 = vmul.f32 %v5421, %v5421
        %v5491 = vmul.f32 %v5422, %v5422
        %v5492 = vmul.f32 %v5423, %v5423
        %v5493 = vmul.f32 %v5424, %v5424
        %v5494 = vadd.f32 %v5478, %v5479
        %v5495 = vadd.f32 %v5494, %v5480
        %v5496 = vadd.f32 %v5495, %v5481
        %v5497 = vadd.f32 %v5496, %v5482
        %v5498 = vadd.f32 %v5497, %v5483
        %v5499 = vadd.f32 %v5498, %v5484
        %v5500 = vadd.f32 %v5499, %v5485
        %v5501 = vadd.f32 %v5500, %v5486
        %v5502 = vadd.f32 %v5501, %v5487
        %v5503 = vadd.f32 %v5502, %v5488
        %v5504 = vadd.f32 %v5503, %v5489
        %v5505 = vadd.f32 %v5504, %v5490
        %v5506 = vadd.f32 %v5505, %v5491
        %v5507 = vadd.f32 %v5506, %v5492
        %v5508 = vadd.f32 %v5507, %v5493
        %v5509 = vrot.slane %v5508, 4
        %v5510 = vadd.f32 %v5508, %v5509
        %v5511 = vrot.slane %v5510, 2
        %v5512 = vadd.f32 %v5510, %v5511
        %v5513 = vrot.slane %v5512, 1
        %v5514 = vadd.f32 %v5512, %v5513
        %vm5515 = vcmask 1040384
        %v5516 = vsel %vm5515, %v5477, %v5514
        %5517 = vst [vmem:[%s450] sm:$0x3] %v5516
        %s5518 = sand.u32 %s239, 1
        %s5519 = scalar_lea.sflag [#allocation5], %s5518
        %s5520 = sand.u32 %s239, 1
        %s5521 = smul.addr %s5520, 64
        %s5522 = scalar_lea.vmem [#allocation9], %s5521
        %s5523 = sand.u32 %s269, 1
        %s5524 = scalar_lea.sflag [#allocation11], %s5523
        %s5525 = sand.u32 %s269, 1
        %s5526 = smul.addr %s5525, 2
        %s5527 = scalar_lea.vmem [#allocation10], %s5526
        // Predicated region
        $region65: #{tpu_custom_call.1} parent=51 // pred_check
          %p5528 = pneg %p249
        $region66: #{tpu_custom_call.1} parent=51 // pred_check_branch
          %5530 = sbr.rel (%p5528) target = $region68
        $region67: #{tpu_custom_call.1} parent=51 // pred_region
          %s5531 = smul.u32 8, %s38
          %5533 = vsyncadd %s5519, 0
          %s5534 = smul.addr %s5531, 2
          %s5535 = smul.addr %s37, 32
          %s5536 = sadd.s32 %s5534, %s5535
          %s5537 = smul.addr %s5536, 4
          %s5538 = scalar_lea.hbm %s8, %s5537
          %s5539 = sshll.u32 %s5522, 4
          %s5540 = int_to_ptr.vmem [resolvable:$true] %s5539
          %s5541 = sshll.u32 %s5538, 4
          %s5542 = int_to_ptr.hbm [resolvable:$true] %s5541
          %5547 = dma.vmem_to_hbm [thread:$0]  %s5540, 1024, %s5542, %s5519, 64, 64, 4
        $region68: #{tpu_custom_call.1} parent=51 // pred_fallthru
          _
        // Predicated region
        $region69: #{tpu_custom_call.1} parent=51 // pred_check
          %p5548 = pneg %p279
        $region70: #{tpu_custom_call.1} parent=51 // pred_check_branch
          %5550 = sbr.rel (%p5548) target = $region72
        $region71: #{tpu_custom_call.1} parent=51 // pred_region
          %s5551 = smul.u32 %s37, 2
          %s5552 = sadd.s32 %s5551, %s38
          %5554 = vsyncadd %s5524, 0
          %s5555 = smul.addr %s5552, 2
          %s5556 = scalar_lea.hbm %s9, %s5555
          %s5558 = sshll.u32 %s5527, 4
          %s5559 = int_to_ptr.vmem [resolvable:$true] %s5558
          %s5560 = sshll.u32 %s5556, 4
          %s5561 = int_to_ptr.hbm [resolvable:$true] %s5560
          %5563 = dma.vmem_to_hbm [thread:$0]  %s5559, 32, %s5561, %s5524
        $region72: #{tpu_custom_call.1} parent=51 // pred_fallthru
          _
      $region52: #{tpu_custom_call.1} parent=5 // pred_fallthru
        _
      %p5564 = scmp.le.s32.totalorder 2, %s28
      // Predicated region
      $region73: #{tpu_custom_call.1} parent=5 // pred_check
        %p5565 = pneg %p5564
      $region74: #{tpu_custom_call.1} parent=5 // pred_check_branch
        %5567 = sbr.rel (%p5565) target = $region76
      $region75: #{tpu_custom_call.1} parent=5 // pred_region
        %s5568 = ssub.s32 %s28, 2
        // Predicated region
        $region77: #{tpu_custom_call.1} parent=75 // pred_check
          %p5569 = pneg %p255
        $region78: #{tpu_custom_call.1} parent=75 // pred_check_branch
          %5571 = sbr.rel (%p5569) target = $region80
        $region79: #{tpu_custom_call.1} parent=75 // pred_region
          %s5572 = sand.u32 %s240, 1
          %s5573 = scalar_lea.sflag [#allocation5], %s5572
          %s5574 = sand.u32 %s240, 1
          %s5575 = smul.addr %s5574, 64
          %s5576 = scalar_lea.vmem [#allocation9], %s5575
          %5578 = dma.done %s5573, 1024
        $region80: #{tpu_custom_call.1} parent=75 // pred_fallthru
          _
        // Predicated region
        $region81: #{tpu_custom_call.1} parent=75 // pred_check
          %p5579 = pneg %p285
        $region82: #{tpu_custom_call.1} parent=75 // pred_check_branch
          %5581 = sbr.rel (%p5579) target = $region84
        $region83: #{tpu_custom_call.1} parent=75 // pred_region
          %s5582 = sand.u32 %s270, 1
          %s5583 = scalar_lea.sflag [#allocation11], %s5582
          %s5584 = sand.u32 %s270, 1
          %s5585 = smul.addr %s5584, 2
          %s5586 = scalar_lea.vmem [#allocation10], %s5585
          %5588 = dma.done %s5583, 32
        $region84: #{tpu_custom_call.1} parent=75 // pred_fallthru
          _
      $region76: #{tpu_custom_call.1} parent=5 // pred_fallthru
        _
    $region6: #{tpu_custom_call.1} parent=1 // loop_footer
      %s32 = sadd.s32 1, %s28
    $region7: #{tpu_custom_call.1} parent=1 // loop_footer_branch
      %27 = sbr.rel target = $region3
    $region8: #{tpu_custom_call.1} parent=1 // loop_exit
      _
    %5589 = vsyncpa [#allocation4], 1
    %s5590 = scalar_lea.sflag [#allocation4], 1
    %5591 = vsyncpa %s5590, 1
    %5592 = vsyncpa [#allocation7], 1
    %s5593 = scalar_lea.sflag [#allocation7], 1
    %5594 = vsyncpa %s5593, 1
    %5595 = vsyncpa [#allocation5], 1
    %s5596 = scalar_lea.sflag [#allocation5], 1
    %5597 = vsyncpa %s5596, 1
    %5598 = vsyncpa [#allocation11], 1
    %s5599 = scalar_lea.sflag [#allocation11], 1
    %5600 = vsyncpa %s5599, 1

</llo_original>
